<compile_context>
chip_gen: v6e
topology: v6e:2x2x1
jax: 0.10.0
libtpu: 0.0.40
codegen_flags: <defaults>
</compile_context>

<pallas_src>
import jax
import jax.numpy as jnp
from jax import lax
from jax.experimental import pallas as pl
from jax.experimental.pallas import tpu as pltpu

LANES = 128            # edges per sublane-row of the output layout
MAX_ROWS_PER_STEP = 8  # 8 x 128 = 1024 edges per grid step (one (8,128) f32 tile)


def _mlp_row(src, dst, w1s, w1d, b1, w2_row, b2):
    """Per-128-edge-row MLP: relu -> Linear(2H->H) (split) -> relu -> Linear(H->1)."""
    src = jnp.maximum(src, 0.0)                                   # (128, H)
    dst = jnp.maximum(dst, 0.0)
    h1 = (
        jnp.dot(src, w1s, preferred_element_type=jnp.float32)
        + jnp.dot(dst, w1d, preferred_element_type=jnp.float32)
        + b1
    )
    h1 = jnp.maximum(h1, 0.0)                                     # (128, H)
    # Lane-dense logits: contract the (1, H) w2 row against h1 along H.
    logits = lax.dot_general(
        w2_row, h1, (((1,), (1,)), ((), ())),
        preferred_element_type=jnp.float32,
    ) + b2                                                        # (1, 128)
    return logits


def _make_onehot_kernel(R, N, H):
    """Small-N path: hidden_states resident in VMEM, MXU one-hot gather."""

    def kernel(eidx_ref, h_ref, w1s_ref, w1d_ref, b1_ref, w2_ref, b2_ref, out_ref):
        h = h_ref[...]                    # (N, H)  VMEM-resident
        w1s = w1s_ref[...]
        w1d = w1d_ref[...]
        b1 = b1_ref[...]
        w2_row = w2_ref[...]
        b2 = b2_ref[0]
        idx_src = eidx_ref[0]             # (R, 128) lane-dense
        idx_dst = eidx_ref[1]             # (R, 128)
        # Hoisted sublane iota; only the compare/select runs per row.
        iota_n = lax.broadcasted_iota(jnp.int32, (N, LANES), 0)

        # Static unroll (R <= 8).  The per-step output block is written in
        # full, so the HBM writeback is one (R,128)-aligned DMA per step.
        for r in range(R):
            onehot_s = jnp.where(iota_n == idx_src[r:r + 1, :], 1.0, 0.0)   # (N, 128)
            onehot_d = jnp.where(iota_n == idx_dst[r:r + 1, :], 1.0, 0.0)
            # Gather on the MXU: contract node dim 0 (transposed LHS is native).
            src = lax.dot_general(onehot_s, h, (((0,), (0,)), ((), ())),
                                  preferred_element_type=jnp.float32)       # (128, H)
            dst = lax.dot_general(onehot_d, h, (((0,), (0,)), ((), ())),
                                  preferred_element_type=jnp.float32)
            logits = _mlp_row(src, dst, w1s, w1d, b1, w2_row, b2)           # (1, 128)
            out_ref[r:r + 1, :] = logits.astype(out_ref.dtype)

    return kernel


def _make_gathered_kernel(R, H):
    """Large-N path: wrapper-side jnp.take gather, (R, 128, H) tiles streamed in."""

    def kernel(src_ref, dst_ref, w1s_ref, w1d_ref, b1_ref, w2_ref, b2_ref, out_ref):
        w1s = w1s_ref[...]
        w1d = w1d_ref[...]
        b1 = b1_ref[...]
        w2_row = w2_ref[...]
        b2 = b2_ref[0]
        for r in range(R):                # static unroll, R <= 8
            logits = _mlp_row(src_ref[r], dst_ref[r], w1s, w1d, b1, w2_row, b2)
            out_ref[r:r + 1, :] = logits.astype(out_ref.dtype)

    return kernel


def turn_classifier_forward(hidden_states, edge_index, w1, b1, w2, b2):
    """Pallas implementation of TurnClassifier.forward (concat=True).

    hidden_states: [N, H] f32
    edge_index:    [2, E] int
    w1: [2H, H] (torch weight transposed), b1: [H], w2: [H, 1], b2: [1]
    returns logits [E, 1] f32
    """
    hidden_states = jnp.asarray(hidden_states, jnp.float32)
    N, H = hidden_states.shape
    E = int(edge_index.shape[1])

    # ---- Edge layout: rows of 128 lane-dense edges, <= 8 rows per grid step. ----
    total_rows = max(1, pl.cdiv(E, LANES))
    if total_rows <= MAX_ROWS_PER_STEP:
        rows_per_step = total_rows                      # single grid step, full-dim block
    else:
        rows_per_step = MAX_ROWS_PER_STEP
        total_rows = pl.cdiv(total_rows, MAX_ROWS_PER_STEP) * MAX_ROWS_PER_STEP
    num_steps = total_rows // rows_per_step
    e_pad = total_rows * LANES
    R = rows_per_step

    # Pad with a *valid* node index (0); padded logits are sliced off below.
    e0 = jnp.zeros((e_pad,), jnp.int32).at[:E].set(edge_index[0].astype(jnp.int32))
    e1 = jnp.zeros((e_pad,), jnp.int32).at[:E].set(edge_index[1].astype(jnp.int32))

    # ---- Parameters (split w1 so the concat disappears). ----
    w1 = jnp.asarray(w1, jnp.float32)
    w1_src = w1[:H, :]                                  # (H, H)
    w1_dst = w1[H:, :]                                  # (H, H)
    b1_2d = jnp.asarray(b1, jnp.float32).reshape(1, H)
    w2_row = jnp.asarray(w2, jnp.float32).reshape(1, H)
    b2_1d = jnp.asarray(b2, jnp.float32).reshape(1)

    # One-hot MXU gather only while hidden_states is cheap to keep resident and
    # the gather FLOPs (~2*N*H per edge) don't dominate the MLP (~4*H^2 per edge).
    use_onehot = (N <= 2 * H) and (N * H * 4 <= 4 * (1 << 20))

    if use_onehot:
        eidx = jnp.stack([e0, e1], axis=0).reshape(2, total_rows, LANES)
        src_g = dst_g = None
    else:
        # Streamed-gather path: row gather in the wrapper (XLA gather), kernel
        # streams (R, 128, H) tiles; VMEM stays O(tile), independent of N.
        eidx = None
        src_g = jnp.take(hidden_states, e0, axis=0).reshape(total_rows, LANES, H)
        dst_g = jnp.take(hidden_states, e1, axis=0).reshape(total_rows, LANES, H)

    def _call(const_kwargs):
        def const_spec(shape):
            # All constant operands are 2-D; block index is always (0, 0).
            return pl.BlockSpec(shape, lambda s: (0, 0), **const_kwargs)

        weight_specs = [
            const_spec((H, H)),                        # w1_src
            const_spec((H, H)),                        # w1_dst
            const_spec((1, H)),                        # b1
            const_spec((1, H)),                        # w2 row
            pl.BlockSpec(memory_space=pltpu.SMEM),     # b2 scalar
        ]
        if use_onehot:
            kernel = _make_onehot_kernel(R, N, H)
            in_specs = [
                pl.BlockSpec((2, R, LANES), lambda s: (0, s, 0)),   # edge indices
                const_spec((N, H)),                                 # hidden_states
            ] + weight_specs
            args = (eidx, hidden_states, w1_src, w1_dst, b1_2d, w2_row, b2_1d)
            per_step_bytes = (2 * R * LANES) * 4 + N * H * 4
        else:
            kernel = _make_gathered_kernel(R, H)
            in_specs = [
                pl.BlockSpec((R, LANES, H), lambda s: (s, 0, 0)),   # gathered src
                pl.BlockSpec((R, LANES, H), lambda s: (s, 0, 0)),   # gathered dst
            ] + weight_specs
            args = (src_g, dst_g, w1_src, w1_dst, b1_2d, w2_row, b2_1d)
            per_step_bytes = 2 * R * LANES * H * 4

        const_bytes = (2 * H * H + 2 * H) * 4
        needed = 2 * (per_step_bytes + R * LANES * 4) + 2 * const_bytes + (8 << 20)
        try:
            vmem_cap = int(pltpu.get_tpu_info().vmem_capacity_bytes)
        except Exception:
            vmem_cap = 64 << 20            # conservative (v7x-sized) fallback
        vmem_limit = int(min(int(0.75 * vmem_cap), max(32 << 20, needed)))

        return pl.pallas_call(
            kernel,
            out_shape=jax.ShapeDtypeStruct((total_rows, LANES), jnp.float32),
            grid_spec=pltpu.PrefetchScalarGridSpec(
                num_scalar_prefetch=0,
                grid=(num_steps,),
                in_specs=in_specs,
                out_specs=pl.BlockSpec((R, LANES), lambda s: (s, 0)),
            ),
            compiler_params=pltpu.CompilerParams(
                dimension_semantics=("parallel",),     # each step owns its output block
                vmem_limit_bytes=vmem_limit,
            ),
        )(*args)

    try:
        # Single-buffer the constant-index operands (halves resident VMEM).
        out = _call({"pipeline_mode": pl.Buffered(1)})
    except Exception:
        # Fallback for JAX versions without BlockSpec.pipeline_mode support.
        out = _call({})

    return out.reshape(e_pad, 1)[:E]


def turn_classifier_reference(hidden_states, edge_index, w1, b1, w2, b2):
    """Plain-JAX reference mirroring the PyTorch forward (concat=True)."""
    src = hidden_states[edge_index[0]]
    dst = hidden_states[edge_index[1]]
    edge_emb = jnp.concatenate([src, dst], axis=-1)
    x = jnp.maximum(edge_emb, 0.0)
    h1 = jnp.maximum(x @ w1 + b1, 0.0)
    return h1 @ w2 + b2


if __name__ == "__main__":
    key = jax.random.PRNGKey(0)

    def make_case(k, num_nodes, hidden_dim, num_edges):
        ks = jax.random.split(k, 7)
        h = jax.random.normal(ks[0], (num_nodes, hidden_dim), dtype=jnp.float32)
        e = jnp.stack(
            [
                jax.random.randint(ks[1], (num_edges,), 0, num_nodes, dtype=jnp.int32),
                jax.random.randint(ks[2], (num_edges,), 0, num_nodes, dtype=jnp.int32),
            ],
            axis=0,
        )
        # Parameters stored as [in, out] (i.e. torch weight transposed).
        w1 = jax.random.normal(ks[3], (2 * hidden_dim, hidden_dim), dtype=jnp.float32) * 0.05
        b1 = jax.random.normal(ks[4], (hidden_dim,), dtype=jnp.float32) * 0.05
        w2 = jax.random.normal(ks[5], (hidden_dim, 1), dtype=jnp.float32) * 0.05
        b2 = jax.random.normal(ks[6], (1,), dtype=jnp.float32) * 0.05
        return h, e, w1, b1, w2, b2

    # (name, N, H, E): covers one-hot single-step, streamed-gather (N > 2H),
    # and one-hot multi-step (>1024 edges -> parallel 8-row super-blocks).
    cases = [
        ("onehot_single_step", 48, 64, 200),
        ("gathered_path", 160, 64, 300),
        ("onehot_multi_step", 48, 64, 1300),
    ]
    keys = jax.random.split(key, len(cases))
    for (name, num_nodes, hidden_dim, num_edges), k in zip(cases, keys):
        h, e, w1, b1, w2, b2 = make_case(k, num_nodes, hidden_dim, num_edges)
        logits = turn_classifier_forward(h, e, w1, b1, w2, b2)
        logits = jax.block_until_ready(logits)
        ref = turn_classifier_reference(h, e, w1, b1, w2, b2)
        assert logits.shape == (num_edges, 1), f"{name}: bad shape {logits.shape}"
        max_err = float(jnp.max(jnp.abs(logits - ref)))
        assert jnp.allclose(logits, ref, atol=3e-4, rtol=1e-3), (
            f"{name}: mismatch, max abs err {max_err}"
        )

    print("KERNEL_OK")
</pallas_src>

<mosaic_0001>
module attributes {stable_mosaic.version = 11 : i64} {
  func.func @kernel(%arg0: i32, %arg1: memref<2x2x128xi32, #tpu.memory_space<vmem>>, %arg2: memref<48x64xf32, #tpu.memory_space<vmem>>, %arg3: memref<64x64xf32, #tpu.memory_space<vmem>>, %arg4: memref<64x64xf32, #tpu.memory_space<vmem>>, %arg5: memref<1x64xf32, #tpu.memory_space<vmem>>, %arg6: memref<1x64xf32, #tpu.memory_space<vmem>>, %arg7: memref<1xf32, #tpu.memory_space<smem>>, %arg8: memref<2x128xf32, #tpu.memory_space<vmem>>) attributes {dimension_semantics = [#tpu.dimension_semantics<parallel>], iteration_bounds = array<i64: 1>, scalar_prefetch = 0 : i64, scratch_operands = 0 : i64, tpu.core_type = #tpu.core_type<tc>, window_params = [{transform_indices = @transform_0, window_bounds = array<i64: 2, 2, 128>}, {pipeline_mode = #tpu.pipeline_mode<synchronous>, transform_indices = @transform_1, window_bounds = array<i64: 48, 64>}, {pipeline_mode = #tpu.pipeline_mode<synchronous>, transform_indices = @transform_2, window_bounds = array<i64: 64, 64>}, {pipeline_mode = #tpu.pipeline_mode<synchronous>, transform_indices = @transform_3, window_bounds = array<i64: 64, 64>}, {pipeline_mode = #tpu.pipeline_mode<synchronous>, transform_indices = @transform_4, window_bounds = array<i64: 1, 64>}, {pipeline_mode = #tpu.pipeline_mode<synchronous>, transform_indices = @transform_5, window_bounds = array<i64: 1, 64>}, {transform_indices = @transform_6, window_bounds = array<i64: 1>}, {transform_indices = @transform_7, window_bounds = array<i64: 2, 128>}]} {
    %c0 = arith.constant 0 : index
    %c0_0 = arith.constant 0 : index
    %0 = vector.load %arg2[%c0, %c0_0] : memref<48x64xf32, #tpu.memory_space<vmem>>, vector<48x64xf32>
    %c0_1 = arith.constant 0 : index
    %c0_2 = arith.constant 0 : index
    %1 = vector.load %arg3[%c0_1, %c0_2] : memref<64x64xf32, #tpu.memory_space<vmem>>, vector<64x64xf32>
    %c0_3 = arith.constant 0 : index
    %c0_4 = arith.constant 0 : index
    %2 = vector.load %arg4[%c0_3, %c0_4] : memref<64x64xf32, #tpu.memory_space<vmem>>, vector<64x64xf32>
    %c0_5 = arith.constant 0 : index
    %c0_6 = arith.constant 0 : index
    %3 = vector.load %arg5[%c0_5, %c0_6] : memref<1x64xf32, #tpu.memory_space<vmem>>, vector<1x64xf32>
    %c0_7 = arith.constant 0 : index
    %c0_8 = arith.constant 0 : index
    %4 = vector.load %arg6[%c0_7, %c0_8] : memref<1x64xf32, #tpu.memory_space<vmem>>, vector<1x64xf32>
    %c0_9 = arith.constant 0 : index
    %5 = memref.load %arg7[%c0_9] : memref<1xf32, #tpu.memory_space<smem>>
    %c0_10 = arith.constant 0 : index
    %c0_11 = arith.constant 0 : index
    %c0_12 = arith.constant 0 : index
    %6 = vector.load %arg1[%c0_10, %c0_11, %c0_12] : memref<2x2x128xi32, #tpu.memory_space<vmem>>, vector<1x2x128xi32>
    %7 = vector.shape_cast %6 : vector<1x2x128xi32> to vector<2x128xi32>
    %c1 = arith.constant 1 : index
    %c0_13 = arith.constant 0 : index
    %c0_14 = arith.constant 0 : index
    %8 = vector.load %arg1[%c1, %c0_13, %c0_14] : memref<2x2x128xi32, #tpu.memory_space<vmem>>, vector<1x2x128xi32>
    %9 = vector.shape_cast %8 : vector<1x2x128xi32> to vector<2x128xi32>
    %10 = tpu.iota {dimensions = array<i32: 0>} : vector<48x128xi32>
    %11 = vector.extract_strided_slice %7 {offsets = [0, 0], sizes = [1, 128], strides = [1, 1]} : vector<2x128xi32> to vector<1x128xi32>
    %12 = vector.broadcast %11 : vector<1x128xi32> to vector<48x128xi32>
    %13 = arith.cmpi eq, %10, %12 : vector<48x128xi32>
    %cst = arith.constant 1.000000e+00 : f32
    %cst_15 = arith.constant 0.000000e+00 : f32
    %14 = vector.broadcast %cst : f32 to vector<48x128xf32>
    %15 = vector.broadcast %cst_15 : f32 to vector<48x128xf32>
    %16 = arith.select %13, %14, %15 : vector<48x128xi1>, vector<48x128xf32>
    %17 = vector.extract_strided_slice %9 {offsets = [0, 0], sizes = [1, 128], strides = [1, 1]} : vector<2x128xi32> to vector<1x128xi32>
    %18 = vector.broadcast %17 : vector<1x128xi32> to vector<48x128xi32>
    %19 = arith.cmpi eq, %10, %18 : vector<48x128xi32>
    %cst_16 = arith.constant 1.000000e+00 : f32
    %cst_17 = arith.constant 0.000000e+00 : f32
    %20 = vector.broadcast %cst_16 : f32 to vector<48x128xf32>
    %21 = vector.broadcast %cst_17 : f32 to vector<48x128xf32>
    %22 = arith.select %19, %20, %21 : vector<48x128xi1>, vector<48x128xf32>
    %cst_18 = arith.constant dense<0.000000e+00> : vector<128x64xf32>
    %23 = tpu.matmul %16, %0, %cst_18 {dimension_numbers = #tpu.dot_dimension_numbers<[0], [0], [1], [1], [0, 1, 1, 1], [], []>} : vector<48x128xf32>, vector<48x64xf32>, vector<128x64xf32> -> vector<128x64xf32>
    %cst_19 = arith.constant dense<0.000000e+00> : vector<128x64xf32>
    %24 = tpu.matmul %22, %0, %cst_19 {dimension_numbers = #tpu.dot_dimension_numbers<[0], [0], [1], [1], [0, 1, 1, 1], [], []>} : vector<48x128xf32>, vector<48x64xf32>, vector<128x64xf32> -> vector<128x64xf32>
    %cst_20 = arith.constant 0.000000e+00 : f32
    %25 = vector.broadcast %cst_20 : f32 to vector<128x64xf32>
    %26 = arith.maximumf %23, %25 : vector<128x64xf32>
    %cst_21 = arith.constant 0.000000e+00 : f32
    %27 = vector.broadcast %cst_21 : f32 to vector<128x64xf32>
    %28 = arith.maximumf %24, %27 : vector<128x64xf32>
    %cst_22 = arith.constant dense<0.000000e+00> : vector<128x64xf32>
    %29 = tpu.matmul %26, %1, %cst_22 {dimension_numbers = #tpu.dot_dimension_numbers<[1], [0], [0], [1], [0, 0, 1, 1], [], []>} : vector<128x64xf32>, vector<64x64xf32>, vector<128x64xf32> -> vector<128x64xf32>
    %cst_23 = arith.constant dense<0.000000e+00> : vector<128x64xf32>
    %30 = tpu.matmul %28, %2, %cst_23 {dimension_numbers = #tpu.dot_dimension_numbers<[1], [0], [0], [1], [0, 0, 1, 1], [], []>} : vector<128x64xf32>, vector<64x64xf32>, vector<128x64xf32> -> vector<128x64xf32>
    %31 = arith.addf %29, %30 : vector<128x64xf32>
    %32 = vector.broadcast %3 : vector<1x64xf32> to vector<128x64xf32>
    %33 = arith.addf %31, %32 : vector<128x64xf32>
    %cst_24 = arith.constant 0.000000e+00 : f32
    %34 = vector.broadcast %cst_24 : f32 to vector<128x64xf32>
    %35 = arith.maximumf %33, %34 : vector<128x64xf32>
    %cst_25 = arith.constant dense<0.000000e+00> : vector<1x128xf32>
    %36 = tpu.matmul %4, %35, %cst_25 {dimension_numbers = #tpu.dot_dimension_numbers<[1], [1], [0], [0], [0, 0, 1, 0], [], []>} : vector<1x64xf32>, vector<128x64xf32>, vector<1x128xf32> -> vector<1x128xf32>
    %37 = vector.broadcast %5 : f32 to vector<1x128xf32>
    %38 = arith.addf %36, %37 : vector<1x128xf32>
    %c0_26 = arith.constant 0 : index
    %c0_27 = arith.constant 0 : index
    %39 = vector.load %arg8[%c0_26, %c0_27] : memref<2x128xf32, #tpu.memory_space<vmem>>, vector<1x128xf32>
    tpu.vector_store %arg8[%c0_26, %c0_27], %38 {strides = array<i32>} : memref<2x128xf32, #tpu.memory_space<vmem>>, vector<1x128xf32>,
    %40 = vector.extract_strided_slice %7 {offsets = [1, 0], sizes = [1, 128], strides = [1, 1]} : vector<2x128xi32> to vector<1x128xi32>
    %41 = vector.broadcast %40 : vector<1x128xi32> to vector<48x128xi32>
    %42 = arith.cmpi eq, %10, %41 : vector<48x128xi32>
    %cst_28 = arith.constant 1.000000e+00 : f32
    %cst_29 = arith.constant 0.000000e+00 : f32
    %43 = vector.broadcast %cst_28 : f32 to vector<48x128xf32>
    %44 = vector.broadcast %cst_29 : f32 to vector<48x128xf32>
    %45 = arith.select %42, %43, %44 : vector<48x128xi1>, vector<48x128xf32>
    %46 = vector.extract_strided_slice %9 {offsets = [1, 0], sizes = [1, 128], strides = [1, 1]} : vector<2x128xi32> to vector<1x128xi32>
    %47 = vector.broadcast %46 : vector<1x128xi32> to vector<48x128xi32>
    %48 = arith.cmpi eq, %10, %47 : vector<48x128xi32>
    %cst_30 = arith.constant 1.000000e+00 : f32
    %cst_31 = arith.constant 0.000000e+00 : f32
    %49 = vector.broadcast %cst_30 : f32 to vector<48x128xf32>
    %50 = vector.broadcast %cst_31 : f32 to vector<48x128xf32>
    %51 = arith.select %48, %49, %50 : vector<48x128xi1>, vector<48x128xf32>
    %cst_32 = arith.constant dense<0.000000e+00> : vector<128x64xf32>
    %52 = tpu.matmul %45, %0, %cst_32 {dimension_numbers = #tpu.dot_dimension_numbers<[0], [0], [1], [1], [0, 1, 1, 1], [], []>} : vector<48x128xf32>, vector<48x64xf32>, vector<128x64xf32> -> vector<128x64xf32>
    %cst_33 = arith.constant dense<0.000000e+00> : vector<128x64xf32>
    %53 = tpu.matmul %51, %0, %cst_33 {dimension_numbers = #tpu.dot_dimension_numbers<[0], [0], [1], [1], [0, 1, 1, 1], [], []>} : vector<48x128xf32>, vector<48x64xf32>, vector<128x64xf32> -> vector<128x64xf32>
    %cst_34 = arith.constant 0.000000e+00 : f32
    %54 = vector.broadcast %cst_34 : f32 to vector<128x64xf32>
    %55 = arith.maximumf %52, %54 : vector<128x64xf32>
    %cst_35 = arith.constant 0.000000e+00 : f32
    %56 = vector.broadcast %cst_35 : f32 to vector<128x64xf32>
    %57 = arith.maximumf %53, %56 : vector<128x64xf32>
    %cst_36 = arith.constant dense<0.000000e+00> : vector<128x64xf32>
    %58 = tpu.matmul %55, %1, %cst_36 {dimension_numbers = #tpu.dot_dimension_numbers<[1], [0], [0], [1], [0, 0, 1, 1], [], []>} : vector<128x64xf32>, vector<64x64xf32>, vector<128x64xf32> -> vector<128x64xf32>
    %cst_37 = arith.constant dense<0.000000e+00> : vector<128x64xf32>
    %59 = tpu.matmul %57, %2, %cst_37 {dimension_numbers = #tpu.dot_dimension_numbers<[1], [0], [0], [1], [0, 0, 1, 1], [], []>} : vector<128x64xf32>, vector<64x64xf32>, vector<128x64xf32> -> vector<128x64xf32>
    %60 = arith.addf %58, %59 : vector<128x64xf32>
    %61 = vector.broadcast %3 : vector<1x64xf32> to vector<128x64xf32>
    %62 = arith.addf %60, %61 : vector<128x64xf32>
    %cst_38 = arith.constant 0.000000e+00 : f32
    %63 = vector.broadcast %cst_38 : f32 to vector<128x64xf32>
    %64 = arith.maximumf %62, %63 : vector<128x64xf32>
    %cst_39 = arith.constant dense<0.000000e+00> : vector<1x128xf32>
    %65 = tpu.matmul %4, %64, %cst_39 {dimension_numbers = #tpu.dot_dimension_numbers<[1], [1], [0], [0], [0, 0, 1, 0], [], []>} : vector<1x64xf32>, vector<128x64xf32>, vector<1x128xf32> -> vector<1x128xf32>
    %66 = vector.broadcast %5 : f32 to vector<1x128xf32>
    %67 = arith.addf %65, %66 : vector<1x128xf32>
    %c1_40 = arith.constant 1 : index
    %c0_41 = arith.constant 0 : index
    %68 = vector.load %arg8[%c1_40, %c0_41] : memref<2x128xf32, #tpu.memory_space<vmem>>, vector<1x128xf32>
    tpu.vector_store %arg8[%c1_40, %c0_41], %67 {strides = array<i32>} : memref<2x128xf32, #tpu.memory_space<vmem>>, vector<1x128xf32>,
    return
  }
  func.func @transform_0(%arg0: i32) -> (i32, i32, i32) {
    %c0_i32 = arith.constant 0 : i32
    %c0_i32_0 = arith.constant 0 : i32
    %c0_i32_1 = arith.constant 0 : i32
    return %c0_i32, %arg0, %c0_i32_0 : i32, i32, i32
  }
  func.func @transform_1(%arg0: i32) -> (i32, i32) {
    %c0_i32 = arith.constant 0 : i32
    %c0_i32_0 = arith.constant 0 : i32
    %c0_i32_1 = arith.constant 0 : i32
    return %c0_i32, %c0_i32_0 : i32, i32
  }
  func.func @transform_2(%arg0: i32) -> (i32, i32) {
    %c0_i32 = arith.constant 0 : i32
    %c0_i32_0 = arith.constant 0 : i32
    %c0_i32_1 = arith.constant 0 : i32
    return %c0_i32, %c0_i32_0 : i32, i32
  }
  func.func @transform_3(%arg0: i32) -> (i32, i32) {
    %c0_i32 = arith.constant 0 : i32
    %c0_i32_0 = arith.constant 0 : i32
    %c0_i32_1 = arith.constant 0 : i32
    return %c0_i32, %c0_i32_0 : i32, i32
  }
  func.func @transform_4(%arg0: i32) -> (i32, i32) {
    %c0_i32 = arith.constant 0 : i32
    %c0_i32_0 = arith.constant 0 : i32
    %c0_i32_1 = arith.constant 0 : i32
    return %c0_i32, %c0_i32_0 : i32, i32
  }
  func.func @transform_5(%arg0: i32) -> (i32, i32) {
    %c0_i32 = arith.constant 0 : i32
    %c0_i32_0 = arith.constant 0 : i32
    %c0_i32_1 = arith.constant 0 : i32
    return %c0_i32, %c0_i32_0 : i32, i32
  }
  func.func @transform_6(%arg0: i32) -> i32 {
    %c0_i32 = arith.constant 0 : i32
    %c0_i32_0 = arith.constant 0 : i32
    return %c0_i32 : i32
  }
  func.func @transform_7(%arg0: i32) -> (i32, i32) {
    %c0_i32 = arith.constant 0 : i32
    %c0_i32_0 = arith.constant 0 : i32
    return %arg0, %c0_i32 : i32, i32
  }
}

module attributes {stable_mosaic.version = 11 : i64} {
  func.func @kernel(%arg0: i32, %arg1: memref<2x2x128xi32, #tpu.memory_space<vmem>>, %arg2: memref<48x64xf32, #tpu.memory_space<vmem>>, %arg3: memref<64x64xf32, #tpu.memory_space<vmem>>, %arg4: memref<64x64xf32, #tpu.memory_space<vmem>>, %arg5: memref<1x64xf32, #tpu.memory_space<vmem>>, %arg6: memref<1x64xf32, #tpu.memory_space<vmem>>, %arg7: memref<1xf32, #tpu.memory_space<smem>>, %arg8: memref<2x128xf32, #tpu.memory_space<vmem>>) attributes {dimension_semantics = [#tpu.dimension_semantics<parallel>], iteration_bounds = array<i64: 1>, scalar_prefetch = 0 : i64, scratch_operands = 0 : i64, tpu.core_type = #tpu.core_type<tc>, window_params = [{transform_indices = @transform_0, window_bounds = array<i64: 2, 2, 128>}, {pipeline_mode = #tpu.pipeline_mode<synchronous>, transform_indices = @transform_1, window_bounds = array<i64: 48, 64>}, {pipeline_mode = #tpu.pipeline_mode<synchronous>, transform_indices = @transform_2, window_bounds = array<i64: 64, 64>}, {pipeline_mode = #tpu.pipeline_mode<synchronous>, transform_indices = @transform_3, window_bounds = array<i64: 64, 64>}, {pipeline_mode = #tpu.pipeline_mode<synchronous>, transform_indices = @transform_4, window_bounds = array<i64: 1, 64>}, {pipeline_mode = #tpu.pipeline_mode<synchronous>, transform_indices = @transform_5, window_bounds = array<i64: 1, 64>}, {transform_indices = @transform_6, window_bounds = array<i64: 1>}, {transform_indices = @transform_7, window_bounds = array<i64: 2, 128>}]} {
    %c0 = arith.constant 0 : index
    %c0_0 = arith.constant 0 : index
    %0 = vector.load %arg2[%c0, %c0_0] : memref<48x64xf32, #tpu.memory_space<vmem>>, vector<48x64xf32>
    %c0_1 = arith.constant 0 : index
    %c0_2 = arith.constant 0 : index
    %1 = vector.load %arg3[%c0_1, %c0_2] : memref<64x64xf32, #tpu.memory_space<vmem>>, vector<64x64xf32>
    %c0_3 = arith.constant 0 : index
    %c0_4 = arith.constant 0 : index
    %2 = vector.load %arg4[%c0_3, %c0_4] : memref<64x64xf32, #tpu.memory_space<vmem>>, vector<64x64xf32>
    %c0_5 = arith.constant 0 : index
    %c0_6 = arith.constant 0 : index
    %3 = vector.load %arg5[%c0_5, %c0_6] : memref<1x64xf32, #tpu.memory_space<vmem>>, vector<1x64xf32>
    %c0_7 = arith.constant 0 : index
    %c0_8 = arith.constant 0 : index
    %4 = vector.load %arg6[%c0_7, %c0_8] : memref<1x64xf32, #tpu.memory_space<vmem>>, vector<1x64xf32>
    %c0_9 = arith.constant 0 : index
    %5 = memref.load %arg7[%c0_9] : memref<1xf32, #tpu.memory_space<smem>>
    %c0_10 = arith.constant 0 : index
    %c0_11 = arith.constant 0 : index
    %c0_12 = arith.constant 0 : index
    %6 = vector.load %arg1[%c0_10, %c0_11, %c0_12] : memref<2x2x128xi32, #tpu.memory_space<vmem>>, vector<1x2x128xi32>
    %7 = vector.shape_cast %6 : vector<1x2x128xi32> to vector<2x128xi32>
    %c1 = arith.constant 1 : index
    %c0_13 = arith.constant 0 : index
    %c0_14 = arith.constant 0 : index
    %8 = vector.load %arg1[%c1, %c0_13, %c0_14] : memref<2x2x128xi32, #tpu.memory_space<vmem>>, vector<1x2x128xi32>
    %9 = vector.shape_cast %8 : vector<1x2x128xi32> to vector<2x128xi32>
    %10 = tpu.iota {dimensions = array<i32: 0>} : vector<48x128xi32>
    %11 = vector.extract_strided_slice %7 {offsets = [0, 0], sizes = [1, 128], strides = [1, 1]} : vector<2x128xi32> to vector<1x128xi32>
    %12 = vector.broadcast %11 : vector<1x128xi32> to vector<48x128xi32>
    %13 = arith.cmpi eq, %10, %12 : vector<48x128xi32>
    %cst = arith.constant 1.000000e+00 : f32
    %cst_15 = arith.constant 0.000000e+00 : f32
    %14 = vector.broadcast %cst : f32 to vector<48x128xf32>
    %15 = vector.broadcast %cst_15 : f32 to vector<48x128xf32>
    %16 = arith.select %13, %14, %15 : vector<48x128xi1>, vector<48x128xf32>
    %17 = vector.extract_strided_slice %9 {offsets = [0, 0], sizes = [1, 128], strides = [1, 1]} : vector<2x128xi32> to vector<1x128xi32>
    %18 = vector.broadcast %17 : vector<1x128xi32> to vector<48x128xi32>
    %19 = arith.cmpi eq, %10, %18 : vector<48x128xi32>
    %cst_16 = arith.constant 1.000000e+00 : f32
    %cst_17 = arith.constant 0.000000e+00 : f32
    %20 = vector.broadcast %cst_16 : f32 to vector<48x128xf32>
    %21 = vector.broadcast %cst_17 : f32 to vector<48x128xf32>
    %22 = arith.select %19, %20, %21 : vector<48x128xi1>, vector<48x128xf32>
    %cst_18 = arith.constant dense<0.000000e+00> : vector<128x64xf32>
    %23 = tpu.matmul %16, %0, %cst_18 {dimension_numbers = #tpu.dot_dimension_numbers<[0], [0], [1], [1], [0, 1, 1, 1], [], []>} : vector<48x128xf32>, vector<48x64xf32>, vector<128x64xf32> -> vector<128x64xf32>
    %cst_19 = arith.constant dense<0.000000e+00> : vector<128x64xf32>
    %24 = tpu.matmul %22, %0, %cst_19 {dimension_numbers = #tpu.dot_dimension_numbers<[0], [0], [1], [1], [0, 1, 1, 1], [], []>} : vector<48x128xf32>, vector<48x64xf32>, vector<128x64xf32> -> vector<128x64xf32>
    %cst_20 = arith.constant 0.000000e+00 : f32
    %25 = vector.broadcast %cst_20 : f32 to vector<128x64xf32>
    %26 = arith.maximumf %23, %25 : vector<128x64xf32>
    %cst_21 = arith.constant 0.000000e+00 : f32
    %27 = vector.broadcast %cst_21 : f32 to vector<128x64xf32>
    %28 = arith.maximumf %24, %27 : vector<128x64xf32>
    %cst_22 = arith.constant dense<0.000000e+00> : vector<128x64xf32>
    %29 = tpu.matmul %26, %1, %cst_22 {dimension_numbers = #tpu.dot_dimension_numbers<[1], [0], [0], [1], [0, 0, 1, 1], [], []>} : vector<128x64xf32>, vector<64x64xf32>, vector<128x64xf32> -> vector<128x64xf32>
    %cst_23 = arith.constant dense<0.000000e+00> : vector<128x64xf32>
    %30 = tpu.matmul %28, %2, %cst_23 {dimension_numbers = #tpu.dot_dimension_numbers<[1], [0], [0], [1], [0, 0, 1, 1], [], []>} : vector<128x64xf32>, vector<64x64xf32>, vector<128x64xf32> -> vector<128x64xf32>
    %31 = arith.addf %29, %30 : vector<128x64xf32>
    %32 = vector.broadcast %3 : vector<1x64xf32> to vector<128x64xf32>
    %33 = arith.addf %31, %32 : vector<128x64xf32>
    %cst_24 = arith.constant 0.000000e+00 : f32
    %34 = vector.broadcast %cst_24 : f32 to vector<128x64xf32>
    %35 = arith.maximumf %33, %34 : vector<128x64xf32>
    %cst_25 = arith.constant dense<0.000000e+00> : vector<1x128xf32>
    %36 = tpu.matmul %4, %35, %cst_25 {dimension_numbers = #tpu.dot_dimension_numbers<[1], [1], [0], [0], [0, 0, 1, 0], [], []>} : vector<1x64xf32>, vector<128x64xf32>, vector<1x128xf32> -> vector<1x128xf32>
    %37 = vector.broadcast %5 : f32 to vector<1x128xf32>
    %38 = arith.addf %36, %37 : vector<1x128xf32>
    %c0_26 = arith.constant 0 : index
    %c0_27 = arith.constant 0 : index
    %39 = vector.load %arg8[%c0_26, %c0_27] : memref<2x128xf32, #tpu.memory_space<vmem>>, vector<1x128xf32>
    tpu.vector_store %arg8[%c0_26, %c0_27], %38 {strides = array<i32>} : memref<2x128xf32, #tpu.memory_space<vmem>>, vector<1x128xf32>,
    %40 = vector.extract_strided_slice %7 {offsets = [1, 0], sizes = [1, 128], strides = [1, 1]} : vector<2x128xi32> to vector<1x128xi32>
    %41 = vector.broadcast %40 : vector<1x128xi32> to vector<48x128xi32>
    %42 = arith.cmpi eq, %10, %41 : vector<48x128xi32>
    %cst_28 = arith.constant 1.000000e+00 : f32
    %cst_29 = arith.constant 0.000000e+00 : f32
    %43 = vector.broadcast %cst_28 : f32 to vector<48x128xf32>
    %44 = vector.broadcast %cst_29 : f32 to vector<48x128xf32>
    %45 = arith.select %42, %43, %44 : vector<48x128xi1>, vector<48x128xf32>
    %46 = vector.extract_strided_slice %9 {offsets = [1, 0], sizes = [1, 128], strides = [1, 1]} : vector<2x128xi32> to vector<1x128xi32>
    %47 = vector.broadcast %46 : vector<1x128xi32> to vector<48x128xi32>
    %48 = arith.cmpi eq, %10, %47 : vector<48x128xi32>
    %cst_30 = arith.constant 1.000000e+00 : f32
    %cst_31 = arith.constant 0.000000e+00 : f32
    %49 = vector.broadcast %cst_30 : f32 to vector<48x128xf32>
    %50 = vector.broadcast %cst_31 : f32 to vector<48x128xf32>
    %51 = arith.select %48, %49, %50 : vector<48x128xi1>, vector<48x128xf32>
    %cst_32 = arith.constant dense<0.000000e+00> : vector<128x64xf32>
    %52 = tpu.matmul %45, %0, %cst_32 {dimension_numbers = #tpu.dot_dimension_numbers<[0], [0], [1], [1], [0, 1, 1, 1], [], []>} : vector<48x128xf32>, vector<48x64xf32>, vector<128x64xf32> -> vector<128x64xf32>
    %cst_33 = arith.constant dense<0.000000e+00> : vector<128x64xf32>
    %53 = tpu.matmul %51, %0, %cst_33 {dimension_numbers = #tpu.dot_dimension_numbers<[0], [0], [1], [1], [0, 1, 1, 1], [], []>} : vector<48x128xf32>, vector<48x64xf32>, vector<128x64xf32> -> vector<128x64xf32>
    %cst_34 = arith.constant 0.000000e+00 : f32
    %54 = vector.broadcast %cst_34 : f32 to vector<128x64xf32>
    %55 = arith.maximumf %52, %54 : vector<128x64xf32>
    %cst_35 = arith.constant 0.000000e+00 : f32
    %56 = vector.broadcast %cst_35 : f32 to vector<128x64xf32>
    %57 = arith.maximumf %53, %56 : vector<128x64xf32>
    %cst_36 = arith.constant dense<0.000000e+00> : vector<128x64xf32>
    %58 = tpu.matmul %55, %1, %cst_36 {dimension_numbers = #tpu.dot_dimension_numbers<[1], [0], [0], [1], [0, 0, 1, 1], [], []>} : vector<128x64xf32>, vector<64x64xf32>, vector<128x64xf32> -> vector<128x64xf32>
    %cst_37 = arith.constant dense<0.000000e+00> : vector<128x64xf32>
    %59 = tpu.matmul %57, %2, %cst_37 {dimension_numbers = #tpu.dot_dimension_numbers<[1], [0], [0], [1], [0, 0, 1, 1], [], []>} : vector<128x64xf32>, vector<64x64xf32>, vector<128x64xf32> -> vector<128x64xf32>
    %60 = arith.addf %58, %59 : vector<128x64xf32>
    %61 = vector.broadcast %3 : vector<1x64xf32> to vector<128x64xf32>
    %62 = arith.addf %60, %61 : vector<128x64xf32>
    %cst_38 = arith.constant 0.000000e+00 : f32
    %63 = vector.broadcast %cst_38 : f32 to vector<128x64xf32>
    %64 = arith.maximumf %62, %63 : vector<128x64xf32>
    %cst_39 = arith.constant dense<0.000000e+00> : vector<1x128xf32>
    %65 = tpu.matmul %4, %64, %cst_39 {dimension_numbers = #tpu.dot_dimension_numbers<[1], [1], [0], [0], [0, 0, 1, 0], [], []>} : vector<1x64xf32>, vector<128x64xf32>, vector<1x128xf32> -> vector<1x128xf32>
    %66 = vector.broadcast %5 : f32 to vector<1x128xf32>
    %67 = arith.addf %65, %66 : vector<1x128xf32>
    %c1_40 = arith.constant 1 : index
    %c0_41 = arith.constant 0 : index
    %68 = vector.load %arg8[%c1_40, %c0_41] : memref<2x128xf32, #tpu.memory_space<vmem>>, vector<1x128xf32>
    tpu.vector_store %arg8[%c1_40, %c0_41], %67 {strides = array<i32>} : memref<2x128xf32, #tpu.memory_space<vmem>>, vector<1x128xf32>,
    return
  }
  func.func @transform_0(%arg0: i32) -> (i32, i32, i32) {
    %c0_i32 = arith.constant 0 : i32
    %c0_i32_0 = arith.constant 0 : i32
    %c0_i32_1 = arith.constant 0 : i32
    return %c0_i32, %arg0, %c0_i32_0 : i32, i32, i32
  }
  func.func @transform_1(%arg0: i32) -> (i32, i32) {
    %c0_i32 = arith.constant 0 : i32
    %c0_i32_0 = arith.constant 0 : i32
    %c0_i32_1 = arith.constant 0 : i32
    return %c0_i32, %c0_i32_0 : i32, i32
  }
  func.func @transform_2(%arg0: i32) -> (i32, i32) {
    %c0_i32 = arith.constant 0 : i32
    %c0_i32_0 = arith.constant 0 : i32
    %c0_i32_1 = arith.constant 0 : i32
    return %c0_i32, %c0_i32_0 : i32, i32
  }
  func.func @transform_3(%arg0: i32) -> (i32, i32) {
    %c0_i32 = arith.constant 0 : i32
    %c0_i32_0 = arith.constant 0 : i32
    %c0_i32_1 = arith.constant 0 : i32
    return %c0_i32, %c0_i32_0 : i32, i32
  }
  func.func @transform_4(%arg0: i32) -> (i32, i32) {
    %c0_i32 = arith.constant 0 : i32
    %c0_i32_0 = arith.constant 0 : i32
    %c0_i32_1 = arith.constant 0 : i32
    return %c0_i32, %c0_i32_0 : i32, i32
  }
  func.func @transform_5(%arg0: i32) -> (i32, i32) {
    %c0_i32 = arith.constant 0 : i32
    %c0_i32_0 = arith.constant 0 : i32
    %c0_i32_1 = arith.constant 0 : i32
    return %c0_i32, %c0_i32_0 : i32, i32
  }
  func.func @transform_6(%arg0: i32) -> i32 {
    %c0_i32 = arith.constant 0 : i32
    %c0_i32_0 = arith.constant 0 : i32
    return %c0_i32 : i32
  }
  func.func @transform_7(%arg0: i32) -> (i32, i32) {
    %c0_i32 = arith.constant 0 : i32
    %c0_i32_0 = arith.constant 0 : i32
    return %arg0, %c0_i32 : i32, i32
  }
}

</mosaic_0001>

<llo_original>
// kernel: tpu_custom_call.1
$region0: #{tpu_custom_call.1}
  #allocation0 [shape = 'u32[]', space=smem, size = 0x4, offset = 0x4, fixed_abs, tag = 'smem constant byte address 0x4 - core index']
  #allocation1 [shape = 'u32[144,128]{1,0:T(1,128)}', space=vmem, size = 0x12000, scoped, tag = 'internal scratch']
  #allocation2 [shape = 'f32[1]{0:T(128)S(6)}', space=smem, size = 0x200, scoped, tag = 'scoped memory for tpu_custom_call.1']
  %s0 = inlined_call_operand.hbm [shape: s32[2,2,128], index: 0, kind: input, shape index: {}]
  %s1 = inlined_call_operand.hbm [shape: f32[48,64], index: 1, kind: input, shape index: {}]
  %s2 = inlined_call_operand.hbm [shape: f32[64,64], index: 2, kind: input, shape index: {}]
  %s3 = inlined_call_operand.hbm [shape: f32[64,64], index: 3, kind: input, shape index: {}]
  %s4 = inlined_call_operand.vmem [shape: f32[1,64], index: 4, kind: input, shape index: {}]
  %s5 = inlined_call_operand.vmem [shape: f32[1,64], index: 5, kind: input, shape index: {}]
  %s6 = inlined_call_operand.<no memory space> [shape: f32[1], index: 6, kind: input, shape index: {}]
  %s7 = inlined_call_operand.hbm [shape: f32[2,128], index: 7, kind: output, shape index: {}]
  %s8 = sld [smem:[#allocation0]]
  $region54: #{tpu_custom_call.1} parent=0
    _
  %s10 = ssub.s32 1, %s8
  %s11 = scalar_select 0, %s10, %s8
  %12 = sst [smem:[#allocation2]] %s6
  $region1: #{tpu_custom_call.1} parent=0
    #allocation3 [shape = 'u8[2048]{0}', space=vmem, size = 0x800, scoped, tag = 'input window, operand 0, single buffered']
    #allocation4 [shape = 's32[1]{0}', space=sflag, size = 0x4, scoped, tag = 'scoped memory for tpu_custom_call.1']
    #allocation5 [shape = 's32[1]{0}', space=sflag, size = 0x4, scoped, tag = 'scoped memory for tpu_custom_call.1']
    #allocation6 [shape = 'u8[24576]{0}', space=vmem, size = 0x6000, scoped, tag = 'input window, operand 1, single buffered']
    #allocation7 [shape = 's32[1]{0}', space=sflag, size = 0x4, scoped, tag = 'scoped memory for tpu_custom_call.1']
    #allocation8 [shape = 'u8[32768]{0}', space=vmem, size = 0x8000, scoped, tag = 'input window, operand 2, single buffered']
    #allocation9 [shape = 'u8[32768]{0}', space=vmem, size = 0x8000, scoped, tag = 'input window, operand 3, single buffered']
    #allocation10 [shape = 's32[1]{0}', space=sflag, size = 0x4, scoped, tag = 'scoped memory for tpu_custom_call.1']
    #allocation11 [shape = 'u8[1024]{0}', space=vmem, size = 0x400, scoped, tag = 'output window, operand 0, single buffered']
    %13 = vsyncpa [#allocation4], 0
    %14 = vsyncpa [#allocation7], 0
    %15 = vsyncpa [#allocation10], 0
    %16 = vsyncpa [#allocation5], 0
    // Predicated region
    $region2: #{tpu_custom_call.1} parent=1 // pred_check
      _
    $region3: #{tpu_custom_call.1} parent=1 // pred_check_branch
      %18 = sbr.rel (0) target = $region5
    $region4: #{tpu_custom_call.1} parent=1 // pred_region
      %s20 = ssub.s32 64, 64
      %21 = vsyncadd [#allocation4], %s20
      %s22 = sshll.u32 [#allocation3], 4
      %s23 = int_to_ptr.vmem [resolvable:$true] %s22
      %28 = dma.hbm_to_vmem [thread:$0]  %s0, 64, %s23, [#allocation4], 32, 32, 2
    $region5: #{tpu_custom_call.1} parent=1 // pred_fallthru
      _
    // Predicated region
    $region6: #{tpu_custom_call.1} parent=1 // pred_check
      _
    $region7: #{tpu_custom_call.1} parent=1 // pred_check_branch
      %30 = sbr.rel (0) target = $region9
    $region8: #{tpu_custom_call.1} parent=1 // pred_region
      %s32 = ssub.s32 768, 768
      %33 = vsyncadd [#allocation7], %s32
      %s34 = sshll.u32 [#allocation6], 4
      %s35 = int_to_ptr.vmem [resolvable:$true] %s34
      %40 = dma.hbm_to_vmem [thread:$0]  %s1, 768, %s35, [#allocation7], 128, 128, 8
    $region9: #{tpu_custom_call.1} parent=1 // pred_fallthru
      _
    // Predicated region
    $region10: #{tpu_custom_call.1} parent=1 // pred_check
      _
    $region11: #{tpu_custom_call.1} parent=1 // pred_check_branch
      %42 = sbr.rel (0) target = $region13
    $region12: #{tpu_custom_call.1} parent=1 // pred_region
      %s44 = ssub.s32 1024, 1024
      %45 = vsyncadd [#allocation7], %s44
      %s46 = sshll.u32 [#allocation8], 4
      %s47 = int_to_ptr.vmem [resolvable:$true] %s46
      %52 = dma.hbm_to_vmem [thread:$0]  %s2, 1024, %s47, [#allocation7], 128, 128, 8
    $region13: #{tpu_custom_call.1} parent=1 // pred_fallthru
      _
    // Predicated region
    $region14: #{tpu_custom_call.1} parent=1 // pred_check
      _
    $region15: #{tpu_custom_call.1} parent=1 // pred_check_branch
      %54 = sbr.rel (0) target = $region17
    $region16: #{tpu_custom_call.1} parent=1 // pred_region
      %s56 = ssub.s32 1024, 1024
      %57 = vsyncadd [#allocation10], %s56
      %s58 = sshll.u32 [#allocation9], 4
      %s59 = int_to_ptr.vmem [resolvable:$true] %s58
      %64 = dma.hbm_to_vmem [thread:$0]  %s3, 1024, %s59, [#allocation10], 128, 128, 8
    $region17: #{tpu_custom_call.1} parent=1 // pred_fallthru
      _
    // Predicated region
    $region18: #{tpu_custom_call.1} parent=1 // pred_check
      _
    $region19: #{tpu_custom_call.1} parent=1 // pred_check_branch
      %66 = sbr.rel (0) target = $region21
    $region20: #{tpu_custom_call.1} parent=1 // pred_region
      _
    $region21: #{tpu_custom_call.1} parent=1 // pred_fallthru
      _
    // Predicated region
    $region22: #{tpu_custom_call.1} parent=1 // pred_check
      _
    $region23: #{tpu_custom_call.1} parent=1 // pred_check_branch
      %68 = sbr.rel (0) target = $region25
    $region24: #{tpu_custom_call.1} parent=1 // pred_region
      _
    $region25: #{tpu_custom_call.1} parent=1 // pred_fallthru
      _
    // Predicated region
    $region26: #{tpu_custom_call.1} parent=1 // pred_check
      _
    $region27: #{tpu_custom_call.1} parent=1 // pred_check_branch
      %70 = sbr.rel (0) target = $region29
    $region28: #{tpu_custom_call.1} parent=1 // pred_region
      _
    $region29: #{tpu_custom_call.1} parent=1 // pred_fallthru
      _
    // Predicated region
    $region30: #{tpu_custom_call.1} parent=1 // pred_check
      _
    $region31: #{tpu_custom_call.1} parent=1 // pred_check_branch
      %72 = sbr.rel (0) target = $region33
    $region32: #{tpu_custom_call.1} parent=1 // pred_region
      %73 = dma.done [#allocation4], 64
    $region33: #{tpu_custom_call.1} parent=1 // pred_fallthru
      _
    // Predicated region
    $region34: #{tpu_custom_call.1} parent=1 // pred_check
      _
    $region35: #{tpu_custom_call.1} parent=1 // pred_check_branch
      %75 = sbr.rel (0) target = $region37
    $region36: #{tpu_custom_call.1} parent=1 // pred_region
      %76 = dma.done [#allocation7], 768
    $region37: #{tpu_custom_call.1} parent=1 // pred_fallthru
      _
    // Predicated region
    $region38: #{tpu_custom_call.1} parent=1 // pred_check
      _
    $region39: #{tpu_custom_call.1} parent=1 // pred_check_branch
      %78 = sbr.rel (0) target = $region41
    $region40: #{tpu_custom_call.1} parent=1 // pred_region
      %79 = dma.done [#allocation7], 1024
    $region41: #{tpu_custom_call.1} parent=1 // pred_fallthru
      _
    // Predicated region
    $region42: #{tpu_custom_call.1} parent=1 // pred_check
      _
    $region43: #{tpu_custom_call.1} parent=1 // pred_check_branch
      %81 = sbr.rel (0) target = $region45
    $region44: #{tpu_custom_call.1} parent=1 // pred_region
      %82 = dma.done [#allocation10], 1024
    $region45: #{tpu_custom_call.1} parent=1 // pred_fallthru
      _
    %v83 = vld [vmem:[#allocation6] sm:$0xff]
    %v84 = vld [vmem:[#allocation6 + $0x8] sm:$0xff]
    %v85 = vld [vmem:[#allocation6 + $0x10] sm:$0xff]
    %v86 = vld [vmem:[#allocation6 + $0x18] sm:$0xff]
    %v87 = vld [vmem:[#allocation6 + $0x20] sm:$0xff]
    %v88 = vld [vmem:[#allocation6 + $0x28] sm:$0xff]
    %v89 = vld [vmem:[#allocation8] sm:$0xff]
    %v90 = vld [vmem:[#allocation8 + $0x8] sm:$0xff]
    %v91 = vld [vmem:[#allocation8 + $0x10] sm:$0xff]
    %v92 = vld [vmem:[#allocation8 + $0x18] sm:$0xff]
    %v93 = vld [vmem:[#allocation8 + $0x20] sm:$0xff]
    %v94 = vld [vmem:[#allocation8 + $0x28] sm:$0xff]
    %v95 = vld [vmem:[#allocation8 + $0x30] sm:$0xff]
    %v96 = vld [vmem:[#allocation8 + $0x38] sm:$0xff]
    %v97 = vld [vmem:[#allocation9] sm:$0xff]
    %v98 = vld [vmem:[#allocation9 + $0x8] sm:$0xff]
    %v99 = vld [vmem:[#allocation9 + $0x10] sm:$0xff]
    %v100 = vld [vmem:[#allocation9 + $0x18] sm:$0xff]
    %v101 = vld [vmem:[#allocation9 + $0x20] sm:$0xff]
    %v102 = vld [vmem:[#allocation9 + $0x28] sm:$0xff]
    %v103 = vld [vmem:[#allocation9 + $0x30] sm:$0xff]
    %v104 = vld [vmem:[#allocation9 + $0x38] sm:$0xff]
    %v105 = vld [vmem:[%s4] sm:$0x1]
    %v106 = vld [vmem:[%s5] sm:$0x1]
    %s107 = sld [smem:[#allocation2]]
    %v108 = vld [vmem:[#allocation3] sm:$0x3]
    %s109 = scalar_lea.vmem [#allocation3], 2
    %v110 = vld [vmem:[%s109] sm:$0x3]
    %v111 = vlaneseq
    %v112 = vshrl.u32 %v111, 7
    %v113 = vadd.s32 %v112, 8
    %v114 = vadd.s32 %v112, 16
    %v115 = vadd.s32 %v112, 24
    %v116 = vadd.s32 %v112, 32
    %v117 = vadd.s32 %v112, 40
    %v118 = vlaneseq
    %v119 = vshrl.u32 %v118, 7
    %v120 = vsub.s32 0, %v119
    %v121 = vrot.slane %v108, %v120
    %vm122 = vcmp.eq.s32.totalorder %v112, %v121
    %vm123 = vcmp.eq.s32.totalorder %v113, %v121
    %vm124 = vcmp.eq.s32.totalorder %v114, %v121
    %vm125 = vcmp.eq.s32.totalorder %v115, %v121
    %vm126 = vcmp.eq.s32.totalorder %v116, %v121
    %vm127 = vcmp.eq.s32.totalorder %v117, %v121
    %v128 = vsel %vm122, 1.0, 0.0
    %v129 = vsel %vm123, 1.0, 0.0
    %v130 = vsel %vm124, 1.0, 0.0
    %v131 = vsel %vm125, 1.0, 0.0
    %v132 = vsel %vm126, 1.0, 0.0
    %v133 = vsel %vm127, 1.0, 0.0
    %v134 = vlaneseq
    %v135 = vshrl.u32 %v134, 7
    %v136 = vsub.s32 0, %v135
    %v137 = vrot.slane %v110, %v136
    %vm138 = vcmp.eq.s32.totalorder %v112, %v137
    %vm139 = vcmp.eq.s32.totalorder %v113, %v137
    %vm140 = vcmp.eq.s32.totalorder %v114, %v137
    %vm141 = vcmp.eq.s32.totalorder %v115, %v137
    %vm142 = vcmp.eq.s32.totalorder %v116, %v137
    %vm143 = vcmp.eq.s32.totalorder %v117, %v137
    %v144 = vsel %vm138, 1.0, 0.0
    %v145 = vsel %vm139, 1.0, 0.0
    %v146 = vsel %vm140, 1.0, 0.0
    %v147 = vsel %vm141, 1.0, 0.0
    %v148 = vsel %vm142, 1.0, 0.0
    %v149 = vsel %vm143, 1.0, 0.0
    %150 = vxpose.xlu0.b32.start [1/16] %v128, 128
    %151 = vxpose.xlu0.b32.cont [2/16] %v129, 128
    %152 = vxpose.xlu0.b32.cont [3/16] %v130, 128
    %153 = vxpose.xlu0.b32.cont [4/16] %v131, 128
    %154 = vxpose.xlu0.b32.cont [5/16] %v132, 128
    %155 = vxpose.xlu0.b32.cont [6/16] %v133, 128
    %156 = vxpose.xlu0.b32.cont [7/16] 0.0, 128
    %157 = vxpose.xlu0.b32.cont [8/16] 0.0, 128
    %158 = vxpose.xlu0.b32.cont [9/16] 0.0, 128
    %159 = vxpose.xlu0.b32.cont [10/16] 0.0, 128
    %160 = vxpose.xlu0.b32.cont [11/16] 0.0, 128
    %161 = vxpose.xlu0.b32.cont [12/16] 0.0, 128
    %162 = vxpose.xlu0.b32.cont [13/16] 0.0, 128
    %163 = vxpose.xlu0.b32.cont [14/16] 0.0, 128
    %164 = vxpose.xlu0.b32.cont [15/16] 0.0, 128
    %165 = vxpose.xlu0.b32.end [16/16] 0.0, 128
    %v166 = vpop.trf.xlu0
    %v167 = vpop.trf.xlu0
    %v168 = vpop.trf.xlu0
    %v169 = vpop.trf.xlu0
    %v170 = vpop.trf.xlu0
    %v171 = vpop.trf.xlu0
    %v172 = vpop.trf.xlu0
    %v173 = vpop.trf.xlu0
    %v174 = vpop.trf.xlu0
    %v175 = vpop.trf.xlu0
    %v176 = vpop.trf.xlu0
    %v177 = vpop.trf.xlu0
    %v178 = vpop.trf.xlu0
    %v179 = vpop.trf.xlu0
    %v180 = vpop.trf.xlu0
    %v181 = vpop.trf.xlu0
    %vm182 = vcmask 392192
    %v184 = vsel %vm182, %v166, 0
    %v187 = vsel %vm182, %v167, 0
    %v190 = vsel %vm182, %v168, 0
    %v193 = vsel %vm182, %v169, 0
    %v196 = vsel %vm182, %v170, 0
    %v199 = vsel %vm182, %v171, 0
    %v202 = vsel %vm182, %v172, 0
    %v205 = vsel %vm182, %v173, 0
    %v208 = vsel %vm182, %v174, 0
    %v211 = vsel %vm182, %v175, 0
    %v214 = vsel %vm182, %v176, 0
    %v217 = vsel %vm182, %v177, 0
    %v220 = vsel %vm182, %v178, 0
    %v223 = vsel %vm182, %v179, 0
    %v226 = vsel %vm182, %v180, 0
    %v229 = vsel %vm182, %v181, 0
    %231 = vmatprep.subr.mxu0 0.0
    %232 = vmatpush1.msra.mxu0 0.0
    %233 = vmatprep.subr.mxu0 0.0
    %234 = vmatpush1.msra.mxu0 0.0
    %235 = vmatprep.subr.mxu0 0.0
    %236 = vmatpush1.msra.mxu0 0.0
    %237 = vmatprep.subr.mxu0 0.0
    %238 = vmatpush1.msra.mxu0 0.0
    %239 = vmatprep.subr.mxu0 0.0
    %240 = vmatpush1.msra.mxu0 0.0
    %241 = vmatprep.subr.mxu0 0.0
    %242 = vmatpush1.msra.mxu0 0.0
    %243 = vmatprep.subr.mxu0 0.0
    %244 = vmatpush1.msra.mxu0 0.0
    %245 = vmatprep.subr.mxu0 0.0
    %246 = vmatpush1.msra.mxu0 0.0
    %247 = vmatprep.subr.mxu0 0.0
    %248 = vmatpush1.msra.mxu0 0.0
    %249 = vmatprep.subr.mxu0 0.0
    %250 = vmatpush1.msra.mxu0 0.0
    %251 = vmatprep.subr.mxu0 0.0
    %252 = vmatpush1.msra.mxu0 %v88
    %253 = vmatprep.subr.mxu0 0.0
    %254 = vmatpush1.msra.mxu0 %v87
    %255 = vmatprep.subr.mxu0 0.0
    %256 = vmatpush1.msra.mxu0 %v86
    %257 = vmatprep.subr.mxu0 0.0
    %258 = vmatpush1.msra.mxu0 %v85
    %259 = vmatprep.subr.mxu0 0.0
    %260 = vmatpush1.msra.mxu0 %v84
    %261 = vmatprep.subr.mxu0 0.0
    %262 = vmatpush1.msra.mxu0 %v83
    %263 = vmatprep.subr.mxu0 0.0
    %264 = vmatpush2.msra.mxu0 0.0
    %265 = vmatprep.subr.mxu0 0.0
    %266 = vmatpush2.msra.mxu0 0.0
    %267 = vmatprep.subr.mxu0 0.0
    %268 = vmatpush2.msra.mxu0 0.0
    %269 = vmatprep.subr.mxu0 0.0
    %270 = vmatpush2.msra.mxu0 0.0
    %271 = vmatprep.subr.mxu0 0.0
    %272 = vmatpush2.msra.mxu0 0.0
    %273 = vmatprep.subr.mxu0 0.0
    %274 = vmatpush2.msra.mxu0 0.0
    %275 = vmatprep.subr.mxu0 0.0
    %276 = vmatpush2.msra.mxu0 0.0
    %277 = vmatprep.subr.mxu0 0.0
    %278 = vmatpush2.msra.mxu0 0.0
    %279 = vmatprep.subr.mxu0 0.0
    %280 = vmatpush2.msra.mxu0 0.0
    %281 = vmatprep.subr.mxu0 0.0
    %282 = vmatpush2.msra.mxu0 0.0
    %283 = vmatprep.subr.mxu0 0.0
    %284 = vmatpush2.msra.mxu0 0.0
    %285 = vmatprep.subr.mxu0 0.0
    %286 = vmatpush2.msra.mxu0 0.0
    %287 = vmatprep.subr.mxu0 0.0
    %288 = vmatpush2.msra.mxu0 0.0
    %289 = vmatprep.subr.mxu0 0.0
    %290 = vmatpush2.msra.mxu0 0.0
    %291 = vmatprep.subr.mxu0 0.0
    %292 = vmatpush2.msra.mxu0 0.0
    %293 = vmatprep.subr.mxu0 0.0
    %294 = vmatpush2.msra.mxu0 0.0
    %295 = vmatprep.mubr.f32.mxu0 0.0
    %296 = vmatmul.mubr.f32.gmra.mxu0 %v184
    %v297 = vpop.f32.mrf.mxu0
    %v298 = vadd.f32 0.0, %v297
    %v299 = vpop.f32.mrf.mxu0
    %300 = vmatprep.mubr.f32.mxu0 0.0
    %301 = vmatmul.mubr.f32.gmra.mxu0 %v187
    %v302 = vpop.f32.mrf.mxu0
    %v303 = vadd.f32 0.0, %v302
    %v304 = vpop.f32.mrf.mxu0
    %305 = vmatprep.mubr.f32.mxu0 0.0
    %306 = vmatmul.mubr.f32.gmra.mxu0 %v190
    %v307 = vpop.f32.mrf.mxu0
    %v308 = vadd.f32 0.0, %v307
    %v309 = vpop.f32.mrf.mxu0
    %310 = vmatprep.mubr.f32.mxu0 0.0
    %311 = vmatmul.mubr.f32.gmra.mxu0 %v193
    %v312 = vpop.f32.mrf.mxu0
    %v313 = vadd.f32 0.0, %v312
    %v314 = vpop.f32.mrf.mxu0
    %315 = vmatprep.mubr.f32.mxu0 0.0
    %316 = vmatmul.mubr.f32.gmra.mxu0 %v196
    %v317 = vpop.f32.mrf.mxu0
    %v318 = vadd.f32 0.0, %v317
    %v319 = vpop.f32.mrf.mxu0
    %320 = vmatprep.mubr.f32.mxu0 0.0
    %321 = vmatmul.mubr.f32.gmra.mxu0 %v199
    %v322 = vpop.f32.mrf.mxu0
    %v323 = vadd.f32 0.0, %v322
    %v324 = vpop.f32.mrf.mxu0
    %325 = vmatprep.mubr.f32.mxu0 0.0
    %326 = vmatmul.mubr.f32.gmra.mxu0 %v202
    %v327 = vpop.f32.mrf.mxu0
    %v328 = vadd.f32 0.0, %v327
    %v329 = vpop.f32.mrf.mxu0
    %330 = vmatprep.mubr.f32.mxu0 0.0
    %331 = vmatmul.mubr.f32.gmra.mxu0 %v205
    %v332 = vpop.f32.mrf.mxu0
    %v333 = vadd.f32 0.0, %v332
    %v334 = vpop.f32.mrf.mxu0
    %335 = vmatprep.mubr.f32.mxu0 0.0
    %336 = vmatmul.mubr.f32.gmra.mxu0 %v208
    %v337 = vpop.f32.mrf.mxu0
    %v338 = vadd.f32 0.0, %v337
    %v339 = vpop.f32.mrf.mxu0
    %340 = vmatprep.mubr.f32.mxu0 0.0
    %341 = vmatmul.mubr.f32.gmra.mxu0 %v211
    %v342 = vpop.f32.mrf.mxu0
    %v343 = vadd.f32 0.0, %v342
    %v344 = vpop.f32.mrf.mxu0
    %345 = vmatprep.mubr.f32.mxu0 0.0
    %346 = vmatmul.mubr.f32.gmra.mxu0 %v214
    %v347 = vpop.f32.mrf.mxu0
    %v348 = vadd.f32 0.0, %v347
    %v349 = vpop.f32.mrf.mxu0
    %350 = vmatprep.mubr.f32.mxu0 0.0
    %351 = vmatmul.mubr.f32.gmra.mxu0 %v217
    %v352 = vpop.f32.mrf.mxu0
    %v353 = vadd.f32 0.0, %v352
    %v354 = vpop.f32.mrf.mxu0
    %355 = vmatprep.mubr.f32.mxu0 0.0
    %356 = vmatmul.mubr.f32.gmra.mxu0 %v220
    %v357 = vpop.f32.mrf.mxu0
    %v358 = vadd.f32 0.0, %v357
    %v359 = vpop.f32.mrf.mxu0
    %360 = vmatprep.mubr.f32.mxu0 0.0
    %361 = vmatmul.mubr.f32.gmra.mxu0 %v223
    %v362 = vpop.f32.mrf.mxu0
    %v363 = vadd.f32 0.0, %v362
    %v364 = vpop.f32.mrf.mxu0
    %365 = vmatprep.mubr.f32.mxu0 0.0
    %366 = vmatmul.mubr.f32.gmra.mxu0 %v226
    %v367 = vpop.f32.mrf.mxu0
    %v368 = vadd.f32 0.0, %v367
    %v369 = vpop.f32.mrf.mxu0
    %370 = vmatprep.mubr.f32.mxu0 0.0
    %371 = vmatmul.mubr.f32.gmra.mxu0 %v229
    %v372 = vpop.f32.mrf.mxu0
    %v373 = vadd.f32 0.0, %v372
    %v374 = vpop.f32.mrf.mxu0
    %375 = vdwg.mxu0
    %376 = vxpose.xlu0.b32.start [1/16] %v144, 128
    %377 = vxpose.xlu0.b32.cont [2/16] %v145, 128
    %378 = vxpose.xlu0.b32.cont [3/16] %v146, 128
    %379 = vxpose.xlu0.b32.cont [4/16] %v147, 128
    %380 = vxpose.xlu0.b32.cont [5/16] %v148, 128
    %381 = vxpose.xlu0.b32.cont [6/16] %v149, 128
    %382 = vxpose.xlu0.b32.cont [7/16] 0.0, 128
    %383 = vxpose.xlu0.b32.cont [8/16] 0.0, 128
    %384 = vxpose.xlu0.b32.cont [9/16] 0.0, 128
    %385 = vxpose.xlu0.b32.cont [10/16] 0.0, 128
    %386 = vxpose.xlu0.b32.cont [11/16] 0.0, 128
    %387 = vxpose.xlu0.b32.cont [12/16] 0.0, 128
    %388 = vxpose.xlu0.b32.cont [13/16] 0.0, 128
    %389 = vxpose.xlu0.b32.cont [14/16] 0.0, 128
    %390 = vxpose.xlu0.b32.cont [15/16] 0.0, 128
    %391 = vxpose.xlu0.b32.end [16/16] 0.0, 128
    %v392 = vpop.trf.xlu0
    %v393 = vpop.trf.xlu0
    %v394 = vpop.trf.xlu0
    %v395 = vpop.trf.xlu0
    %v396 = vpop.trf.xlu0
    %v397 = vpop.trf.xlu0
    %v398 = vpop.trf.xlu0
    %v399 = vpop.trf.xlu0
    %v400 = vpop.trf.xlu0
    %v401 = vpop.trf.xlu0
    %v402 = vpop.trf.xlu0
    %v403 = vpop.trf.xlu0
    %v404 = vpop.trf.xlu0
    %v405 = vpop.trf.xlu0
    %v406 = vpop.trf.xlu0
    %v407 = vpop.trf.xlu0
    %v409 = vsel %vm182, %v392, 0
    %v412 = vsel %vm182, %v393, 0
    %v415 = vsel %vm182, %v394, 0
    %v418 = vsel %vm182, %v395, 0
    %v421 = vsel %vm182, %v396, 0
    %v424 = vsel %vm182, %v397, 0
    %v427 = vsel %vm182, %v398, 0
    %v430 = vsel %vm182, %v399, 0
    %v433 = vsel %vm182, %v400, 0
    %v436 = vsel %vm182, %v401, 0
    %v439 = vsel %vm182, %v402, 0
    %v442 = vsel %vm182, %v403, 0
    %v445 = vsel %vm182, %v404, 0
    %v448 = vsel %vm182, %v405, 0
    %v451 = vsel %vm182, %v406, 0
    %v454 = vsel %vm182, %v407, 0
    %456 = vmatprep.subr.mxu0 0.0
    %457 = vmatpush1.msra.mxu0 0.0
    %458 = vmatprep.subr.mxu0 0.0
    %459 = vmatpush1.msra.mxu0 0.0
    %460 = vmatprep.subr.mxu0 0.0
    %461 = vmatpush1.msra.mxu0 0.0
    %462 = vmatprep.subr.mxu0 0.0
    %463 = vmatpush1.msra.mxu0 0.0
    %464 = vmatprep.subr.mxu0 0.0
    %465 = vmatpush1.msra.mxu0 0.0
    %466 = vmatprep.subr.mxu0 0.0
    %467 = vmatpush1.msra.mxu0 0.0
    %468 = vmatprep.subr.mxu0 0.0
    %469 = vmatpush1.msra.mxu0 0.0
    %470 = vmatprep.subr.mxu0 0.0
    %471 = vmatpush1.msra.mxu0 0.0
    %472 = vmatprep.subr.mxu0 0.0
    %473 = vmatpush1.msra.mxu0 0.0
    %474 = vmatprep.subr.mxu0 0.0
    %475 = vmatpush1.msra.mxu0 0.0
    %476 = vmatprep.subr.mxu0 0.0
    %477 = vmatpush1.msra.mxu0 %v88
    %478 = vmatprep.subr.mxu0 0.0
    %479 = vmatpush1.msra.mxu0 %v87
    %480 = vmatprep.subr.mxu0 0.0
    %481 = vmatpush1.msra.mxu0 %v86
    %482 = vmatprep.subr.mxu0 0.0
    %483 = vmatpush1.msra.mxu0 %v85
    %484 = vmatprep.subr.mxu0 0.0
    %485 = vmatpush1.msra.mxu0 %v84
    %486 = vmatprep.subr.mxu0 0.0
    %487 = vmatpush1.msra.mxu0 %v83
    %488 = vmatprep.subr.mxu0 0.0
    %489 = vmatpush2.msra.mxu0 0.0
    %490 = vmatprep.subr.mxu0 0.0
    %491 = vmatpush2.msra.mxu0 0.0
    %492 = vmatprep.subr.mxu0 0.0
    %493 = vmatpush2.msra.mxu0 0.0
    %494 = vmatprep.subr.mxu0 0.0
    %495 = vmatpush2.msra.mxu0 0.0
    %496 = vmatprep.subr.mxu0 0.0
    %497 = vmatpush2.msra.mxu0 0.0
    %498 = vmatprep.subr.mxu0 0.0
    %499 = vmatpush2.msra.mxu0 0.0
    %500 = vmatprep.subr.mxu0 0.0
    %501 = vmatpush2.msra.mxu0 0.0
    %502 = vmatprep.subr.mxu0 0.0
    %503 = vmatpush2.msra.mxu0 0.0
    %504 = vmatprep.subr.mxu0 0.0
    %505 = vmatpush2.msra.mxu0 0.0
    %506 = vmatprep.subr.mxu0 0.0
    %507 = vmatpush2.msra.mxu0 0.0
    %508 = vmatprep.subr.mxu0 0.0
    %509 = vmatpush2.msra.mxu0 0.0
    %510 = vmatprep.subr.mxu0 0.0
    %511 = vmatpush2.msra.mxu0 0.0
    %512 = vmatprep.subr.mxu0 0.0
    %513 = vmatpush2.msra.mxu0 0.0
    %514 = vmatprep.subr.mxu0 0.0
    %515 = vmatpush2.msra.mxu0 0.0
    %516 = vmatprep.subr.mxu0 0.0
    %517 = vmatpush2.msra.mxu0 0.0
    %518 = vmatprep.subr.mxu0 0.0
    %519 = vmatpush2.msra.mxu0 0.0
    %520 = vmatprep.mubr.f32.mxu0 0.0
    %521 = vmatmul.mubr.f32.gmra.mxu0 %v409
    %v522 = vpop.f32.mrf.mxu0
    %v523 = vadd.f32 0.0, %v522
    %v524 = vpop.f32.mrf.mxu0
    %525 = vmatprep.mubr.f32.mxu0 0.0
    %526 = vmatmul.mubr.f32.gmra.mxu0 %v412
    %v527 = vpop.f32.mrf.mxu0
    %v528 = vadd.f32 0.0, %v527
    %v529 = vpop.f32.mrf.mxu0
    %530 = vmatprep.mubr.f32.mxu0 0.0
    %531 = vmatmul.mubr.f32.gmra.mxu0 %v415
    %v532 = vpop.f32.mrf.mxu0
    %v533 = vadd.f32 0.0, %v532
    %v534 = vpop.f32.mrf.mxu0
    %535 = vmatprep.mubr.f32.mxu0 0.0
    %536 = vmatmul.mubr.f32.gmra.mxu0 %v418
    %v537 = vpop.f32.mrf.mxu0
    %v538 = vadd.f32 0.0, %v537
    %v539 = vpop.f32.mrf.mxu0
    %540 = vmatprep.mubr.f32.mxu0 0.0
    %541 = vmatmul.mubr.f32.gmra.mxu0 %v421
    %v542 = vpop.f32.mrf.mxu0
    %v543 = vadd.f32 0.0, %v542
    %v544 = vpop.f32.mrf.mxu0
    %545 = vmatprep.mubr.f32.mxu0 0.0
    %546 = vmatmul.mubr.f32.gmra.mxu0 %v424
    %v547 = vpop.f32.mrf.mxu0
    %v548 = vadd.f32 0.0, %v547
    %v549 = vpop.f32.mrf.mxu0
    %550 = vmatprep.mubr.f32.mxu0 0.0
    %551 = vmatmul.mubr.f32.gmra.mxu0 %v427
    %v552 = vpop.f32.mrf.mxu0
    %v553 = vadd.f32 0.0, %v552
    %v554 = vpop.f32.mrf.mxu0
    %555 = vmatprep.mubr.f32.mxu0 0.0
    %556 = vmatmul.mubr.f32.gmra.mxu0 %v430
    %v557 = vpop.f32.mrf.mxu0
    %v558 = vadd.f32 0.0, %v557
    %v559 = vpop.f32.mrf.mxu0
    %560 = vmatprep.mubr.f32.mxu0 0.0
    %561 = vmatmul.mubr.f32.gmra.mxu0 %v433
    %v562 = vpop.f32.mrf.mxu0
    %v563 = vadd.f32 0.0, %v562
    %v564 = vpop.f32.mrf.mxu0
    %565 = vmatprep.mubr.f32.mxu0 0.0
    %566 = vmatmul.mubr.f32.gmra.mxu0 %v436
    %v567 = vpop.f32.mrf.mxu0
    %v568 = vadd.f32 0.0, %v567
    %v569 = vpop.f32.mrf.mxu0
    %570 = vmatprep.mubr.f32.mxu0 0.0
    %571 = vmatmul.mubr.f32.gmra.mxu0 %v439
    %v572 = vpop.f32.mrf.mxu0
    %v573 = vadd.f32 0.0, %v572
    %v574 = vpop.f32.mrf.mxu0
    %575 = vmatprep.mubr.f32.mxu0 0.0
    %576 = vmatmul.mubr.f32.gmra.mxu0 %v442
    %v577 = vpop.f32.mrf.mxu0
    %v578 = vadd.f32 0.0, %v577
    %v579 = vpop.f32.mrf.mxu0
    %580 = vmatprep.mubr.f32.mxu0 0.0
    %581 = vmatmul.mubr.f32.gmra.mxu0 %v445
    %v582 = vpop.f32.mrf.mxu0
    %v583 = vadd.f32 0.0, %v582
    %v584 = vpop.f32.mrf.mxu0
    %585 = vmatprep.mubr.f32.mxu0 0.0
    %586 = vmatmul.mubr.f32.gmra.mxu0 %v448
    %v587 = vpop.f32.mrf.mxu0
    %v588 = vadd.f32 0.0, %v587
    %v589 = vpop.f32.mrf.mxu0
    %590 = vmatprep.mubr.f32.mxu0 0.0
    %591 = vmatmul.mubr.f32.gmra.mxu0 %v451
    %v592 = vpop.f32.mrf.mxu0
    %v593 = vadd.f32 0.0, %v592
    %v594 = vpop.f32.mrf.mxu0
    %595 = vmatprep.mubr.f32.mxu0 0.0
    %596 = vmatmul.mubr.f32.gmra.mxu0 %v454
    %v597 = vpop.f32.mrf.mxu0
    %v598 = vadd.f32 0.0, %v597
    %v599 = vpop.f32.mrf.mxu0
    %600 = vdwg.mxu0
    %v601 = vmax.f32 %v298, 0.0
    %v602 = vmax.f32 %v303, 0.0
    %v603 = vmax.f32 %v308, 0.0
    %v604 = vmax.f32 %v313, 0.0
    %v605 = vmax.f32 %v318, 0.0
    %v606 = vmax.f32 %v323, 0.0
    %v607 = vmax.f32 %v328, 0.0
    %v608 = vmax.f32 %v333, 0.0
    %v609 = vmax.f32 %v338, 0.0
    %v610 = vmax.f32 %v343, 0.0
    %v611 = vmax.f32 %v348, 0.0
    %v612 = vmax.f32 %v353, 0.0
    %v613 = vmax.f32 %v358, 0.0
    %v614 = vmax.f32 %v363, 0.0
    %v615 = vmax.f32 %v368, 0.0
    %v616 = vmax.f32 %v373, 0.0
    %v617 = vmax.f32 %v523, 0.0
    %v618 = vmax.f32 %v528, 0.0
    %v619 = vmax.f32 %v533, 0.0
    %v620 = vmax.f32 %v538, 0.0
    %v621 = vmax.f32 %v543, 0.0
    %v622 = vmax.f32 %v548, 0.0
    %v623 = vmax.f32 %v553, 0.0
    %v624 = vmax.f32 %v558, 0.0
    %v625 = vmax.f32 %v563, 0.0
    %v626 = vmax.f32 %v568, 0.0
    %v627 = vmax.f32 %v573, 0.0
    %v628 = vmax.f32 %v578, 0.0
    %v629 = vmax.f32 %v583, 0.0
    %v630 = vmax.f32 %v588, 0.0
    %v631 = vmax.f32 %v593, 0.0
    %v632 = vmax.f32 %v598, 0.0
    %vm633 = vcmask 523264
    %v635 = vsel %vm633, %v617, 0
    %v638 = vsel %vm633, %v618, 0
    %v641 = vsel %vm633, %v619, 0
    %v644 = vsel %vm633, %v620, 0
    %v647 = vsel %vm633, %v621, 0
    %v650 = vsel %vm633, %v622, 0
    %v653 = vsel %vm633, %v623, 0
    %v656 = vsel %vm633, %v624, 0
    %v659 = vsel %vm633, %v625, 0
    %v662 = vsel %vm633, %v626, 0
    %v665 = vsel %vm633, %v627, 0
    %v668 = vsel %vm633, %v628, 0
    %v671 = vsel %vm633, %v629, 0
    %v674 = vsel %vm633, %v630, 0
    %v677 = vsel %vm633, %v631, 0
    %v680 = vsel %vm633, %v632, 0
    %682 = vmatprep.subr.mxu0 0.0
    %683 = vmatpush1.msra.mxu0 0.0
    %684 = vmatprep.subr.mxu0 0.0
    %685 = vmatpush1.msra.mxu0 0.0
    %686 = vmatprep.subr.mxu0 0.0
    %687 = vmatpush1.msra.mxu0 0.0
    %688 = vmatprep.subr.mxu0 0.0
    %689 = vmatpush1.msra.mxu0 0.0
    %690 = vmatprep.subr.mxu0 0.0
    %691 = vmatpush1.msra.mxu0 0.0
    %692 = vmatprep.subr.mxu0 0.0
    %693 = vmatpush1.msra.mxu0 0.0
    %694 = vmatprep.subr.mxu0 0.0
    %695 = vmatpush1.msra.mxu0 0.0
    %696 = vmatprep.subr.mxu0 0.0
    %697 = vmatpush1.msra.mxu0 0.0
    %698 = vmatprep.subr.mxu0 0.0
    %699 = vmatpush1.msra.mxu0 %v104
    %700 = vmatprep.subr.mxu0 0.0
    %701 = vmatpush1.msra.mxu0 %v103
    %702 = vmatprep.subr.mxu0 0.0
    %703 = vmatpush1.msra.mxu0 %v102
    %704 = vmatprep.subr.mxu0 0.0
    %705 = vmatpush1.msra.mxu0 %v101
    %706 = vmatprep.subr.mxu0 0.0
    %707 = vmatpush1.msra.mxu0 %v100
    %708 = vmatprep.subr.mxu0 0.0
    %709 = vmatpush1.msra.mxu0 %v99
    %710 = vmatprep.subr.mxu0 0.0
    %711 = vmatpush1.msra.mxu0 %v98
    %712 = vmatprep.subr.mxu0 0.0
    %713 = vmatpush1.msra.mxu0 %v97
    %714 = vmatprep.subr.mxu0 0.0
    %715 = vmatpush2.msra.mxu0 0.0
    %716 = vmatprep.subr.mxu0 0.0
    %717 = vmatpush2.msra.mxu0 0.0
    %718 = vmatprep.subr.mxu0 0.0
    %719 = vmatpush2.msra.mxu0 0.0
    %720 = vmatprep.subr.mxu0 0.0
    %721 = vmatpush2.msra.mxu0 0.0
    %722 = vmatprep.subr.mxu0 0.0
    %723 = vmatpush2.msra.mxu0 0.0
    %724 = vmatprep.subr.mxu0 0.0
    %725 = vmatpush2.msra.mxu0 0.0
    %726 = vmatprep.subr.mxu0 0.0
    %727 = vmatpush2.msra.mxu0 0.0
    %728 = vmatprep.subr.mxu0 0.0
    %729 = vmatpush2.msra.mxu0 0.0
    %730 = vmatprep.subr.mxu0 0.0
    %731 = vmatpush2.msra.mxu0 0.0
    %732 = vmatprep.subr.mxu0 0.0
    %733 = vmatpush2.msra.mxu0 0.0
    %734 = vmatprep.subr.mxu0 0.0
    %735 = vmatpush2.msra.mxu0 0.0
    %736 = vmatprep.subr.mxu0 0.0
    %737 = vmatpush2.msra.mxu0 0.0
    %738 = vmatprep.subr.mxu0 0.0
    %739 = vmatpush2.msra.mxu0 0.0
    %740 = vmatprep.subr.mxu0 0.0
    %741 = vmatpush2.msra.mxu0 0.0
    %742 = vmatprep.subr.mxu0 0.0
    %743 = vmatpush2.msra.mxu0 0.0
    %744 = vmatprep.subr.mxu0 0.0
    %745 = vmatpush2.msra.mxu0 0.0
    %746 = vmatprep.mubr.f32.mxu0 0.0
    %747 = vmatmul.mubr.f32.gmra.mxu0 %v635
    %v748 = vpop.f32.mrf.mxu0
    %v749 = vadd.f32 0.0, %v748
    %v750 = vpop.f32.mrf.mxu0
    %751 = vmatprep.mubr.f32.mxu0 0.0
    %752 = vmatmul.mubr.f32.gmra.mxu0 %v638
    %v753 = vpop.f32.mrf.mxu0
    %v754 = vadd.f32 0.0, %v753
    %v755 = vpop.f32.mrf.mxu0
    %756 = vmatprep.mubr.f32.mxu0 0.0
    %757 = vmatmul.mubr.f32.gmra.mxu0 %v641
    %v758 = vpop.f32.mrf.mxu0
    %v759 = vadd.f32 0.0, %v758
    %v760 = vpop.f32.mrf.mxu0
    %761 = vmatprep.mubr.f32.mxu0 0.0
    %762 = vmatmul.mubr.f32.gmra.mxu0 %v644
    %v763 = vpop.f32.mrf.mxu0
    %v764 = vadd.f32 0.0, %v763
    %v765 = vpop.f32.mrf.mxu0
    %766 = vmatprep.mubr.f32.mxu0 0.0
    %767 = vmatmul.mubr.f32.gmra.mxu0 %v647
    %v768 = vpop.f32.mrf.mxu0
    %v769 = vadd.f32 0.0, %v768
    %v770 = vpop.f32.mrf.mxu0
    %771 = vmatprep.mubr.f32.mxu0 0.0
    %772 = vmatmul.mubr.f32.gmra.mxu0 %v650
    %v773 = vpop.f32.mrf.mxu0
    %v774 = vadd.f32 0.0, %v773
    %v775 = vpop.f32.mrf.mxu0
    %776 = vmatprep.mubr.f32.mxu0 0.0
    %777 = vmatmul.mubr.f32.gmra.mxu0 %v653
    %v778 = vpop.f32.mrf.mxu0
    %v779 = vadd.f32 0.0, %v778
    %v780 = vpop.f32.mrf.mxu0
    %781 = vmatprep.mubr.f32.mxu0 0.0
    %782 = vmatmul.mubr.f32.gmra.mxu0 %v656
    %v783 = vpop.f32.mrf.mxu0
    %v784 = vadd.f32 0.0, %v783
    %v785 = vpop.f32.mrf.mxu0
    %786 = vmatprep.mubr.f32.mxu0 0.0
    %787 = vmatmul.mubr.f32.gmra.mxu0 %v659
    %v788 = vpop.f32.mrf.mxu0
    %v789 = vadd.f32 0.0, %v788
    %v790 = vpop.f32.mrf.mxu0
    %791 = vmatprep.mubr.f32.mxu0 0.0
    %792 = vmatmul.mubr.f32.gmra.mxu0 %v662
    %v793 = vpop.f32.mrf.mxu0
    %v794 = vadd.f32 0.0, %v793
    %v795 = vpop.f32.mrf.mxu0
    %796 = vmatprep.mubr.f32.mxu0 0.0
    %797 = vmatmul.mubr.f32.gmra.mxu0 %v665
    %v798 = vpop.f32.mrf.mxu0
    %v799 = vadd.f32 0.0, %v798
    %v800 = vpop.f32.mrf.mxu0
    %801 = vmatprep.mubr.f32.mxu0 0.0
    %802 = vmatmul.mubr.f32.gmra.mxu0 %v668
    %v803 = vpop.f32.mrf.mxu0
    %v804 = vadd.f32 0.0, %v803
    %v805 = vpop.f32.mrf.mxu0
    %806 = vmatprep.mubr.f32.mxu0 0.0
    %807 = vmatmul.mubr.f32.gmra.mxu0 %v671
    %v808 = vpop.f32.mrf.mxu0
    %v809 = vadd.f32 0.0, %v808
    %v810 = vpop.f32.mrf.mxu0
    %811 = vmatprep.mubr.f32.mxu0 0.0
    %812 = vmatmul.mubr.f32.gmra.mxu0 %v674
    %v813 = vpop.f32.mrf.mxu0
    %v814 = vadd.f32 0.0, %v813
    %v815 = vpop.f32.mrf.mxu0
    %816 = vmatprep.mubr.f32.mxu0 0.0
    %817 = vmatmul.mubr.f32.gmra.mxu0 %v677
    %v818 = vpop.f32.mrf.mxu0
    %v819 = vadd.f32 0.0, %v818
    %v820 = vpop.f32.mrf.mxu0
    %821 = vmatprep.mubr.f32.mxu0 0.0
    %822 = vmatmul.mubr.f32.gmra.mxu0 %v680
    %v823 = vpop.f32.mrf.mxu0
    %v824 = vadd.f32 0.0, %v823
    %v825 = vpop.f32.mrf.mxu0
    %826 = vdwg.mxu0
    %v828 = vsel %vm633, %v601, 0
    %v831 = vsel %vm633, %v602, 0
    %v834 = vsel %vm633, %v603, 0
    %v837 = vsel %vm633, %v604, 0
    %v840 = vsel %vm633, %v605, 0
    %v843 = vsel %vm633, %v606, 0
    %v846 = vsel %vm633, %v607, 0
    %v849 = vsel %vm633, %v608, 0
    %v852 = vsel %vm633, %v609, 0
    %v855 = vsel %vm633, %v610, 0
    %v858 = vsel %vm633, %v611, 0
    %v861 = vsel %vm633, %v612, 0
    %v864 = vsel %vm633, %v613, 0
    %v867 = vsel %vm633, %v614, 0
    %v870 = vsel %vm633, %v615, 0
    %v873 = vsel %vm633, %v616, 0
    %875 = vmatprep.subr.mxu0 0.0
    %876 = vmatpush1.msra.mxu0 0.0
    %877 = vmatprep.subr.mxu0 0.0
    %878 = vmatpush1.msra.mxu0 0.0
    %879 = vmatprep.subr.mxu0 0.0
    %880 = vmatpush1.msra.mxu0 0.0
    %881 = vmatprep.subr.mxu0 0.0
    %882 = vmatpush1.msra.mxu0 0.0
    %883 = vmatprep.subr.mxu0 0.0
    %884 = vmatpush1.msra.mxu0 0.0
    %885 = vmatprep.subr.mxu0 0.0
    %886 = vmatpush1.msra.mxu0 0.0
    %887 = vmatprep.subr.mxu0 0.0
    %888 = vmatpush1.msra.mxu0 0.0
    %889 = vmatprep.subr.mxu0 0.0
    %890 = vmatpush1.msra.mxu0 0.0
    %891 = vmatprep.subr.mxu0 0.0
    %892 = vmatpush1.msra.mxu0 %v96
    %893 = vmatprep.subr.mxu0 0.0
    %894 = vmatpush1.msra.mxu0 %v95
    %895 = vmatprep.subr.mxu0 0.0
    %896 = vmatpush1.msra.mxu0 %v94
    %897 = vmatprep.subr.mxu0 0.0
    %898 = vmatpush1.msra.mxu0 %v93
    %899 = vmatprep.subr.mxu0 0.0
    %900 = vmatpush1.msra.mxu0 %v92
    %901 = vmatprep.subr.mxu0 0.0
    %902 = vmatpush1.msra.mxu0 %v91
    %903 = vmatprep.subr.mxu0 0.0
    %904 = vmatpush1.msra.mxu0 %v90
    %905 = vmatprep.subr.mxu0 0.0
    %906 = vmatpush1.msra.mxu0 %v89
    %907 = vmatprep.subr.mxu0 0.0
    %908 = vmatpush2.msra.mxu0 0.0
    %909 = vmatprep.subr.mxu0 0.0
    %910 = vmatpush2.msra.mxu0 0.0
    %911 = vmatprep.subr.mxu0 0.0
    %912 = vmatpush2.msra.mxu0 0.0
    %913 = vmatprep.subr.mxu0 0.0
    %914 = vmatpush2.msra.mxu0 0.0
    %915 = vmatprep.subr.mxu0 0.0
    %916 = vmatpush2.msra.mxu0 0.0
    %917 = vmatprep.subr.mxu0 0.0
    %918 = vmatpush2.msra.mxu0 0.0
    %919 = vmatprep.subr.mxu0 0.0
    %920 = vmatpush2.msra.mxu0 0.0
    %921 = vmatprep.subr.mxu0 0.0
    %922 = vmatpush2.msra.mxu0 0.0
    %923 = vmatprep.subr.mxu0 0.0
    %924 = vmatpush2.msra.mxu0 0.0
    %925 = vmatprep.subr.mxu0 0.0
    %926 = vmatpush2.msra.mxu0 0.0
    %927 = vmatprep.subr.mxu0 0.0
    %928 = vmatpush2.msra.mxu0 0.0
    %929 = vmatprep.subr.mxu0 0.0
    %930 = vmatpush2.msra.mxu0 0.0
    %931 = vmatprep.subr.mxu0 0.0
    %932 = vmatpush2.msra.mxu0 0.0
    %933 = vmatprep.subr.mxu0 0.0
    %934 = vmatpush2.msra.mxu0 0.0
    %935 = vmatprep.subr.mxu0 0.0
    %936 = vmatpush2.msra.mxu0 0.0
    %937 = vmatprep.subr.mxu0 0.0
    %938 = vmatpush2.msra.mxu0 0.0
    %939 = vmatprep.mubr.f32.mxu0 0.0
    %940 = vmatmul.mubr.f32.gmra.mxu0 %v828
    %v941 = vpop.f32.mrf.mxu0
    %v942 = vadd.f32 %v749, %v941
    %v943 = vpop.f32.mrf.mxu0
    %944 = vmatprep.mubr.f32.mxu0 0.0
    %945 = vmatmul.mubr.f32.gmra.mxu0 %v831
    %v946 = vpop.f32.mrf.mxu0
    %v947 = vadd.f32 %v754, %v946
    %v948 = vpop.f32.mrf.mxu0
    %949 = vmatprep.mubr.f32.mxu0 0.0
    %950 = vmatmul.mubr.f32.gmra.mxu0 %v834
    %v951 = vpop.f32.mrf.mxu0
    %v952 = vadd.f32 %v759, %v951
    %v953 = vpop.f32.mrf.mxu0
    %954 = vmatprep.mubr.f32.mxu0 0.0
    %955 = vmatmul.mubr.f32.gmra.mxu0 %v837
    %v956 = vpop.f32.mrf.mxu0
    %v957 = vadd.f32 %v764, %v956
    %v958 = vpop.f32.mrf.mxu0
    %959 = vmatprep.mubr.f32.mxu0 0.0
    %960 = vmatmul.mubr.f32.gmra.mxu0 %v840
    %v961 = vpop.f32.mrf.mxu0
    %v962 = vadd.f32 %v769, %v961
    %v963 = vpop.f32.mrf.mxu0
    %964 = vmatprep.mubr.f32.mxu0 0.0
    %965 = vmatmul.mubr.f32.gmra.mxu0 %v843
    %v966 = vpop.f32.mrf.mxu0
    %v967 = vadd.f32 %v774, %v966
    %v968 = vpop.f32.mrf.mxu0
    %969 = vmatprep.mubr.f32.mxu0 0.0
    %970 = vmatmul.mubr.f32.gmra.mxu0 %v846
    %v971 = vpop.f32.mrf.mxu0
    %v972 = vadd.f32 %v779, %v971
    %v973 = vpop.f32.mrf.mxu0
    %974 = vmatprep.mubr.f32.mxu0 0.0
    %975 = vmatmul.mubr.f32.gmra.mxu0 %v849
    %v976 = vpop.f32.mrf.mxu0
    %v977 = vadd.f32 %v784, %v976
    %v978 = vpop.f32.mrf.mxu0
    %979 = vmatprep.mubr.f32.mxu0 0.0
    %980 = vmatmul.mubr.f32.gmra.mxu0 %v852
    %v981 = vpop.f32.mrf.mxu0
    %v982 = vadd.f32 %v789, %v981
    %v983 = vpop.f32.mrf.mxu0
    %984 = vmatprep.mubr.f32.mxu0 0.0
    %985 = vmatmul.mubr.f32.gmra.mxu0 %v855
    %v986 = vpop.f32.mrf.mxu0
    %v987 = vadd.f32 %v794, %v986
    %v988 = vpop.f32.mrf.mxu0
    %989 = vmatprep.mubr.f32.mxu0 0.0
    %990 = vmatmul.mubr.f32.gmra.mxu0 %v858
    %v991 = vpop.f32.mrf.mxu0
    %v992 = vadd.f32 %v799, %v991
    %v993 = vpop.f32.mrf.mxu0
    %994 = vmatprep.mubr.f32.mxu0 0.0
    %995 = vmatmul.mubr.f32.gmra.mxu0 %v861
    %v996 = vpop.f32.mrf.mxu0
    %v997 = vadd.f32 %v804, %v996
    %v998 = vpop.f32.mrf.mxu0
    %999 = vmatprep.mubr.f32.mxu0 0.0
    %1000 = vmatmul.mubr.f32.gmra.mxu0 %v864
    %v1001 = vpop.f32.mrf.mxu0
    %v1002 = vadd.f32 %v809, %v1001
    %v1003 = vpop.f32.mrf.mxu0
    %1004 = vmatprep.mubr.f32.mxu0 0.0
    %1005 = vmatmul.mubr.f32.gmra.mxu0 %v867
    %v1006 = vpop.f32.mrf.mxu0
    %v1007 = vadd.f32 %v814, %v1006
    %v1008 = vpop.f32.mrf.mxu0
    %1009 = vmatprep.mubr.f32.mxu0 0.0
    %1010 = vmatmul.mubr.f32.gmra.mxu0 %v870
    %v1011 = vpop.f32.mrf.mxu0
    %v1012 = vadd.f32 %v819, %v1011
    %v1013 = vpop.f32.mrf.mxu0
    %1014 = vmatprep.mubr.f32.mxu0 0.0
    %1015 = vmatmul.mubr.f32.gmra.mxu0 %v873
    %v1016 = vpop.f32.mrf.mxu0
    %v1017 = vadd.f32 %v824, %v1016
    %v1018 = vpop.f32.mrf.mxu0
    %1019 = vdwg.mxu0
    %v1021 = vlaneseq
    %v1022 = vshrl.u32 %v1021, 7
    %v1023 = vsub.s32 0, %v1022
    %v1024 = vrot.slane %v105, %v1023
    %v1026 = vadd.f32 %v942, %v1024
    %v1027 = vadd.f32 %v947, %v1024
    %v1028 = vadd.f32 %v952, %v1024
    %v1029 = vadd.f32 %v957, %v1024
    %v1030 = vadd.f32 %v962, %v1024
    %v1031 = vadd.f32 %v967, %v1024
    %v1032 = vadd.f32 %v972, %v1024
    %v1033 = vadd.f32 %v977, %v1024
    %v1034 = vadd.f32 %v982, %v1024
    %v1035 = vadd.f32 %v987, %v1024
    %v1036 = vadd.f32 %v992, %v1024
    %v1037 = vadd.f32 %v997, %v1024
    %v1038 = vadd.f32 %v1002, %v1024
    %v1039 = vadd.f32 %v1007, %v1024
    %v1040 = vadd.f32 %v1012, %v1024
    %v1041 = vadd.f32 %v1017, %v1024
    %v1042 = vmax.f32 %v1026, 0.0
    %v1043 = vmax.f32 %v1027, 0.0
    %v1044 = vmax.f32 %v1028, 0.0
    %v1045 = vmax.f32 %v1029, 0.0
    %v1046 = vmax.f32 %v1030, 0.0
    %v1047 = vmax.f32 %v1031, 0.0
    %v1048 = vmax.f32 %v1032, 0.0
    %v1049 = vmax.f32 %v1033, 0.0
    %v1050 = vmax.f32 %v1034, 0.0
    %v1051 = vmax.f32 %v1035, 0.0
    %v1052 = vmax.f32 %v1036, 0.0
    %v1053 = vmax.f32 %v1037, 0.0
    %v1054 = vmax.f32 %v1038, 0.0
    %v1055 = vmax.f32 %v1039, 0.0
    %v1056 = vmax.f32 %v1040, 0.0
    %v1057 = vmax.f32 %v1041, 0.0
    %v1058 = vstv %s107
    %v1060 = vsel %vm633, %v106, 0
    %v1063 = vsel %vm633, %v1042, 0
    %v1066 = vsel %vm633, %v1043, 0
    %v1069 = vsel %vm633, %v1044, 0
    %v1072 = vsel %vm633, %v1045, 0
    %v1075 = vsel %vm633, %v1046, 0
    %v1078 = vsel %vm633, %v1047, 0
    %v1081 = vsel %vm633, %v1048, 0
    %v1084 = vsel %vm633, %v1049, 0
    %v1087 = vsel %vm633, %v1050, 0
    %v1090 = vsel %vm633, %v1051, 0
    %v1093 = vsel %vm633, %v1052, 0
    %v1096 = vsel %vm633, %v1053, 0
    %v1099 = vsel %vm633, %v1054, 0
    %v1102 = vsel %vm633, %v1055, 0
    %v1105 = vsel %vm633, %v1056, 0
    %v1108 = vsel %vm633, %v1057, 0
    %1110 = vmatprep.subr.mxu0 0.0
    %1111 = vmatpush1.xpose.msra.mxu0 %v1108
    %1112 = vmatprep.subr.mxu0 0.0
    %1113 = vmatpush1.xpose.msra.mxu0 %v1105
    %1114 = vmatprep.subr.mxu0 0.0
    %1115 = vmatpush1.xpose.msra.mxu0 %v1102
    %1116 = vmatprep.subr.mxu0 0.0
    %1117 = vmatpush1.xpose.msra.mxu0 %v1099
    %1118 = vmatprep.subr.mxu0 0.0
    %1119 = vmatpush1.xpose.msra.mxu0 %v1096
    %1120 = vmatprep.subr.mxu0 0.0
    %1121 = vmatpush1.xpose.msra.mxu0 %v1093
    %1122 = vmatprep.subr.mxu0 0.0
    %1123 = vmatpush1.xpose.msra.mxu0 %v1090
    %1124 = vmatprep.subr.mxu0 0.0
    %1125 = vmatpush1.xpose.msra.mxu0 %v1087
    %1126 = vmatprep.subr.mxu0 0.0
    %1127 = vmatpush1.xpose.msra.mxu0 %v1084
    %1128 = vmatprep.subr.mxu0 0.0
    %1129 = vmatpush1.xpose.msra.mxu0 %v1081
    %1130 = vmatprep.subr.mxu0 0.0
    %1131 = vmatpush1.xpose.msra.mxu0 %v1078
    %1132 = vmatprep.subr.mxu0 0.0
    %1133 = vmatpush1.xpose.msra.mxu0 %v1075
    %1134 = vmatprep.subr.mxu0 0.0
    %1135 = vmatpush1.xpose.msra.mxu0 %v1072
    %1136 = vmatprep.subr.mxu0 0.0
    %1137 = vmatpush1.xpose.msra.mxu0 %v1069
    %1138 = vmatprep.subr.mxu0 0.0
    %1139 = vmatpush1.xpose.msra.mxu0 %v1066
    %1140 = vmatprep.subr.mxu0 0.0
    %1141 = vmatpush1.xpose.msra.mxu0 %v1063
    %1142 = vmatprep.subr.mxu0 0.0
    %1143 = vmatpush2.xpose.msra.mxu0 0.0
    %1144 = vmatprep.subr.mxu0 0.0
    %1145 = vmatpush2.xpose.msra.mxu0 0.0
    %1146 = vmatprep.subr.mxu0 0.0
    %1147 = vmatpush2.xpose.msra.mxu0 0.0
    %1148 = vmatprep.subr.mxu0 0.0
    %1149 = vmatpush2.xpose.msra.mxu0 0.0
    %1150 = vmatprep.subr.mxu0 0.0
    %1151 = vmatpush2.xpose.msra.mxu0 0.0
    %1152 = vmatprep.subr.mxu0 0.0
    %1153 = vmatpush2.xpose.msra.mxu0 0.0
    %1154 = vmatprep.subr.mxu0 0.0
    %1155 = vmatpush2.xpose.msra.mxu0 0.0
    %1156 = vmatprep.subr.mxu0 0.0
    %1157 = vmatpush2.xpose.msra.mxu0 0.0
    %1158 = vmatprep.subr.mxu0 0.0
    %1159 = vmatpush2.xpose.msra.mxu0 0.0
    %1160 = vmatprep.subr.mxu0 0.0
    %1161 = vmatpush2.xpose.msra.mxu0 0.0
    %1162 = vmatprep.subr.mxu0 0.0
    %1163 = vmatpush2.xpose.msra.mxu0 0.0
    %1164 = vmatprep.subr.mxu0 0.0
    %1165 = vmatpush2.xpose.msra.mxu0 0.0
    %1166 = vmatprep.subr.mxu0 0.0
    %1167 = vmatpush2.xpose.msra.mxu0 0.0
    %1168 = vmatprep.subr.mxu0 0.0
    %1169 = vmatpush2.xpose.msra.mxu0 0.0
    %1170 = vmatprep.subr.mxu0 0.0
    %1171 = vmatpush2.xpose.msra.mxu0 0.0
    %1172 = vmatprep.subr.mxu0 0.0
    %1173 = vmatpush2.xpose.msra.mxu0 0.0
    %1174 = vmatprep.mubr.f32.mxu0 0.0
    %1175 = vmatmul.mubr.f32.gmra.mxu0 %v1060
    %v1176 = vpop.f32.mrf.mxu0
    %v1177 = vadd.f32 %v1058, %v1176
    %v1178 = vpop.f32.mrf.mxu0
    %1179 = vdwg.mxu0
    %1180 = vst [vmem:[#allocation11] sm:$0x1] %v1177
    %v1181 = vlaneseq
    %v1182 = vshrl.u32 %v1181, 7
    %v1183 = vsub.s32 1, %v1182
    %v1184 = vrot.slane %v108, %v1183
    %vm1185 = vcmp.eq.s32.totalorder %v112, %v1184
    %vm1186 = vcmp.eq.s32.totalorder %v113, %v1184
    %vm1187 = vcmp.eq.s32.totalorder %v114, %v1184
    %vm1188 = vcmp.eq.s32.totalorder %v115, %v1184
    %vm1189 = vcmp.eq.s32.totalorder %v116, %v1184
    %vm1190 = vcmp.eq.s32.totalorder %v117, %v1184
    %v1191 = vsel %vm1185, 1.0, 0.0
    %v1192 = vsel %vm1186, 1.0, 0.0
    %v1193 = vsel %vm1187, 1.0, 0.0
    %v1194 = vsel %vm1188, 1.0, 0.0
    %v1195 = vsel %vm1189, 1.0, 0.0
    %v1196 = vsel %vm1190, 1.0, 0.0
    %v1197 = vlaneseq
    %v1198 = vshrl.u32 %v1197, 7
    %v1199 = vsub.s32 1, %v1198
    %v1200 = vrot.slane %v110, %v1199
    %vm1201 = vcmp.eq.s32.totalorder %v112, %v1200
    %vm1202 = vcmp.eq.s32.totalorder %v113, %v1200
    %vm1203 = vcmp.eq.s32.totalorder %v114, %v1200
    %vm1204 = vcmp.eq.s32.totalorder %v115, %v1200
    %vm1205 = vcmp.eq.s32.totalorder %v116, %v1200
    %vm1206 = vcmp.eq.s32.totalorder %v117, %v1200
    %v1207 = vsel %vm1201, 1.0, 0.0
    %v1208 = vsel %vm1202, 1.0, 0.0
    %v1209 = vsel %vm1203, 1.0, 0.0
    %v1210 = vsel %vm1204, 1.0, 0.0
    %v1211 = vsel %vm1205, 1.0, 0.0
    %v1212 = vsel %vm1206, 1.0, 0.0
    %1213 = vxpose.xlu0.b32.start [1/16] %v1191, 128
    %1214 = vxpose.xlu0.b32.cont [2/16] %v1192, 128
    %1215 = vxpose.xlu0.b32.cont [3/16] %v1193, 128
    %1216 = vxpose.xlu0.b32.cont [4/16] %v1194, 128
    %1217 = vxpose.xlu0.b32.cont [5/16] %v1195, 128
    %1218 = vxpose.xlu0.b32.cont [6/16] %v1196, 128
    %1219 = vxpose.xlu0.b32.cont [7/16] 0.0, 128
    %1220 = vxpose.xlu0.b32.cont [8/16] 0.0, 128
    %1221 = vxpose.xlu0.b32.cont [9/16] 0.0, 128
    %1222 = vxpose.xlu0.b32.cont [10/16] 0.0, 128
    %1223 = vxpose.xlu0.b32.cont [11/16] 0.0, 128
    %1224 = vxpose.xlu0.b32.cont [12/16] 0.0, 128
    %1225 = vxpose.xlu0.b32.cont [13/16] 0.0, 128
    %1226 = vxpose.xlu0.b32.cont [14/16] 0.0, 128
    %1227 = vxpose.xlu0.b32.cont [15/16] 0.0, 128
    %1228 = vxpose.xlu0.b32.end [16/16] 0.0, 128
    %v1229 = vpop.trf.xlu0
    %v1230 = vpop.trf.xlu0
    %v1231 = vpop.trf.xlu0
    %v1232 = vpop.trf.xlu0
    %v1233 = vpop.trf.xlu0
    %v1234 = vpop.trf.xlu0
    %v1235 = vpop.trf.xlu0
    %v1236 = vpop.trf.xlu0
    %v1237 = vpop.trf.xlu0
    %v1238 = vpop.trf.xlu0
    %v1239 = vpop.trf.xlu0
    %v1240 = vpop.trf.xlu0
    %v1241 = vpop.trf.xlu0
    %v1242 = vpop.trf.xlu0
    %v1243 = vpop.trf.xlu0
    %v1244 = vpop.trf.xlu0
    %v1246 = vsel %vm182, %v1229, 0
    %v1249 = vsel %vm182, %v1230, 0
    %v1252 = vsel %vm182, %v1231, 0
    %v1255 = vsel %vm182, %v1232, 0
    %v1258 = vsel %vm182, %v1233, 0
    %v1261 = vsel %vm182, %v1234, 0
    %v1264 = vsel %vm182, %v1235, 0
    %v1267 = vsel %vm182, %v1236, 0
    %v1270 = vsel %vm182, %v1237, 0
    %v1273 = vsel %vm182, %v1238, 0
    %v1276 = vsel %vm182, %v1239, 0
    %v1279 = vsel %vm182, %v1240, 0
    %v1282 = vsel %vm182, %v1241, 0
    %v1285 = vsel %vm182, %v1242, 0
    %v1288 = vsel %vm182, %v1243, 0
    %v1291 = vsel %vm182, %v1244, 0
    %1293 = vmatprep.subr.mxu0 0.0
    %1294 = vmatpush1.msra.mxu0 0.0
    %1295 = vmatprep.subr.mxu0 0.0
    %1296 = vmatpush1.msra.mxu0 0.0
    %1297 = vmatprep.subr.mxu0 0.0
    %1298 = vmatpush1.msra.mxu0 0.0
    %1299 = vmatprep.subr.mxu0 0.0
    %1300 = vmatpush1.msra.mxu0 0.0
    %1301 = vmatprep.subr.mxu0 0.0
    %1302 = vmatpush1.msra.mxu0 0.0
    %1303 = vmatprep.subr.mxu0 0.0
    %1304 = vmatpush1.msra.mxu0 0.0
    %1305 = vmatprep.subr.mxu0 0.0
    %1306 = vmatpush1.msra.mxu0 0.0
    %1307 = vmatprep.subr.mxu0 0.0
    %1308 = vmatpush1.msra.mxu0 0.0
    %1309 = vmatprep.subr.mxu0 0.0
    %1310 = vmatpush1.msra.mxu0 0.0
    %1311 = vmatprep.subr.mxu0 0.0
    %1312 = vmatpush1.msra.mxu0 0.0
    %1313 = vmatprep.subr.mxu0 0.0
    %1314 = vmatpush1.msra.mxu0 %v88
    %1315 = vmatprep.subr.mxu0 0.0
    %1316 = vmatpush1.msra.mxu0 %v87
    %1317 = vmatprep.subr.mxu0 0.0
    %1318 = vmatpush1.msra.mxu0 %v86
    %1319 = vmatprep.subr.mxu0 0.0
    %1320 = vmatpush1.msra.mxu0 %v85
    %1321 = vmatprep.subr.mxu0 0.0
    %1322 = vmatpush1.msra.mxu0 %v84
    %1323 = vmatprep.subr.mxu0 0.0
    %1324 = vmatpush1.msra.mxu0 %v83
    %1325 = vmatprep.subr.mxu0 0.0
    %1326 = vmatpush2.msra.mxu0 0.0
    %1327 = vmatprep.subr.mxu0 0.0
    %1328 = vmatpush2.msra.mxu0 0.0
    %1329 = vmatprep.subr.mxu0 0.0
    %1330 = vmatpush2.msra.mxu0 0.0
    %1331 = vmatprep.subr.mxu0 0.0
    %1332 = vmatpush2.msra.mxu0 0.0
    %1333 = vmatprep.subr.mxu0 0.0
    %1334 = vmatpush2.msra.mxu0 0.0
    %1335 = vmatprep.subr.mxu0 0.0
    %1336 = vmatpush2.msra.mxu0 0.0
    %1337 = vmatprep.subr.mxu0 0.0
    %1338 = vmatpush2.msra.mxu0 0.0
    %1339 = vmatprep.subr.mxu0 0.0
    %1340 = vmatpush2.msra.mxu0 0.0
    %1341 = vmatprep.subr.mxu0 0.0
    %1342 = vmatpush2.msra.mxu0 0.0
    %1343 = vmatprep.subr.mxu0 0.0
    %1344 = vmatpush2.msra.mxu0 0.0
    %1345 = vmatprep.subr.mxu0 0.0
    %1346 = vmatpush2.msra.mxu0 0.0
    %1347 = vmatprep.subr.mxu0 0.0
    %1348 = vmatpush2.msra.mxu0 0.0
    %1349 = vmatprep.subr.mxu0 0.0
    %1350 = vmatpush2.msra.mxu0 0.0
    %1351 = vmatprep.subr.mxu0 0.0
    %1352 = vmatpush2.msra.mxu0 0.0
    %1353 = vmatprep.subr.mxu0 0.0
    %1354 = vmatpush2.msra.mxu0 0.0
    %1355 = vmatprep.subr.mxu0 0.0
    %1356 = vmatpush2.msra.mxu0 0.0
    %1357 = vmatprep.mubr.f32.mxu0 0.0
    %1358 = vmatmul.mubr.f32.gmra.mxu0 %v1246
    %v1359 = vpop.f32.mrf.mxu0
    %v1360 = vadd.f32 0.0, %v1359
    %v1361 = vpop.f32.mrf.mxu0
    %1362 = vmatprep.mubr.f32.mxu0 0.0
    %1363 = vmatmul.mubr.f32.gmra.mxu0 %v1249
    %v1364 = vpop.f32.mrf.mxu0
    %v1365 = vadd.f32 0.0, %v1364
    %v1366 = vpop.f32.mrf.mxu0
    %1367 = vmatprep.mubr.f32.mxu0 0.0
    %1368 = vmatmul.mubr.f32.gmra.mxu0 %v1252
    %v1369 = vpop.f32.mrf.mxu0
    %v1370 = vadd.f32 0.0, %v1369
    %v1371 = vpop.f32.mrf.mxu0
    %1372 = vmatprep.mubr.f32.mxu0 0.0
    %1373 = vmatmul.mubr.f32.gmra.mxu0 %v1255
    %v1374 = vpop.f32.mrf.mxu0
    %v1375 = vadd.f32 0.0, %v1374
    %v1376 = vpop.f32.mrf.mxu0
    %1377 = vmatprep.mubr.f32.mxu0 0.0
    %1378 = vmatmul.mubr.f32.gmra.mxu0 %v1258
    %v1379 = vpop.f32.mrf.mxu0
    %v1380 = vadd.f32 0.0, %v1379
    %v1381 = vpop.f32.mrf.mxu0
    %1382 = vmatprep.mubr.f32.mxu0 0.0
    %1383 = vmatmul.mubr.f32.gmra.mxu0 %v1261
    %v1384 = vpop.f32.mrf.mxu0
    %v1385 = vadd.f32 0.0, %v1384
    %v1386 = vpop.f32.mrf.mxu0
    %1387 = vmatprep.mubr.f32.mxu0 0.0
    %1388 = vmatmul.mubr.f32.gmra.mxu0 %v1264
    %v1389 = vpop.f32.mrf.mxu0
    %v1390 = vadd.f32 0.0, %v1389
    %v1391 = vpop.f32.mrf.mxu0
    %1392 = vmatprep.mubr.f32.mxu0 0.0
    %1393 = vmatmul.mubr.f32.gmra.mxu0 %v1267
    %v1394 = vpop.f32.mrf.mxu0
    %v1395 = vadd.f32 0.0, %v1394
    %v1396 = vpop.f32.mrf.mxu0
    %1397 = vmatprep.mubr.f32.mxu0 0.0
    %1398 = vmatmul.mubr.f32.gmra.mxu0 %v1270
    %v1399 = vpop.f32.mrf.mxu0
    %v1400 = vadd.f32 0.0, %v1399
    %v1401 = vpop.f32.mrf.mxu0
    %1402 = vmatprep.mubr.f32.mxu0 0.0
    %1403 = vmatmul.mubr.f32.gmra.mxu0 %v1273
    %v1404 = vpop.f32.mrf.mxu0
    %v1405 = vadd.f32 0.0, %v1404
    %v1406 = vpop.f32.mrf.mxu0
    %1407 = vmatprep.mubr.f32.mxu0 0.0
    %1408 = vmatmul.mubr.f32.gmra.mxu0 %v1276
    %v1409 = vpop.f32.mrf.mxu0
    %v1410 = vadd.f32 0.0, %v1409
    %v1411 = vpop.f32.mrf.mxu0
    %1412 = vmatprep.mubr.f32.mxu0 0.0
    %1413 = vmatmul.mubr.f32.gmra.mxu0 %v1279
    %v1414 = vpop.f32.mrf.mxu0
    %v1415 = vadd.f32 0.0, %v1414
    %v1416 = vpop.f32.mrf.mxu0
    %1417 = vmatprep.mubr.f32.mxu0 0.0
    %1418 = vmatmul.mubr.f32.gmra.mxu0 %v1282
    %v1419 = vpop.f32.mrf.mxu0
    %v1420 = vadd.f32 0.0, %v1419
    %v1421 = vpop.f32.mrf.mxu0
    %1422 = vmatprep.mubr.f32.mxu0 0.0
    %1423 = vmatmul.mubr.f32.gmra.mxu0 %v1285
    %v1424 = vpop.f32.mrf.mxu0
    %v1425 = vadd.f32 0.0, %v1424
    %v1426 = vpop.f32.mrf.mxu0
    %1427 = vmatprep.mubr.f32.mxu0 0.0
    %1428 = vmatmul.mubr.f32.gmra.mxu0 %v1288
    %v1429 = vpop.f32.mrf.mxu0
    %v1430 = vadd.f32 0.0, %v1429
    %v1431 = vpop.f32.mrf.mxu0
    %1432 = vmatprep.mubr.f32.mxu0 0.0
    %1433 = vmatmul.mubr.f32.gmra.mxu0 %v1291
    %v1434 = vpop.f32.mrf.mxu0
    %v1435 = vadd.f32 0.0, %v1434
    %v1436 = vpop.f32.mrf.mxu0
    %1437 = vdwg.mxu0
    %1438 = vxpose.xlu0.b32.start [1/16] %v1207, 128
    %1439 = vxpose.xlu0.b32.cont [2/16] %v1208, 128
    %1440 = vxpose.xlu0.b32.cont [3/16] %v1209, 128
    %1441 = vxpose.xlu0.b32.cont [4/16] %v1210, 128
    %1442 = vxpose.xlu0.b32.cont [5/16] %v1211, 128
    %1443 = vxpose.xlu0.b32.cont [6/16] %v1212, 128
    %1444 = vxpose.xlu0.b32.cont [7/16] 0.0, 128
    %1445 = vxpose.xlu0.b32.cont [8/16] 0.0, 128
    %1446 = vxpose.xlu0.b32.cont [9/16] 0.0, 128
    %1447 = vxpose.xlu0.b32.cont [10/16] 0.0, 128
    %1448 = vxpose.xlu0.b32.cont [11/16] 0.0, 128
    %1449 = vxpose.xlu0.b32.cont [12/16] 0.0, 128
    %1450 = vxpose.xlu0.b32.cont [13/16] 0.0, 128
    %1451 = vxpose.xlu0.b32.cont [14/16] 0.0, 128
    %1452 = vxpose.xlu0.b32.cont [15/16] 0.0, 128
    %1453 = vxpose.xlu0.b32.end [16/16] 0.0, 128
    %v1454 = vpop.trf.xlu0
    %v1455 = vpop.trf.xlu0
    %v1456 = vpop.trf.xlu0
    %v1457 = vpop.trf.xlu0
    %v1458 = vpop.trf.xlu0
    %v1459 = vpop.trf.xlu0
    %v1460 = vpop.trf.xlu0
    %v1461 = vpop.trf.xlu0
    %v1462 = vpop.trf.xlu0
    %v1463 = vpop.trf.xlu0
    %v1464 = vpop.trf.xlu0
    %v1465 = vpop.trf.xlu0
    %v1466 = vpop.trf.xlu0
    %v1467 = vpop.trf.xlu0
    %v1468 = vpop.trf.xlu0
    %v1469 = vpop.trf.xlu0
    %v1471 = vsel %vm182, %v1454, 0
    %v1474 = vsel %vm182, %v1455, 0
    %v1477 = vsel %vm182, %v1456, 0
    %v1480 = vsel %vm182, %v1457, 0
    %v1483 = vsel %vm182, %v1458, 0
    %v1486 = vsel %vm182, %v1459, 0
    %v1489 = vsel %vm182, %v1460, 0
    %v1492 = vsel %vm182, %v1461, 0
    %v1495 = vsel %vm182, %v1462, 0
    %v1498 = vsel %vm182, %v1463, 0
    %v1501 = vsel %vm182, %v1464, 0
    %v1504 = vsel %vm182, %v1465, 0
    %v1507 = vsel %vm182, %v1466, 0
    %v1510 = vsel %vm182, %v1467, 0
    %v1513 = vsel %vm182, %v1468, 0
    %v1516 = vsel %vm182, %v1469, 0
    %1518 = vmatprep.subr.mxu0 0.0
    %1519 = vmatpush1.msra.mxu0 0.0
    %1520 = vmatprep.subr.mxu0 0.0
    %1521 = vmatpush1.msra.mxu0 0.0
    %1522 = vmatprep.subr.mxu0 0.0
    %1523 = vmatpush1.msra.mxu0 0.0
    %1524 = vmatprep.subr.mxu0 0.0
    %1525 = vmatpush1.msra.mxu0 0.0
    %1526 = vmatprep.subr.mxu0 0.0
    %1527 = vmatpush1.msra.mxu0 0.0
    %1528 = vmatprep.subr.mxu0 0.0
    %1529 = vmatpush1.msra.mxu0 0.0
    %1530 = vmatprep.subr.mxu0 0.0
    %1531 = vmatpush1.msra.mxu0 0.0
    %1532 = vmatprep.subr.mxu0 0.0
    %1533 = vmatpush1.msra.mxu0 0.0
    %1534 = vmatprep.subr.mxu0 0.0
    %1535 = vmatpush1.msra.mxu0 0.0
    %1536 = vmatprep.subr.mxu0 0.0
    %1537 = vmatpush1.msra.mxu0 0.0
    %1538 = vmatprep.subr.mxu0 0.0
    %1539 = vmatpush1.msra.mxu0 %v88
    %1540 = vmatprep.subr.mxu0 0.0
    %1541 = vmatpush1.msra.mxu0 %v87
    %1542 = vmatprep.subr.mxu0 0.0
    %1543 = vmatpush1.msra.mxu0 %v86
    %1544 = vmatprep.subr.mxu0 0.0
    %1545 = vmatpush1.msra.mxu0 %v85
    %1546 = vmatprep.subr.mxu0 0.0
    %1547 = vmatpush1.msra.mxu0 %v84
    %1548 = vmatprep.subr.mxu0 0.0
    %1549 = vmatpush1.msra.mxu0 %v83
    %1550 = vmatprep.subr.mxu0 0.0
    %1551 = vmatpush2.msra.mxu0 0.0
    %1552 = vmatprep.subr.mxu0 0.0
    %1553 = vmatpush2.msra.mxu0 0.0
    %1554 = vmatprep.subr.mxu0 0.0
    %1555 = vmatpush2.msra.mxu0 0.0
    %1556 = vmatprep.subr.mxu0 0.0
    %1557 = vmatpush2.msra.mxu0 0.0
    %1558 = vmatprep.subr.mxu0 0.0
    %1559 = vmatpush2.msra.mxu0 0.0
    %1560 = vmatprep.subr.mxu0 0.0
    %1561 = vmatpush2.msra.mxu0 0.0
    %1562 = vmatprep.subr.mxu0 0.0
    %1563 = vmatpush2.msra.mxu0 0.0
    %1564 = vmatprep.subr.mxu0 0.0
    %1565 = vmatpush2.msra.mxu0 0.0
    %1566 = vmatprep.subr.mxu0 0.0
    %1567 = vmatpush2.msra.mxu0 0.0
    %1568 = vmatprep.subr.mxu0 0.0
    %1569 = vmatpush2.msra.mxu0 0.0
    %1570 = vmatprep.subr.mxu0 0.0
    %1571 = vmatpush2.msra.mxu0 0.0
    %1572 = vmatprep.subr.mxu0 0.0
    %1573 = vmatpush2.msra.mxu0 0.0
    %1574 = vmatprep.subr.mxu0 0.0
    %1575 = vmatpush2.msra.mxu0 0.0
    %1576 = vmatprep.subr.mxu0 0.0
    %1577 = vmatpush2.msra.mxu0 0.0
    %1578 = vmatprep.subr.mxu0 0.0
    %1579 = vmatpush2.msra.mxu0 0.0
    %1580 = vmatprep.subr.mxu0 0.0
    %1581 = vmatpush2.msra.mxu0 0.0
    %1582 = vmatprep.mubr.f32.mxu0 0.0
    %1583 = vmatmul.mubr.f32.gmra.mxu0 %v1471
    %v1584 = vpop.f32.mrf.mxu0
    %v1585 = vadd.f32 0.0, %v1584
    %v1586 = vpop.f32.mrf.mxu0
    %1587 = vmatprep.mubr.f32.mxu0 0.0
    %1588 = vmatmul.mubr.f32.gmra.mxu0 %v1474
    %v1589 = vpop.f32.mrf.mxu0
    %v1590 = vadd.f32 0.0, %v1589
    %v1591 = vpop.f32.mrf.mxu0
    %1592 = vmatprep.mubr.f32.mxu0 0.0
    %1593 = vmatmul.mubr.f32.gmra.mxu0 %v1477
    %v1594 = vpop.f32.mrf.mxu0
    %v1595 = vadd.f32 0.0, %v1594
    %v1596 = vpop.f32.mrf.mxu0
    %1597 = vmatprep.mubr.f32.mxu0 0.0
    %1598 = vmatmul.mubr.f32.gmra.mxu0 %v1480
    %v1599 = vpop.f32.mrf.mxu0
    %v1600 = vadd.f32 0.0, %v1599
    %v1601 = vpop.f32.mrf.mxu0
    %1602 = vmatprep.mubr.f32.mxu0 0.0
    %1603 = vmatmul.mubr.f32.gmra.mxu0 %v1483
    %v1604 = vpop.f32.mrf.mxu0
    %v1605 = vadd.f32 0.0, %v1604
    %v1606 = vpop.f32.mrf.mxu0
    %1607 = vmatprep.mubr.f32.mxu0 0.0
    %1608 = vmatmul.mubr.f32.gmra.mxu0 %v1486
    %v1609 = vpop.f32.mrf.mxu0
    %v1610 = vadd.f32 0.0, %v1609
    %v1611 = vpop.f32.mrf.mxu0
    %1612 = vmatprep.mubr.f32.mxu0 0.0
    %1613 = vmatmul.mubr.f32.gmra.mxu0 %v1489
    %v1614 = vpop.f32.mrf.mxu0
    %v1615 = vadd.f32 0.0, %v1614
    %v1616 = vpop.f32.mrf.mxu0
    %1617 = vmatprep.mubr.f32.mxu0 0.0
    %1618 = vmatmul.mubr.f32.gmra.mxu0 %v1492
    %v1619 = vpop.f32.mrf.mxu0
    %v1620 = vadd.f32 0.0, %v1619
    %v1621 = vpop.f32.mrf.mxu0
    %1622 = vmatprep.mubr.f32.mxu0 0.0
    %1623 = vmatmul.mubr.f32.gmra.mxu0 %v1495
    %v1624 = vpop.f32.mrf.mxu0
    %v1625 = vadd.f32 0.0, %v1624
    %v1626 = vpop.f32.mrf.mxu0
    %1627 = vmatprep.mubr.f32.mxu0 0.0
    %1628 = vmatmul.mubr.f32.gmra.mxu0 %v1498
    %v1629 = vpop.f32.mrf.mxu0
    %v1630 = vadd.f32 0.0, %v1629
    %v1631 = vpop.f32.mrf.mxu0
    %1632 = vmatprep.mubr.f32.mxu0 0.0
    %1633 = vmatmul.mubr.f32.gmra.mxu0 %v1501
    %v1634 = vpop.f32.mrf.mxu0
    %v1635 = vadd.f32 0.0, %v1634
    %v1636 = vpop.f32.mrf.mxu0
    %1637 = vmatprep.mubr.f32.mxu0 0.0
    %1638 = vmatmul.mubr.f32.gmra.mxu0 %v1504
    %v1639 = vpop.f32.mrf.mxu0
    %v1640 = vadd.f32 0.0, %v1639
    %v1641 = vpop.f32.mrf.mxu0
    %1642 = vmatprep.mubr.f32.mxu0 0.0
    %1643 = vmatmul.mubr.f32.gmra.mxu0 %v1507
    %v1644 = vpop.f32.mrf.mxu0
    %v1645 = vadd.f32 0.0, %v1644
    %v1646 = vpop.f32.mrf.mxu0
    %1647 = vmatprep.mubr.f32.mxu0 0.0
    %1648 = vmatmul.mubr.f32.gmra.mxu0 %v1510
    %v1649 = vpop.f32.mrf.mxu0
    %v1650 = vadd.f32 0.0, %v1649
    %v1651 = vpop.f32.mrf.mxu0
    %1652 = vmatprep.mubr.f32.mxu0 0.0
    %1653 = vmatmul.mubr.f32.gmra.mxu0 %v1513
    %v1654 = vpop.f32.mrf.mxu0
    %v1655 = vadd.f32 0.0, %v1654
    %v1656 = vpop.f32.mrf.mxu0
    %1657 = vmatprep.mubr.f32.mxu0 0.0
    %1658 = vmatmul.mubr.f32.gmra.mxu0 %v1516
    %v1659 = vpop.f32.mrf.mxu0
    %v1660 = vadd.f32 0.0, %v1659
    %v1661 = vpop.f32.mrf.mxu0
    %1662 = vdwg.mxu0
    %v1663 = vmax.f32 %v1360, 0.0
    %v1664 = vmax.f32 %v1365, 0.0
    %v1665 = vmax.f32 %v1370, 0.0
    %v1666 = vmax.f32 %v1375, 0.0
    %v1667 = vmax.f32 %v1380, 0.0
    %v1668 = vmax.f32 %v1385, 0.0
    %v1669 = vmax.f32 %v1390, 0.0
    %v1670 = vmax.f32 %v1395, 0.0
    %v1671 = vmax.f32 %v1400, 0.0
    %v1672 = vmax.f32 %v1405, 0.0
    %v1673 = vmax.f32 %v1410, 0.0
    %v1674 = vmax.f32 %v1415, 0.0
    %v1675 = vmax.f32 %v1420, 0.0
    %v1676 = vmax.f32 %v1425, 0.0
    %v1677 = vmax.f32 %v1430, 0.0
    %v1678 = vmax.f32 %v1435, 0.0
    %v1679 = vmax.f32 %v1585, 0.0
    %v1680 = vmax.f32 %v1590, 0.0
    %v1681 = vmax.f32 %v1595, 0.0
    %v1682 = vmax.f32 %v1600, 0.0
    %v1683 = vmax.f32 %v1605, 0.0
    %v1684 = vmax.f32 %v1610, 0.0
    %v1685 = vmax.f32 %v1615, 0.0
    %v1686 = vmax.f32 %v1620, 0.0
    %v1687 = vmax.f32 %v1625, 0.0
    %v1688 = vmax.f32 %v1630, 0.0
    %v1689 = vmax.f32 %v1635, 0.0
    %v1690 = vmax.f32 %v1640, 0.0
    %v1691 = vmax.f32 %v1645, 0.0
    %v1692 = vmax.f32 %v1650, 0.0
    %v1693 = vmax.f32 %v1655, 0.0
    %v1694 = vmax.f32 %v1660, 0.0
    %v1696 = vsel %vm633, %v1679, 0
    %v1699 = vsel %vm633, %v1680, 0
    %v1702 = vsel %vm633, %v1681, 0
    %v1705 = vsel %vm633, %v1682, 0
    %v1708 = vsel %vm633, %v1683, 0
    %v1711 = vsel %vm633, %v1684, 0
    %v1714 = vsel %vm633, %v1685, 0
    %v1717 = vsel %vm633, %v1686, 0
    %v1720 = vsel %vm633, %v1687, 0
    %v1723 = vsel %vm633, %v1688, 0
    %v1726 = vsel %vm633, %v1689, 0
    %v1729 = vsel %vm633, %v1690, 0
    %v1732 = vsel %vm633, %v1691, 0
    %v1735 = vsel %vm633, %v1692, 0
    %v1738 = vsel %vm633, %v1693, 0
    %v1741 = vsel %vm633, %v1694, 0
    %1743 = vmatprep.subr.mxu0 0.0
    %1744 = vmatpush1.msra.mxu0 0.0
    %1745 = vmatprep.subr.mxu0 0.0
    %1746 = vmatpush1.msra.mxu0 0.0
    %1747 = vmatprep.subr.mxu0 0.0
    %1748 = vmatpush1.msra.mxu0 0.0
    %1749 = vmatprep.subr.mxu0 0.0
    %1750 = vmatpush1.msra.mxu0 0.0
    %1751 = vmatprep.subr.mxu0 0.0
    %1752 = vmatpush1.msra.mxu0 0.0
    %1753 = vmatprep.subr.mxu0 0.0
    %1754 = vmatpush1.msra.mxu0 0.0
    %1755 = vmatprep.subr.mxu0 0.0
    %1756 = vmatpush1.msra.mxu0 0.0
    %1757 = vmatprep.subr.mxu0 0.0
    %1758 = vmatpush1.msra.mxu0 0.0
    %1759 = vmatprep.subr.mxu0 0.0
    %1760 = vmatpush1.msra.mxu0 %v104
    %1761 = vmatprep.subr.mxu0 0.0
    %1762 = vmatpush1.msra.mxu0 %v103
    %1763 = vmatprep.subr.mxu0 0.0
    %1764 = vmatpush1.msra.mxu0 %v102
    %1765 = vmatprep.subr.mxu0 0.0
    %1766 = vmatpush1.msra.mxu0 %v101
    %1767 = vmatprep.subr.mxu0 0.0
    %1768 = vmatpush1.msra.mxu0 %v100
    %1769 = vmatprep.subr.mxu0 0.0
    %1770 = vmatpush1.msra.mxu0 %v99
    %1771 = vmatprep.subr.mxu0 0.0
    %1772 = vmatpush1.msra.mxu0 %v98
    %1773 = vmatprep.subr.mxu0 0.0
    %1774 = vmatpush1.msra.mxu0 %v97
    %1775 = vmatprep.subr.mxu0 0.0
    %1776 = vmatpush2.msra.mxu0 0.0
    %1777 = vmatprep.subr.mxu0 0.0
    %1778 = vmatpush2.msra.mxu0 0.0
    %1779 = vmatprep.subr.mxu0 0.0
    %1780 = vmatpush2.msra.mxu0 0.0
    %1781 = vmatprep.subr.mxu0 0.0
    %1782 = vmatpush2.msra.mxu0 0.0
    %1783 = vmatprep.subr.mxu0 0.0
    %1784 = vmatpush2.msra.mxu0 0.0
    %1785 = vmatprep.subr.mxu0 0.0
    %1786 = vmatpush2.msra.mxu0 0.0
    %1787 = vmatprep.subr.mxu0 0.0
    %1788 = vmatpush2.msra.mxu0 0.0
    %1789 = vmatprep.subr.mxu0 0.0
    %1790 = vmatpush2.msra.mxu0 0.0
    %1791 = vmatprep.subr.mxu0 0.0
    %1792 = vmatpush2.msra.mxu0 0.0
    %1793 = vmatprep.subr.mxu0 0.0
    %1794 = vmatpush2.msra.mxu0 0.0
    %1795 = vmatprep.subr.mxu0 0.0
    %1796 = vmatpush2.msra.mxu0 0.0
    %1797 = vmatprep.subr.mxu0 0.0
    %1798 = vmatpush2.msra.mxu0 0.0
    %1799 = vmatprep.subr.mxu0 0.0
    %1800 = vmatpush2.msra.mxu0 0.0
    %1801 = vmatprep.subr.mxu0 0.0
    %1802 = vmatpush2.msra.mxu0 0.0
    %1803 = vmatprep.subr.mxu0 0.0
    %1804 = vmatpush2.msra.mxu0 0.0
    %1805 = vmatprep.subr.mxu0 0.0
    %1806 = vmatpush2.msra.mxu0 0.0
    %1807 = vmatprep.mubr.f32.mxu0 0.0
    %1808 = vmatmul.mubr.f32.gmra.mxu0 %v1696
    %v1809 = vpop.f32.mrf.mxu0
    %v1810 = vadd.f32 0.0, %v1809
    %v1811 = vpop.f32.mrf.mxu0
    %1812 = vmatprep.mubr.f32.mxu0 0.0
    %1813 = vmatmul.mubr.f32.gmra.mxu0 %v1699
    %v1814 = vpop.f32.mrf.mxu0
    %v1815 = vadd.f32 0.0, %v1814
    %v1816 = vpop.f32.mrf.mxu0
    %1817 = vmatprep.mubr.f32.mxu0 0.0
    %1818 = vmatmul.mubr.f32.gmra.mxu0 %v1702
    %v1819 = vpop.f32.mrf.mxu0
    %v1820 = vadd.f32 0.0, %v1819
    %v1821 = vpop.f32.mrf.mxu0
    %1822 = vmatprep.mubr.f32.mxu0 0.0
    %1823 = vmatmul.mubr.f32.gmra.mxu0 %v1705
    %v1824 = vpop.f32.mrf.mxu0
    %v1825 = vadd.f32 0.0, %v1824
    %v1826 = vpop.f32.mrf.mxu0
    %1827 = vmatprep.mubr.f32.mxu0 0.0
    %1828 = vmatmul.mubr.f32.gmra.mxu0 %v1708
    %v1829 = vpop.f32.mrf.mxu0
    %v1830 = vadd.f32 0.0, %v1829
    %v1831 = vpop.f32.mrf.mxu0
    %1832 = vmatprep.mubr.f32.mxu0 0.0
    %1833 = vmatmul.mubr.f32.gmra.mxu0 %v1711
    %v1834 = vpop.f32.mrf.mxu0
    %v1835 = vadd.f32 0.0, %v1834
    %v1836 = vpop.f32.mrf.mxu0
    %1837 = vmatprep.mubr.f32.mxu0 0.0
    %1838 = vmatmul.mubr.f32.gmra.mxu0 %v1714
    %v1839 = vpop.f32.mrf.mxu0
    %v1840 = vadd.f32 0.0, %v1839
    %v1841 = vpop.f32.mrf.mxu0
    %1842 = vmatprep.mubr.f32.mxu0 0.0
    %1843 = vmatmul.mubr.f32.gmra.mxu0 %v1717
    %v1844 = vpop.f32.mrf.mxu0
    %v1845 = vadd.f32 0.0, %v1844
    %v1846 = vpop.f32.mrf.mxu0
    %1847 = vmatprep.mubr.f32.mxu0 0.0
    %1848 = vmatmul.mubr.f32.gmra.mxu0 %v1720
    %v1849 = vpop.f32.mrf.mxu0
    %v1850 = vadd.f32 0.0, %v1849
    %v1851 = vpop.f32.mrf.mxu0
    %1852 = vmatprep.mubr.f32.mxu0 0.0
    %1853 = vmatmul.mubr.f32.gmra.mxu0 %v1723
    %v1854 = vpop.f32.mrf.mxu0
    %v1855 = vadd.f32 0.0, %v1854
    %v1856 = vpop.f32.mrf.mxu0
    %1857 = vmatprep.mubr.f32.mxu0 0.0
    %1858 = vmatmul.mubr.f32.gmra.mxu0 %v1726
    %v1859 = vpop.f32.mrf.mxu0
    %v1860 = vadd.f32 0.0, %v1859
    %v1861 = vpop.f32.mrf.mxu0
    %1862 = vmatprep.mubr.f32.mxu0 0.0
    %1863 = vmatmul.mubr.f32.gmra.mxu0 %v1729
    %v1864 = vpop.f32.mrf.mxu0
    %v1865 = vadd.f32 0.0, %v1864
    %v1866 = vpop.f32.mrf.mxu0
    %1867 = vmatprep.mubr.f32.mxu0 0.0
    %1868 = vmatmul.mubr.f32.gmra.mxu0 %v1732
    %v1869 = vpop.f32.mrf.mxu0
    %v1870 = vadd.f32 0.0, %v1869
    %v1871 = vpop.f32.mrf.mxu0
    %1872 = vmatprep.mubr.f32.mxu0 0.0
    %1873 = vmatmul.mubr.f32.gmra.mxu0 %v1735
    %v1874 = vpop.f32.mrf.mxu0
    %v1875 = vadd.f32 0.0, %v1874
    %v1876 = vpop.f32.mrf.mxu0
    %1877 = vmatprep.mubr.f32.mxu0 0.0
    %1878 = vmatmul.mubr.f32.gmra.mxu0 %v1738
    %v1879 = vpop.f32.mrf.mxu0
    %v1880 = vadd.f32 0.0, %v1879
    %v1881 = vpop.f32.mrf.mxu0
    %1882 = vmatprep.mubr.f32.mxu0 0.0
    %1883 = vmatmul.mubr.f32.gmra.mxu0 %v1741
    %v1884 = vpop.f32.mrf.mxu0
    %v1885 = vadd.f32 0.0, %v1884
    %v1886 = vpop.f32.mrf.mxu0
    %1887 = vdwg.mxu0
    %v1889 = vsel %vm633, %v1663, 0
    %v1892 = vsel %vm633, %v1664, 0
    %v1895 = vsel %vm633, %v1665, 0
    %v1898 = vsel %vm633, %v1666, 0
    %v1901 = vsel %vm633, %v1667, 0
    %v1904 = vsel %vm633, %v1668, 0
    %v1907 = vsel %vm633, %v1669, 0
    %v1910 = vsel %vm633, %v1670, 0
    %v1913 = vsel %vm633, %v1671, 0
    %v1916 = vsel %vm633, %v1672, 0
    %v1919 = vsel %vm633, %v1673, 0
    %v1922 = vsel %vm633, %v1674, 0
    %v1925 = vsel %vm633, %v1675, 0
    %v1928 = vsel %vm633, %v1676, 0
    %v1931 = vsel %vm633, %v1677, 0
    %v1934 = vsel %vm633, %v1678, 0
    %1936 = vmatprep.subr.mxu0 0.0
    %1937 = vmatpush1.msra.mxu0 0.0
    %1938 = vmatprep.subr.mxu0 0.0
    %1939 = vmatpush1.msra.mxu0 0.0
    %1940 = vmatprep.subr.mxu0 0.0
    %1941 = vmatpush1.msra.mxu0 0.0
    %1942 = vmatprep.subr.mxu0 0.0
    %1943 = vmatpush1.msra.mxu0 0.0
    %1944 = vmatprep.subr.mxu0 0.0
    %1945 = vmatpush1.msra.mxu0 0.0
    %1946 = vmatprep.subr.mxu0 0.0
    %1947 = vmatpush1.msra.mxu0 0.0
    %1948 = vmatprep.subr.mxu0 0.0
    %1949 = vmatpush1.msra.mxu0 0.0
    %1950 = vmatprep.subr.mxu0 0.0
    %1951 = vmatpush1.msra.mxu0 0.0
    %1952 = vmatprep.subr.mxu0 0.0
    %1953 = vmatpush1.msra.mxu0 %v96
    %1954 = vmatprep.subr.mxu0 0.0
    %1955 = vmatpush1.msra.mxu0 %v95
    %1956 = vmatprep.subr.mxu0 0.0
    %1957 = vmatpush1.msra.mxu0 %v94
    %1958 = vmatprep.subr.mxu0 0.0
    %1959 = vmatpush1.msra.mxu0 %v93
    %1960 = vmatprep.subr.mxu0 0.0
    %1961 = vmatpush1.msra.mxu0 %v92
    %1962 = vmatprep.subr.mxu0 0.0
    %1963 = vmatpush1.msra.mxu0 %v91
    %1964 = vmatprep.subr.mxu0 0.0
    %1965 = vmatpush1.msra.mxu0 %v90
    %1966 = vmatprep.subr.mxu0 0.0
    %1967 = vmatpush1.msra.mxu0 %v89
    %1968 = vmatprep.subr.mxu0 0.0
    %1969 = vmatpush2.msra.mxu0 0.0
    %1970 = vmatprep.subr.mxu0 0.0
    %1971 = vmatpush2.msra.mxu0 0.0
    %1972 = vmatprep.subr.mxu0 0.0
    %1973 = vmatpush2.msra.mxu0 0.0
    %1974 = vmatprep.subr.mxu0 0.0
    %1975 = vmatpush2.msra.mxu0 0.0
    %1976 = vmatprep.subr.mxu0 0.0
    %1977 = vmatpush2.msra.mxu0 0.0
    %1978 = vmatprep.subr.mxu0 0.0
    %1979 = vmatpush2.msra.mxu0 0.0
    %1980 = vmatprep.subr.mxu0 0.0
    %1981 = vmatpush2.msra.mxu0 0.0
    %1982 = vmatprep.subr.mxu0 0.0
    %1983 = vmatpush2.msra.mxu0 0.0
    %1984 = vmatprep.subr.mxu0 0.0
    %1985 = vmatpush2.msra.mxu0 0.0
    %1986 = vmatprep.subr.mxu0 0.0
    %1987 = vmatpush2.msra.mxu0 0.0
    %1988 = vmatprep.subr.mxu0 0.0
    %1989 = vmatpush2.msra.mxu0 0.0
    %1990 = vmatprep.subr.mxu0 0.0
    %1991 = vmatpush2.msra.mxu0 0.0
    %1992 = vmatprep.subr.mxu0 0.0
    %1993 = vmatpush2.msra.mxu0 0.0
    %1994 = vmatprep.subr.mxu0 0.0
    %1995 = vmatpush2.msra.mxu0 0.0
    %1996 = vmatprep.subr.mxu0 0.0
    %1997 = vmatpush2.msra.mxu0 0.0
    %1998 = vmatprep.subr.mxu0 0.0
    %1999 = vmatpush2.msra.mxu0 0.0
    %2000 = vmatprep.mubr.f32.mxu0 0.0
    %2001 = vmatmul.mubr.f32.gmra.mxu0 %v1889
    %v2002 = vpop.f32.mrf.mxu0
    %v2003 = vadd.f32 %v1810, %v2002
    %v2004 = vpop.f32.mrf.mxu0
    %2005 = vmatprep.mubr.f32.mxu0 0.0
    %2006 = vmatmul.mubr.f32.gmra.mxu0 %v1892
    %v2007 = vpop.f32.mrf.mxu0
    %v2008 = vadd.f32 %v1815, %v2007
    %v2009 = vpop.f32.mrf.mxu0
    %2010 = vmatprep.mubr.f32.mxu0 0.0
    %2011 = vmatmul.mubr.f32.gmra.mxu0 %v1895
    %v2012 = vpop.f32.mrf.mxu0
    %v2013 = vadd.f32 %v1820, %v2012
    %v2014 = vpop.f32.mrf.mxu0
    %2015 = vmatprep.mubr.f32.mxu0 0.0
    %2016 = vmatmul.mubr.f32.gmra.mxu0 %v1898
    %v2017 = vpop.f32.mrf.mxu0
    %v2018 = vadd.f32 %v1825, %v2017
    %v2019 = vpop.f32.mrf.mxu0
    %2020 = vmatprep.mubr.f32.mxu0 0.0
    %2021 = vmatmul.mubr.f32.gmra.mxu0 %v1901
    %v2022 = vpop.f32.mrf.mxu0
    %v2023 = vadd.f32 %v1830, %v2022
    %v2024 = vpop.f32.mrf.mxu0
    %2025 = vmatprep.mubr.f32.mxu0 0.0
    %2026 = vmatmul.mubr.f32.gmra.mxu0 %v1904
    %v2027 = vpop.f32.mrf.mxu0
    %v2028 = vadd.f32 %v1835, %v2027
    %v2029 = vpop.f32.mrf.mxu0
    %2030 = vmatprep.mubr.f32.mxu0 0.0
    %2031 = vmatmul.mubr.f32.gmra.mxu0 %v1907
    %v2032 = vpop.f32.mrf.mxu0
    %v2033 = vadd.f32 %v1840, %v2032
    %v2034 = vpop.f32.mrf.mxu0
    %2035 = vmatprep.mubr.f32.mxu0 0.0
    %2036 = vmatmul.mubr.f32.gmra.mxu0 %v1910
    %v2037 = vpop.f32.mrf.mxu0
    %v2038 = vadd.f32 %v1845, %v2037
    %v2039 = vpop.f32.mrf.mxu0
    %2040 = vmatprep.mubr.f32.mxu0 0.0
    %2041 = vmatmul.mubr.f32.gmra.mxu0 %v1913
    %v2042 = vpop.f32.mrf.mxu0
    %v2043 = vadd.f32 %v1850, %v2042
    %v2044 = vpop.f32.mrf.mxu0
    %2045 = vmatprep.mubr.f32.mxu0 0.0
    %2046 = vmatmul.mubr.f32.gmra.mxu0 %v1916
    %v2047 = vpop.f32.mrf.mxu0
    %v2048 = vadd.f32 %v1855, %v2047
    %v2049 = vpop.f32.mrf.mxu0
    %2050 = vmatprep.mubr.f32.mxu0 0.0
    %2051 = vmatmul.mubr.f32.gmra.mxu0 %v1919
    %v2052 = vpop.f32.mrf.mxu0
    %v2053 = vadd.f32 %v1860, %v2052
    %v2054 = vpop.f32.mrf.mxu0
    %2055 = vmatprep.mubr.f32.mxu0 0.0
    %2056 = vmatmul.mubr.f32.gmra.mxu0 %v1922
    %v2057 = vpop.f32.mrf.mxu0
    %v2058 = vadd.f32 %v1865, %v2057
    %v2059 = vpop.f32.mrf.mxu0
    %2060 = vmatprep.mubr.f32.mxu0 0.0
    %2061 = vmatmul.mubr.f32.gmra.mxu0 %v1925
    %v2062 = vpop.f32.mrf.mxu0
    %v2063 = vadd.f32 %v1870, %v2062
    %v2064 = vpop.f32.mrf.mxu0
    %2065 = vmatprep.mubr.f32.mxu0 0.0
    %2066 = vmatmul.mubr.f32.gmra.mxu0 %v1928
    %v2067 = vpop.f32.mrf.mxu0
    %v2068 = vadd.f32 %v1875, %v2067
    %v2069 = vpop.f32.mrf.mxu0
    %2070 = vmatprep.mubr.f32.mxu0 0.0
    %2071 = vmatmul.mubr.f32.gmra.mxu0 %v1931
    %v2072 = vpop.f32.mrf.mxu0
    %v2073 = vadd.f32 %v1880, %v2072
    %v2074 = vpop.f32.mrf.mxu0
    %2075 = vmatprep.mubr.f32.mxu0 0.0
    %2076 = vmatmul.mubr.f32.gmra.mxu0 %v1934
    %v2077 = vpop.f32.mrf.mxu0
    %v2078 = vadd.f32 %v1885, %v2077
    %v2079 = vpop.f32.mrf.mxu0
    %2080 = vdwg.mxu0
    %v2081 = vadd.f32 %v2003, %v1024
    %v2082 = vadd.f32 %v2008, %v1024
    %v2083 = vadd.f32 %v2013, %v1024
    %v2084 = vadd.f32 %v2018, %v1024
    %v2085 = vadd.f32 %v2023, %v1024
    %v2086 = vadd.f32 %v2028, %v1024
    %v2087 = vadd.f32 %v2033, %v1024
    %v2088 = vadd.f32 %v2038, %v1024
    %v2089 = vadd.f32 %v2043, %v1024
    %v2090 = vadd.f32 %v2048, %v1024
    %v2091 = vadd.f32 %v2053, %v1024
    %v2092 = vadd.f32 %v2058, %v1024
    %v2093 = vadd.f32 %v2063, %v1024
    %v2094 = vadd.f32 %v2068, %v1024
    %v2095 = vadd.f32 %v2073, %v1024
    %v2096 = vadd.f32 %v2078, %v1024
    %v2097 = vmax.f32 %v2081, 0.0
    %v2098 = vmax.f32 %v2082, 0.0
    %v2099 = vmax.f32 %v2083, 0.0
    %v2100 = vmax.f32 %v2084, 0.0
    %v2101 = vmax.f32 %v2085, 0.0
    %v2102 = vmax.f32 %v2086, 0.0
    %v2103 = vmax.f32 %v2087, 0.0
    %v2104 = vmax.f32 %v2088, 0.0
    %v2105 = vmax.f32 %v2089, 0.0
    %v2106 = vmax.f32 %v2090, 0.0
    %v2107 = vmax.f32 %v2091, 0.0
    %v2108 = vmax.f32 %v2092, 0.0
    %v2109 = vmax.f32 %v2093, 0.0
    %v2110 = vmax.f32 %v2094, 0.0
    %v2111 = vmax.f32 %v2095, 0.0
    %v2112 = vmax.f32 %v2096, 0.0
    %v2114 = vsel %vm633, %v2097, 0
    %v2117 = vsel %vm633, %v2098, 0
    %v2120 = vsel %vm633, %v2099, 0
    %v2123 = vsel %vm633, %v2100, 0
    %v2126 = vsel %vm633, %v2101, 0
    %v2129 = vsel %vm633, %v2102, 0
    %v2132 = vsel %vm633, %v2103, 0
    %v2135 = vsel %vm633, %v2104, 0
    %v2138 = vsel %vm633, %v2105, 0
    %v2141 = vsel %vm633, %v2106, 0
    %v2144 = vsel %vm633, %v2107, 0
    %v2147 = vsel %vm633, %v2108, 0
    %v2150 = vsel %vm633, %v2109, 0
    %v2153 = vsel %vm633, %v2110, 0
    %v2156 = vsel %vm633, %v2111, 0
    %v2159 = vsel %vm633, %v2112, 0
    %2161 = vmatprep.subr.mxu0 0.0
    %2162 = vmatpush1.xpose.msra.mxu0 %v2159
    %2163 = vmatprep.subr.mxu0 0.0
    %2164 = vmatpush1.xpose.msra.mxu0 %v2156
    %2165 = vmatprep.subr.mxu0 0.0
    %2166 = vmatpush1.xpose.msra.mxu0 %v2153
    %2167 = vmatprep.subr.mxu0 0.0
    %2168 = vmatpush1.xpose.msra.mxu0 %v2150
    %2169 = vmatprep.subr.mxu0 0.0
    %2170 = vmatpush1.xpose.msra.mxu0 %v2147
    %2171 = vmatprep.subr.mxu0 0.0
    %2172 = vmatpush1.xpose.msra.mxu0 %v2144
    %2173 = vmatprep.subr.mxu0 0.0
    %2174 = vmatpush1.xpose.msra.mxu0 %v2141
    %2175 = vmatprep.subr.mxu0 0.0
    %2176 = vmatpush1.xpose.msra.mxu0 %v2138
    %2177 = vmatprep.subr.mxu0 0.0
    %2178 = vmatpush1.xpose.msra.mxu0 %v2135
    %2179 = vmatprep.subr.mxu0 0.0
    %2180 = vmatpush1.xpose.msra.mxu0 %v2132
    %2181 = vmatprep.subr.mxu0 0.0
    %2182 = vmatpush1.xpose.msra.mxu0 %v2129
    %2183 = vmatprep.subr.mxu0 0.0
    %2184 = vmatpush1.xpose.msra.mxu0 %v2126
    %2185 = vmatprep.subr.mxu0 0.0
    %2186 = vmatpush1.xpose.msra.mxu0 %v2123
    %2187 = vmatprep.subr.mxu0 0.0
    %2188 = vmatpush1.xpose.msra.mxu0 %v2120
    %2189 = vmatprep.subr.mxu0 0.0
    %2190 = vmatpush1.xpose.msra.mxu0 %v2117
    %2191 = vmatprep.subr.mxu0 0.0
    %2192 = vmatpush1.xpose.msra.mxu0 %v2114
    %2193 = vmatprep.subr.mxu0 0.0
    %2194 = vmatpush2.xpose.msra.mxu0 0.0
    %2195 = vmatprep.subr.mxu0 0.0
    %2196 = vmatpush2.xpose.msra.mxu0 0.0
    %2197 = vmatprep.subr.mxu0 0.0
    %2198 = vmatpush2.xpose.msra.mxu0 0.0
    %2199 = vmatprep.subr.mxu0 0.0
    %2200 = vmatpush2.xpose.msra.mxu0 0.0
    %2201 = vmatprep.subr.mxu0 0.0
    %2202 = vmatpush2.xpose.msra.mxu0 0.0
    %2203 = vmatprep.subr.mxu0 0.0
    %2204 = vmatpush2.xpose.msra.mxu0 0.0
    %2205 = vmatprep.subr.mxu0 0.0
    %2206 = vmatpush2.xpose.msra.mxu0 0.0
    %2207 = vmatprep.subr.mxu0 0.0
    %2208 = vmatpush2.xpose.msra.mxu0 0.0
    %2209 = vmatprep.subr.mxu0 0.0
    %2210 = vmatpush2.xpose.msra.mxu0 0.0
    %2211 = vmatprep.subr.mxu0 0.0
    %2212 = vmatpush2.xpose.msra.mxu0 0.0
    %2213 = vmatprep.subr.mxu0 0.0
    %2214 = vmatpush2.xpose.msra.mxu0 0.0
    %2215 = vmatprep.subr.mxu0 0.0
    %2216 = vmatpush2.xpose.msra.mxu0 0.0
    %2217 = vmatprep.subr.mxu0 0.0
    %2218 = vmatpush2.xpose.msra.mxu0 0.0
    %2219 = vmatprep.subr.mxu0 0.0
    %2220 = vmatpush2.xpose.msra.mxu0 0.0
    %2221 = vmatprep.subr.mxu0 0.0
    %2222 = vmatpush2.xpose.msra.mxu0 0.0
    %2223 = vmatprep.subr.mxu0 0.0
    %2224 = vmatpush2.xpose.msra.mxu0 0.0
    %2225 = vmatprep.mubr.f32.mxu0 0.0
    %2226 = vmatmul.mubr.f32.gmra.mxu0 %v1060
    %v2227 = vpop.f32.mrf.mxu0
    %v2228 = vadd.f32 %v1058, %v2227
    %v2229 = vpop.f32.mrf.mxu0
    %2230 = vdwg.mxu0
    %2231 = vst [vmem:[#allocation11 + $0x1] sm:$0x1] %v2228
    // Predicated region
    $region46: #{tpu_custom_call.1} parent=1 // pred_check
      _
    $region47: #{tpu_custom_call.1} parent=1 // pred_check_branch
      %2233 = sbr.rel (0) target = $region49
    $region48: #{tpu_custom_call.1} parent=1 // pred_region
      %s2235 = ssub.s32 32, 32
      %2236 = vsyncadd [#allocation5], %s2235
      %s2238 = sshll.u32 [#allocation11], 4
      %s2239 = int_to_ptr.vmem [resolvable:$true] %s2238
      %2241 = dma.vmem_to_hbm [thread:$0]  %s2239, 32, %s7, [#allocation5]
    $region49: #{tpu_custom_call.1} parent=1 // pred_fallthru
      _
    // Predicated region
    $region50: #{tpu_custom_call.1} parent=1 // pred_check
      _
    $region51: #{tpu_custom_call.1} parent=1 // pred_check_branch
      %2243 = sbr.rel (0) target = $region53
    $region52: #{tpu_custom_call.1} parent=1 // pred_region
      %2244 = dma.done [#allocation5], 32
    $region53: #{tpu_custom_call.1} parent=1 // pred_fallthru
      _
    %2245 = vsyncpa [#allocation4], 1
    %2246 = vsyncpa [#allocation7], 1
    %2247 = vsyncpa [#allocation10], 1
    %2248 = vsyncpa [#allocation5], 1

// kernel: tpu_custom_call.1
$region0: #{tpu_custom_call.1}
  #allocation0 [shape = 'u32[]', space=smem, size = 0x4, offset = 0x4, fixed_abs, tag = 'smem constant byte address 0x4 - core index']
  #allocation1 [shape = 'u32[144,128]{1,0:T(1,128)}', space=vmem, size = 0x12000, scoped, tag = 'internal scratch']
  #allocation2 [shape = 'f32[1]{0:T(128)S(6)}', space=smem, size = 0x200, scoped, tag = 'scoped memory for tpu_custom_call.1']
  %s0 = inlined_call_operand.hbm [shape: s32[2,2,128], index: 0, kind: input, shape index: {}]
  %s1 = inlined_call_operand.hbm [shape: f32[48,64], index: 1, kind: input, shape index: {}]
  %s2 = inlined_call_operand.hbm [shape: f32[64,64], index: 2, kind: input, shape index: {}]
  %s3 = inlined_call_operand.hbm [shape: f32[64,64], index: 3, kind: input, shape index: {}]
  %s4 = inlined_call_operand.vmem [shape: f32[1,64], index: 4, kind: input, shape index: {}]
  %s5 = inlined_call_operand.vmem [shape: f32[1,64], index: 5, kind: input, shape index: {}]
  %s6 = inlined_call_operand.<no memory space> [shape: f32[1], index: 6, kind: input, shape index: {}]
  %s7 = inlined_call_operand.hbm [shape: f32[2,128], index: 7, kind: output, shape index: {}]
  %s8 = sld [smem:[#allocation0]]
  $region54: #{tpu_custom_call.1} parent=0
    _
  %s10 = ssub.s32 1, %s8
  %s11 = scalar_select 0, %s10, %s8
  %12 = sst [smem:[#allocation2]] %s6
  $region1: #{tpu_custom_call.1} parent=0
    #allocation3 [shape = 'u8[2048]{0}', space=vmem, size = 0x800, scoped, tag = 'input window, operand 0, single buffered']
    #allocation4 [shape = 's32[1]{0}', space=sflag, size = 0x4, scoped, tag = 'scoped memory for tpu_custom_call.1']
    #allocation5 [shape = 's32[1]{0}', space=sflag, size = 0x4, scoped, tag = 'scoped memory for tpu_custom_call.1']
    #allocation6 [shape = 'u8[24576]{0}', space=vmem, size = 0x6000, scoped, tag = 'input window, operand 1, single buffered']
    #allocation7 [shape = 's32[1]{0}', space=sflag, size = 0x4, scoped, tag = 'scoped memory for tpu_custom_call.1']
    #allocation8 [shape = 'u8[32768]{0}', space=vmem, size = 0x8000, scoped, tag = 'input window, operand 2, single buffered']
    #allocation9 [shape = 'u8[32768]{0}', space=vmem, size = 0x8000, scoped, tag = 'input window, operand 3, single buffered']
    #allocation10 [shape = 's32[1]{0}', space=sflag, size = 0x4, scoped, tag = 'scoped memory for tpu_custom_call.1']
    #allocation11 [shape = 'u8[1024]{0}', space=vmem, size = 0x400, scoped, tag = 'output window, operand 0, single buffered']
    %13 = vsyncpa [#allocation4], 0
    %14 = vsyncpa [#allocation7], 0
    %15 = vsyncpa [#allocation10], 0
    %16 = vsyncpa [#allocation5], 0
    // Predicated region
    $region2: #{tpu_custom_call.1} parent=1 // pred_check
      _
    $region3: #{tpu_custom_call.1} parent=1 // pred_check_branch
      %18 = sbr.rel (0) target = $region5
    $region4: #{tpu_custom_call.1} parent=1 // pred_region
      %s20 = ssub.s32 64, 64
      %21 = vsyncadd [#allocation4], %s20
      %s22 = sshll.u32 [#allocation3], 4
      %s23 = int_to_ptr.vmem [resolvable:$true] %s22
      %28 = dma.hbm_to_vmem [thread:$0]  %s0, 64, %s23, [#allocation4], 32, 32, 2
    $region5: #{tpu_custom_call.1} parent=1 // pred_fallthru
      _
    // Predicated region
    $region6: #{tpu_custom_call.1} parent=1 // pred_check
      _
    $region7: #{tpu_custom_call.1} parent=1 // pred_check_branch
      %30 = sbr.rel (0) target = $region9
    $region8: #{tpu_custom_call.1} parent=1 // pred_region
      %s32 = ssub.s32 768, 768
      %33 = vsyncadd [#allocation7], %s32
      %s34 = sshll.u32 [#allocation6], 4
      %s35 = int_to_ptr.vmem [resolvable:$true] %s34
      %40 = dma.hbm_to_vmem [thread:$0]  %s1, 768, %s35, [#allocation7], 128, 128, 8
    $region9: #{tpu_custom_call.1} parent=1 // pred_fallthru
      _
    // Predicated region
    $region10: #{tpu_custom_call.1} parent=1 // pred_check
      _
    $region11: #{tpu_custom_call.1} parent=1 // pred_check_branch
      %42 = sbr.rel (0) target = $region13
    $region12: #{tpu_custom_call.1} parent=1 // pred_region
      %s44 = ssub.s32 1024, 1024
      %45 = vsyncadd [#allocation7], %s44
      %s46 = sshll.u32 [#allocation8], 4
      %s47 = int_to_ptr.vmem [resolvable:$true] %s46
      %52 = dma.hbm_to_vmem [thread:$0]  %s2, 1024, %s47, [#allocation7], 128, 128, 8
    $region13: #{tpu_custom_call.1} parent=1 // pred_fallthru
      _
    // Predicated region
    $region14: #{tpu_custom_call.1} parent=1 // pred_check
      _
    $region15: #{tpu_custom_call.1} parent=1 // pred_check_branch
      %54 = sbr.rel (0) target = $region17
    $region16: #{tpu_custom_call.1} parent=1 // pred_region
      %s56 = ssub.s32 1024, 1024
      %57 = vsyncadd [#allocation10], %s56
      %s58 = sshll.u32 [#allocation9], 4
      %s59 = int_to_ptr.vmem [resolvable:$true] %s58
      %64 = dma.hbm_to_vmem [thread:$0]  %s3, 1024, %s59, [#allocation10], 128, 128, 8
    $region17: #{tpu_custom_call.1} parent=1 // pred_fallthru
      _
    // Predicated region
    $region18: #{tpu_custom_call.1} parent=1 // pred_check
      _
    $region19: #{tpu_custom_call.1} parent=1 // pred_check_branch
      %66 = sbr.rel (0) target = $region21
    $region20: #{tpu_custom_call.1} parent=1 // pred_region
      _
    $region21: #{tpu_custom_call.1} parent=1 // pred_fallthru
      _
    // Predicated region
    $region22: #{tpu_custom_call.1} parent=1 // pred_check
      _
    $region23: #{tpu_custom_call.1} parent=1 // pred_check_branch
      %68 = sbr.rel (0) target = $region25
    $region24: #{tpu_custom_call.1} parent=1 // pred_region
      _
    $region25: #{tpu_custom_call.1} parent=1 // pred_fallthru
      _
    // Predicated region
    $region26: #{tpu_custom_call.1} parent=1 // pred_check
      _
    $region27: #{tpu_custom_call.1} parent=1 // pred_check_branch
      %70 = sbr.rel (0) target = $region29
    $region28: #{tpu_custom_call.1} parent=1 // pred_region
      _
    $region29: #{tpu_custom_call.1} parent=1 // pred_fallthru
      _
    // Predicated region
    $region30: #{tpu_custom_call.1} parent=1 // pred_check
      _
    $region31: #{tpu_custom_call.1} parent=1 // pred_check_branch
      %72 = sbr.rel (0) target = $region33
    $region32: #{tpu_custom_call.1} parent=1 // pred_region
      %73 = dma.done [#allocation4], 64
    $region33: #{tpu_custom_call.1} parent=1 // pred_fallthru
      _
    // Predicated region
    $region34: #{tpu_custom_call.1} parent=1 // pred_check
      _
    $region35: #{tpu_custom_call.1} parent=1 // pred_check_branch
      %75 = sbr.rel (0) target = $region37
    $region36: #{tpu_custom_call.1} parent=1 // pred_region
      %76 = dma.done [#allocation7], 768
    $region37: #{tpu_custom_call.1} parent=1 // pred_fallthru
      _
    // Predicated region
    $region38: #{tpu_custom_call.1} parent=1 // pred_check
      _
    $region39: #{tpu_custom_call.1} parent=1 // pred_check_branch
      %78 = sbr.rel (0) target = $region41
    $region40: #{tpu_custom_call.1} parent=1 // pred_region
      %79 = dma.done [#allocation7], 1024
    $region41: #{tpu_custom_call.1} parent=1 // pred_fallthru
      _
    // Predicated region
    $region42: #{tpu_custom_call.1} parent=1 // pred_check
      _
    $region43: #{tpu_custom_call.1} parent=1 // pred_check_branch
      %81 = sbr.rel (0) target = $region45
    $region44: #{tpu_custom_call.1} parent=1 // pred_region
      %82 = dma.done [#allocation10], 1024
    $region45: #{tpu_custom_call.1} parent=1 // pred_fallthru
      _
    %v83 = vld [vmem:[#allocation6] sm:$0xff]
    %v84 = vld [vmem:[#allocation6 + $0x8] sm:$0xff]
    %v85 = vld [vmem:[#allocation6 + $0x10] sm:$0xff]
    %v86 = vld [vmem:[#allocation6 + $0x18] sm:$0xff]
    %v87 = vld [vmem:[#allocation6 + $0x20] sm:$0xff]
    %v88 = vld [vmem:[#allocation6 + $0x28] sm:$0xff]
    %v89 = vld [vmem:[#allocation8] sm:$0xff]
    %v90 = vld [vmem:[#allocation8 + $0x8] sm:$0xff]
    %v91 = vld [vmem:[#allocation8 + $0x10] sm:$0xff]
    %v92 = vld [vmem:[#allocation8 + $0x18] sm:$0xff]
    %v93 = vld [vmem:[#allocation8 + $0x20] sm:$0xff]
    %v94 = vld [vmem:[#allocation8 + $0x28] sm:$0xff]
    %v95 = vld [vmem:[#allocation8 + $0x30] sm:$0xff]
    %v96 = vld [vmem:[#allocation8 + $0x38] sm:$0xff]
    %v97 = vld [vmem:[#allocation9] sm:$0xff]
    %v98 = vld [vmem:[#allocation9 + $0x8] sm:$0xff]
    %v99 = vld [vmem:[#allocation9 + $0x10] sm:$0xff]
    %v100 = vld [vmem:[#allocation9 + $0x18] sm:$0xff]
    %v101 = vld [vmem:[#allocation9 + $0x20] sm:$0xff]
    %v102 = vld [vmem:[#allocation9 + $0x28] sm:$0xff]
    %v103 = vld [vmem:[#allocation9 + $0x30] sm:$0xff]
    %v104 = vld [vmem:[#allocation9 + $0x38] sm:$0xff]
    %v105 = vld [vmem:[%s4] sm:$0x1]
    %v106 = vld [vmem:[%s5] sm:$0x1]
    %s107 = sld [smem:[#allocation2]]
    %v108 = vld [vmem:[#allocation3] sm:$0x3]
    %s109 = scalar_lea.vmem [#allocation3], 2
    %v110 = vld [vmem:[%s109] sm:$0x3]
    %v111 = vlaneseq
    %v112 = vshrl.u32 %v111, 7
    %v113 = vadd.s32 %v112, 8
    %v114 = vadd.s32 %v112, 16
    %v115 = vadd.s32 %v112, 24
    %v116 = vadd.s32 %v112, 32
    %v117 = vadd.s32 %v112, 40
    %v118 = vlaneseq
    %v119 = vshrl.u32 %v118, 7
    %v120 = vsub.s32 0, %v119
    %v121 = vrot.slane %v108, %v120
    %vm122 = vcmp.eq.s32.totalorder %v112, %v121
    %vm123 = vcmp.eq.s32.totalorder %v113, %v121
    %vm124 = vcmp.eq.s32.totalorder %v114, %v121
    %vm125 = vcmp.eq.s32.totalorder %v115, %v121
    %vm126 = vcmp.eq.s32.totalorder %v116, %v121
    %vm127 = vcmp.eq.s32.totalorder %v117, %v121
    %v128 = vsel %vm122, 1.0, 0.0
    %v129 = vsel %vm123, 1.0, 0.0
    %v130 = vsel %vm124, 1.0, 0.0
    %v131 = vsel %vm125, 1.0, 0.0
    %v132 = vsel %vm126, 1.0, 0.0
    %v133 = vsel %vm127, 1.0, 0.0
    %v134 = vlaneseq
    %v135 = vshrl.u32 %v134, 7
    %v136 = vsub.s32 0, %v135
    %v137 = vrot.slane %v110, %v136
    %vm138 = vcmp.eq.s32.totalorder %v112, %v137
    %vm139 = vcmp.eq.s32.totalorder %v113, %v137
    %vm140 = vcmp.eq.s32.totalorder %v114, %v137
    %vm141 = vcmp.eq.s32.totalorder %v115, %v137
    %vm142 = vcmp.eq.s32.totalorder %v116, %v137
    %vm143 = vcmp.eq.s32.totalorder %v117, %v137
    %v144 = vsel %vm138, 1.0, 0.0
    %v145 = vsel %vm139, 1.0, 0.0
    %v146 = vsel %vm140, 1.0, 0.0
    %v147 = vsel %vm141, 1.0, 0.0
    %v148 = vsel %vm142, 1.0, 0.0
    %v149 = vsel %vm143, 1.0, 0.0
    %150 = vxpose.xlu0.b32.start [1/16] %v128, 128
    %151 = vxpose.xlu0.b32.cont [2/16] %v129, 128
    %152 = vxpose.xlu0.b32.cont [3/16] %v130, 128
    %153 = vxpose.xlu0.b32.cont [4/16] %v131, 128
    %154 = vxpose.xlu0.b32.cont [5/16] %v132, 128
    %155 = vxpose.xlu0.b32.cont [6/16] %v133, 128
    %156 = vxpose.xlu0.b32.cont [7/16] 0.0, 128
    %157 = vxpose.xlu0.b32.cont [8/16] 0.0, 128
    %158 = vxpose.xlu0.b32.cont [9/16] 0.0, 128
    %159 = vxpose.xlu0.b32.cont [10/16] 0.0, 128
    %160 = vxpose.xlu0.b32.cont [11/16] 0.0, 128
    %161 = vxpose.xlu0.b32.cont [12/16] 0.0, 128
    %162 = vxpose.xlu0.b32.cont [13/16] 0.0, 128
    %163 = vxpose.xlu0.b32.cont [14/16] 0.0, 128
    %164 = vxpose.xlu0.b32.cont [15/16] 0.0, 128
    %165 = vxpose.xlu0.b32.end [16/16] 0.0, 128
    %v166 = vpop.trf.xlu0
    %v167 = vpop.trf.xlu0
    %v168 = vpop.trf.xlu0
    %v169 = vpop.trf.xlu0
    %v170 = vpop.trf.xlu0
    %v171 = vpop.trf.xlu0
    %v172 = vpop.trf.xlu0
    %v173 = vpop.trf.xlu0
    %v174 = vpop.trf.xlu0
    %v175 = vpop.trf.xlu0
    %v176 = vpop.trf.xlu0
    %v177 = vpop.trf.xlu0
    %v178 = vpop.trf.xlu0
    %v179 = vpop.trf.xlu0
    %v180 = vpop.trf.xlu0
    %v181 = vpop.trf.xlu0
    %vm182 = vcmask 392192
    %v184 = vsel %vm182, %v166, 0
    %v187 = vsel %vm182, %v167, 0
    %v190 = vsel %vm182, %v168, 0
    %v193 = vsel %vm182, %v169, 0
    %v196 = vsel %vm182, %v170, 0
    %v199 = vsel %vm182, %v171, 0
    %v202 = vsel %vm182, %v172, 0
    %v205 = vsel %vm182, %v173, 0
    %v208 = vsel %vm182, %v174, 0
    %v211 = vsel %vm182, %v175, 0
    %v214 = vsel %vm182, %v176, 0
    %v217 = vsel %vm182, %v177, 0
    %v220 = vsel %vm182, %v178, 0
    %v223 = vsel %vm182, %v179, 0
    %v226 = vsel %vm182, %v180, 0
    %v229 = vsel %vm182, %v181, 0
    %231 = vmatprep.subr.mxu0 0.0
    %232 = vmatpush1.msra.mxu0 0.0
    %233 = vmatprep.subr.mxu0 0.0
    %234 = vmatpush1.msra.mxu0 0.0
    %235 = vmatprep.subr.mxu0 0.0
    %236 = vmatpush1.msra.mxu0 0.0
    %237 = vmatprep.subr.mxu0 0.0
    %238 = vmatpush1.msra.mxu0 0.0
    %239 = vmatprep.subr.mxu0 0.0
    %240 = vmatpush1.msra.mxu0 0.0
    %241 = vmatprep.subr.mxu0 0.0
    %242 = vmatpush1.msra.mxu0 0.0
    %243 = vmatprep.subr.mxu0 0.0
    %244 = vmatpush1.msra.mxu0 0.0
    %245 = vmatprep.subr.mxu0 0.0
    %246 = vmatpush1.msra.mxu0 0.0
    %247 = vmatprep.subr.mxu0 0.0
    %248 = vmatpush1.msra.mxu0 0.0
    %249 = vmatprep.subr.mxu0 0.0
    %250 = vmatpush1.msra.mxu0 0.0
    %251 = vmatprep.subr.mxu0 0.0
    %252 = vmatpush1.msra.mxu0 %v88
    %253 = vmatprep.subr.mxu0 0.0
    %254 = vmatpush1.msra.mxu0 %v87
    %255 = vmatprep.subr.mxu0 0.0
    %256 = vmatpush1.msra.mxu0 %v86
    %257 = vmatprep.subr.mxu0 0.0
    %258 = vmatpush1.msra.mxu0 %v85
    %259 = vmatprep.subr.mxu0 0.0
    %260 = vmatpush1.msra.mxu0 %v84
    %261 = vmatprep.subr.mxu0 0.0
    %262 = vmatpush1.msra.mxu0 %v83
    %263 = vmatprep.subr.mxu0 0.0
    %264 = vmatpush2.msra.mxu0 0.0
    %265 = vmatprep.subr.mxu0 0.0
    %266 = vmatpush2.msra.mxu0 0.0
    %267 = vmatprep.subr.mxu0 0.0
    %268 = vmatpush2.msra.mxu0 0.0
    %269 = vmatprep.subr.mxu0 0.0
    %270 = vmatpush2.msra.mxu0 0.0
    %271 = vmatprep.subr.mxu0 0.0
    %272 = vmatpush2.msra.mxu0 0.0
    %273 = vmatprep.subr.mxu0 0.0
    %274 = vmatpush2.msra.mxu0 0.0
    %275 = vmatprep.subr.mxu0 0.0
    %276 = vmatpush2.msra.mxu0 0.0
    %277 = vmatprep.subr.mxu0 0.0
    %278 = vmatpush2.msra.mxu0 0.0
    %279 = vmatprep.subr.mxu0 0.0
    %280 = vmatpush2.msra.mxu0 0.0
    %281 = vmatprep.subr.mxu0 0.0
    %282 = vmatpush2.msra.mxu0 0.0
    %283 = vmatprep.subr.mxu0 0.0
    %284 = vmatpush2.msra.mxu0 0.0
    %285 = vmatprep.subr.mxu0 0.0
    %286 = vmatpush2.msra.mxu0 0.0
    %287 = vmatprep.subr.mxu0 0.0
    %288 = vmatpush2.msra.mxu0 0.0
    %289 = vmatprep.subr.mxu0 0.0
    %290 = vmatpush2.msra.mxu0 0.0
    %291 = vmatprep.subr.mxu0 0.0
    %292 = vmatpush2.msra.mxu0 0.0
    %293 = vmatprep.subr.mxu0 0.0
    %294 = vmatpush2.msra.mxu0 0.0
    %295 = vmatprep.mubr.f32.mxu0 0.0
    %296 = vmatmul.mubr.f32.gmra.mxu0 %v184
    %v297 = vpop.f32.mrf.mxu0
    %v298 = vadd.f32 0.0, %v297
    %v299 = vpop.f32.mrf.mxu0
    %300 = vmatprep.mubr.f32.mxu0 0.0
    %301 = vmatmul.mubr.f32.gmra.mxu0 %v187
    %v302 = vpop.f32.mrf.mxu0
    %v303 = vadd.f32 0.0, %v302
    %v304 = vpop.f32.mrf.mxu0
    %305 = vmatprep.mubr.f32.mxu0 0.0
    %306 = vmatmul.mubr.f32.gmra.mxu0 %v190
    %v307 = vpop.f32.mrf.mxu0
    %v308 = vadd.f32 0.0, %v307
    %v309 = vpop.f32.mrf.mxu0
    %310 = vmatprep.mubr.f32.mxu0 0.0
    %311 = vmatmul.mubr.f32.gmra.mxu0 %v193
    %v312 = vpop.f32.mrf.mxu0
    %v313 = vadd.f32 0.0, %v312
    %v314 = vpop.f32.mrf.mxu0
    %315 = vmatprep.mubr.f32.mxu0 0.0
    %316 = vmatmul.mubr.f32.gmra.mxu0 %v196
    %v317 = vpop.f32.mrf.mxu0
    %v318 = vadd.f32 0.0, %v317
    %v319 = vpop.f32.mrf.mxu0
    %320 = vmatprep.mubr.f32.mxu0 0.0
    %321 = vmatmul.mubr.f32.gmra.mxu0 %v199
    %v322 = vpop.f32.mrf.mxu0
    %v323 = vadd.f32 0.0, %v322
    %v324 = vpop.f32.mrf.mxu0
    %325 = vmatprep.mubr.f32.mxu0 0.0
    %326 = vmatmul.mubr.f32.gmra.mxu0 %v202
    %v327 = vpop.f32.mrf.mxu0
    %v328 = vadd.f32 0.0, %v327
    %v329 = vpop.f32.mrf.mxu0
    %330 = vmatprep.mubr.f32.mxu0 0.0
    %331 = vmatmul.mubr.f32.gmra.mxu0 %v205
    %v332 = vpop.f32.mrf.mxu0
    %v333 = vadd.f32 0.0, %v332
    %v334 = vpop.f32.mrf.mxu0
    %335 = vmatprep.mubr.f32.mxu0 0.0
    %336 = vmatmul.mubr.f32.gmra.mxu0 %v208
    %v337 = vpop.f32.mrf.mxu0
    %v338 = vadd.f32 0.0, %v337
    %v339 = vpop.f32.mrf.mxu0
    %340 = vmatprep.mubr.f32.mxu0 0.0
    %341 = vmatmul.mubr.f32.gmra.mxu0 %v211
    %v342 = vpop.f32.mrf.mxu0
    %v343 = vadd.f32 0.0, %v342
    %v344 = vpop.f32.mrf.mxu0
    %345 = vmatprep.mubr.f32.mxu0 0.0
    %346 = vmatmul.mubr.f32.gmra.mxu0 %v214
    %v347 = vpop.f32.mrf.mxu0
    %v348 = vadd.f32 0.0, %v347
    %v349 = vpop.f32.mrf.mxu0
    %350 = vmatprep.mubr.f32.mxu0 0.0
    %351 = vmatmul.mubr.f32.gmra.mxu0 %v217
    %v352 = vpop.f32.mrf.mxu0
    %v353 = vadd.f32 0.0, %v352
    %v354 = vpop.f32.mrf.mxu0
    %355 = vmatprep.mubr.f32.mxu0 0.0
    %356 = vmatmul.mubr.f32.gmra.mxu0 %v220
    %v357 = vpop.f32.mrf.mxu0
    %v358 = vadd.f32 0.0, %v357
    %v359 = vpop.f32.mrf.mxu0
    %360 = vmatprep.mubr.f32.mxu0 0.0
    %361 = vmatmul.mubr.f32.gmra.mxu0 %v223
    %v362 = vpop.f32.mrf.mxu0
    %v363 = vadd.f32 0.0, %v362
    %v364 = vpop.f32.mrf.mxu0
    %365 = vmatprep.mubr.f32.mxu0 0.0
    %366 = vmatmul.mubr.f32.gmra.mxu0 %v226
    %v367 = vpop.f32.mrf.mxu0
    %v368 = vadd.f32 0.0, %v367
    %v369 = vpop.f32.mrf.mxu0
    %370 = vmatprep.mubr.f32.mxu0 0.0
    %371 = vmatmul.mubr.f32.gmra.mxu0 %v229
    %v372 = vpop.f32.mrf.mxu0
    %v373 = vadd.f32 0.0, %v372
    %v374 = vpop.f32.mrf.mxu0
    %375 = vdwg.mxu0
    %376 = vxpose.xlu0.b32.start [1/16] %v144, 128
    %377 = vxpose.xlu0.b32.cont [2/16] %v145, 128
    %378 = vxpose.xlu0.b32.cont [3/16] %v146, 128
    %379 = vxpose.xlu0.b32.cont [4/16] %v147, 128
    %380 = vxpose.xlu0.b32.cont [5/16] %v148, 128
    %381 = vxpose.xlu0.b32.cont [6/16] %v149, 128
    %382 = vxpose.xlu0.b32.cont [7/16] 0.0, 128
    %383 = vxpose.xlu0.b32.cont [8/16] 0.0, 128
    %384 = vxpose.xlu0.b32.cont [9/16] 0.0, 128
    %385 = vxpose.xlu0.b32.cont [10/16] 0.0, 128
    %386 = vxpose.xlu0.b32.cont [11/16] 0.0, 128
    %387 = vxpose.xlu0.b32.cont [12/16] 0.0, 128
    %388 = vxpose.xlu0.b32.cont [13/16] 0.0, 128
    %389 = vxpose.xlu0.b32.cont [14/16] 0.0, 128
    %390 = vxpose.xlu0.b32.cont [15/16] 0.0, 128
    %391 = vxpose.xlu0.b32.end [16/16] 0.0, 128
    %v392 = vpop.trf.xlu0
    %v393 = vpop.trf.xlu0
    %v394 = vpop.trf.xlu0
    %v395 = vpop.trf.xlu0
    %v396 = vpop.trf.xlu0
    %v397 = vpop.trf.xlu0
    %v398 = vpop.trf.xlu0
    %v399 = vpop.trf.xlu0
    %v400 = vpop.trf.xlu0
    %v401 = vpop.trf.xlu0
    %v402 = vpop.trf.xlu0
    %v403 = vpop.trf.xlu0
    %v404 = vpop.trf.xlu0
    %v405 = vpop.trf.xlu0
    %v406 = vpop.trf.xlu0
    %v407 = vpop.trf.xlu0
    %v409 = vsel %vm182, %v392, 0
    %v412 = vsel %vm182, %v393, 0
    %v415 = vsel %vm182, %v394, 0
    %v418 = vsel %vm182, %v395, 0
    %v421 = vsel %vm182, %v396, 0
    %v424 = vsel %vm182, %v397, 0
    %v427 = vsel %vm182, %v398, 0
    %v430 = vsel %vm182, %v399, 0
    %v433 = vsel %vm182, %v400, 0
    %v436 = vsel %vm182, %v401, 0
    %v439 = vsel %vm182, %v402, 0
    %v442 = vsel %vm182, %v403, 0
    %v445 = vsel %vm182, %v404, 0
    %v448 = vsel %vm182, %v405, 0
    %v451 = vsel %vm182, %v406, 0
    %v454 = vsel %vm182, %v407, 0
    %456 = vmatprep.subr.mxu0 0.0
    %457 = vmatpush1.msra.mxu0 0.0
    %458 = vmatprep.subr.mxu0 0.0
    %459 = vmatpush1.msra.mxu0 0.0
    %460 = vmatprep.subr.mxu0 0.0
    %461 = vmatpush1.msra.mxu0 0.0
    %462 = vmatprep.subr.mxu0 0.0
    %463 = vmatpush1.msra.mxu0 0.0
    %464 = vmatprep.subr.mxu0 0.0
    %465 = vmatpush1.msra.mxu0 0.0
    %466 = vmatprep.subr.mxu0 0.0
    %467 = vmatpush1.msra.mxu0 0.0
    %468 = vmatprep.subr.mxu0 0.0
    %469 = vmatpush1.msra.mxu0 0.0
    %470 = vmatprep.subr.mxu0 0.0
    %471 = vmatpush1.msra.mxu0 0.0
    %472 = vmatprep.subr.mxu0 0.0
    %473 = vmatpush1.msra.mxu0 0.0
    %474 = vmatprep.subr.mxu0 0.0
    %475 = vmatpush1.msra.mxu0 0.0
    %476 = vmatprep.subr.mxu0 0.0
    %477 = vmatpush1.msra.mxu0 %v88
    %478 = vmatprep.subr.mxu0 0.0
    %479 = vmatpush1.msra.mxu0 %v87
    %480 = vmatprep.subr.mxu0 0.0
    %481 = vmatpush1.msra.mxu0 %v86
    %482 = vmatprep.subr.mxu0 0.0
    %483 = vmatpush1.msra.mxu0 %v85
    %484 = vmatprep.subr.mxu0 0.0
    %485 = vmatpush1.msra.mxu0 %v84
    %486 = vmatprep.subr.mxu0 0.0
    %487 = vmatpush1.msra.mxu0 %v83
    %488 = vmatprep.subr.mxu0 0.0
    %489 = vmatpush2.msra.mxu0 0.0
    %490 = vmatprep.subr.mxu0 0.0
    %491 = vmatpush2.msra.mxu0 0.0
    %492 = vmatprep.subr.mxu0 0.0
    %493 = vmatpush2.msra.mxu0 0.0
    %494 = vmatprep.subr.mxu0 0.0
    %495 = vmatpush2.msra.mxu0 0.0
    %496 = vmatprep.subr.mxu0 0.0
    %497 = vmatpush2.msra.mxu0 0.0
    %498 = vmatprep.subr.mxu0 0.0
    %499 = vmatpush2.msra.mxu0 0.0
    %500 = vmatprep.subr.mxu0 0.0
    %501 = vmatpush2.msra.mxu0 0.0
    %502 = vmatprep.subr.mxu0 0.0
    %503 = vmatpush2.msra.mxu0 0.0
    %504 = vmatprep.subr.mxu0 0.0
    %505 = vmatpush2.msra.mxu0 0.0
    %506 = vmatprep.subr.mxu0 0.0
    %507 = vmatpush2.msra.mxu0 0.0
    %508 = vmatprep.subr.mxu0 0.0
    %509 = vmatpush2.msra.mxu0 0.0
    %510 = vmatprep.subr.mxu0 0.0
    %511 = vmatpush2.msra.mxu0 0.0
    %512 = vmatprep.subr.mxu0 0.0
    %513 = vmatpush2.msra.mxu0 0.0
    %514 = vmatprep.subr.mxu0 0.0
    %515 = vmatpush2.msra.mxu0 0.0
    %516 = vmatprep.subr.mxu0 0.0
    %517 = vmatpush2.msra.mxu0 0.0
    %518 = vmatprep.subr.mxu0 0.0
    %519 = vmatpush2.msra.mxu0 0.0
    %520 = vmatprep.mubr.f32.mxu0 0.0
    %521 = vmatmul.mubr.f32.gmra.mxu0 %v409
    %v522 = vpop.f32.mrf.mxu0
    %v523 = vadd.f32 0.0, %v522
    %v524 = vpop.f32.mrf.mxu0
    %525 = vmatprep.mubr.f32.mxu0 0.0
    %526 = vmatmul.mubr.f32.gmra.mxu0 %v412
    %v527 = vpop.f32.mrf.mxu0
    %v528 = vadd.f32 0.0, %v527
    %v529 = vpop.f32.mrf.mxu0
    %530 = vmatprep.mubr.f32.mxu0 0.0
    %531 = vmatmul.mubr.f32.gmra.mxu0 %v415
    %v532 = vpop.f32.mrf.mxu0
    %v533 = vadd.f32 0.0, %v532
    %v534 = vpop.f32.mrf.mxu0
    %535 = vmatprep.mubr.f32.mxu0 0.0
    %536 = vmatmul.mubr.f32.gmra.mxu0 %v418
    %v537 = vpop.f32.mrf.mxu0
    %v538 = vadd.f32 0.0, %v537
    %v539 = vpop.f32.mrf.mxu0
    %540 = vmatprep.mubr.f32.mxu0 0.0
    %541 = vmatmul.mubr.f32.gmra.mxu0 %v421
    %v542 = vpop.f32.mrf.mxu0
    %v543 = vadd.f32 0.0, %v542
    %v544 = vpop.f32.mrf.mxu0
    %545 = vmatprep.mubr.f32.mxu0 0.0
    %546 = vmatmul.mubr.f32.gmra.mxu0 %v424
    %v547 = vpop.f32.mrf.mxu0
    %v548 = vadd.f32 0.0, %v547
    %v549 = vpop.f32.mrf.mxu0
    %550 = vmatprep.mubr.f32.mxu0 0.0
    %551 = vmatmul.mubr.f32.gmra.mxu0 %v427
    %v552 = vpop.f32.mrf.mxu0
    %v553 = vadd.f32 0.0, %v552
    %v554 = vpop.f32.mrf.mxu0
    %555 = vmatprep.mubr.f32.mxu0 0.0
    %556 = vmatmul.mubr.f32.gmra.mxu0 %v430
    %v557 = vpop.f32.mrf.mxu0
    %v558 = vadd.f32 0.0, %v557
    %v559 = vpop.f32.mrf.mxu0
    %560 = vmatprep.mubr.f32.mxu0 0.0
    %561 = vmatmul.mubr.f32.gmra.mxu0 %v433
    %v562 = vpop.f32.mrf.mxu0
    %v563 = vadd.f32 0.0, %v562
    %v564 = vpop.f32.mrf.mxu0
    %565 = vmatprep.mubr.f32.mxu0 0.0
    %566 = vmatmul.mubr.f32.gmra.mxu0 %v436
    %v567 = vpop.f32.mrf.mxu0
    %v568 = vadd.f32 0.0, %v567
    %v569 = vpop.f32.mrf.mxu0
    %570 = vmatprep.mubr.f32.mxu0 0.0
    %571 = vmatmul.mubr.f32.gmra.mxu0 %v439
    %v572 = vpop.f32.mrf.mxu0
    %v573 = vadd.f32 0.0, %v572
    %v574 = vpop.f32.mrf.mxu0
    %575 = vmatprep.mubr.f32.mxu0 0.0
    %576 = vmatmul.mubr.f32.gmra.mxu0 %v442
    %v577 = vpop.f32.mrf.mxu0
    %v578 = vadd.f32 0.0, %v577
    %v579 = vpop.f32.mrf.mxu0
    %580 = vmatprep.mubr.f32.mxu0 0.0
    %581 = vmatmul.mubr.f32.gmra.mxu0 %v445
    %v582 = vpop.f32.mrf.mxu0
    %v583 = vadd.f32 0.0, %v582
    %v584 = vpop.f32.mrf.mxu0
    %585 = vmatprep.mubr.f32.mxu0 0.0
    %586 = vmatmul.mubr.f32.gmra.mxu0 %v448
    %v587 = vpop.f32.mrf.mxu0
    %v588 = vadd.f32 0.0, %v587
    %v589 = vpop.f32.mrf.mxu0
    %590 = vmatprep.mubr.f32.mxu0 0.0
    %591 = vmatmul.mubr.f32.gmra.mxu0 %v451
    %v592 = vpop.f32.mrf.mxu0
    %v593 = vadd.f32 0.0, %v592
    %v594 = vpop.f32.mrf.mxu0
    %595 = vmatprep.mubr.f32.mxu0 0.0
    %596 = vmatmul.mubr.f32.gmra.mxu0 %v454
    %v597 = vpop.f32.mrf.mxu0
    %v598 = vadd.f32 0.0, %v597
    %v599 = vpop.f32.mrf.mxu0
    %600 = vdwg.mxu0
    %v601 = vmax.f32 %v298, 0.0
    %v602 = vmax.f32 %v303, 0.0
    %v603 = vmax.f32 %v308, 0.0
    %v604 = vmax.f32 %v313, 0.0
    %v605 = vmax.f32 %v318, 0.0
    %v606 = vmax.f32 %v323, 0.0
    %v607 = vmax.f32 %v328, 0.0
    %v608 = vmax.f32 %v333, 0.0
    %v609 = vmax.f32 %v338, 0.0
    %v610 = vmax.f32 %v343, 0.0
    %v611 = vmax.f32 %v348, 0.0
    %v612 = vmax.f32 %v353, 0.0
    %v613 = vmax.f32 %v358, 0.0
    %v614 = vmax.f32 %v363, 0.0
    %v615 = vmax.f32 %v368, 0.0
    %v616 = vmax.f32 %v373, 0.0
    %v617 = vmax.f32 %v523, 0.0
    %v618 = vmax.f32 %v528, 0.0
    %v619 = vmax.f32 %v533, 0.0
    %v620 = vmax.f32 %v538, 0.0
    %v621 = vmax.f32 %v543, 0.0
    %v622 = vmax.f32 %v548, 0.0
    %v623 = vmax.f32 %v553, 0.0
    %v624 = vmax.f32 %v558, 0.0
    %v625 = vmax.f32 %v563, 0.0
    %v626 = vmax.f32 %v568, 0.0
    %v627 = vmax.f32 %v573, 0.0
    %v628 = vmax.f32 %v578, 0.0
    %v629 = vmax.f32 %v583, 0.0
    %v630 = vmax.f32 %v588, 0.0
    %v631 = vmax.f32 %v593, 0.0
    %v632 = vmax.f32 %v598, 0.0
    %vm633 = vcmask 523264
    %v635 = vsel %vm633, %v617, 0
    %v638 = vsel %vm633, %v618, 0
    %v641 = vsel %vm633, %v619, 0
    %v644 = vsel %vm633, %v620, 0
    %v647 = vsel %vm633, %v621, 0
    %v650 = vsel %vm633, %v622, 0
    %v653 = vsel %vm633, %v623, 0
    %v656 = vsel %vm633, %v624, 0
    %v659 = vsel %vm633, %v625, 0
    %v662 = vsel %vm633, %v626, 0
    %v665 = vsel %vm633, %v627, 0
    %v668 = vsel %vm633, %v628, 0
    %v671 = vsel %vm633, %v629, 0
    %v674 = vsel %vm633, %v630, 0
    %v677 = vsel %vm633, %v631, 0
    %v680 = vsel %vm633, %v632, 0
    %682 = vmatprep.subr.mxu0 0.0
    %683 = vmatpush1.msra.mxu0 0.0
    %684 = vmatprep.subr.mxu0 0.0
    %685 = vmatpush1.msra.mxu0 0.0
    %686 = vmatprep.subr.mxu0 0.0
    %687 = vmatpush1.msra.mxu0 0.0
    %688 = vmatprep.subr.mxu0 0.0
    %689 = vmatpush1.msra.mxu0 0.0
    %690 = vmatprep.subr.mxu0 0.0
    %691 = vmatpush1.msra.mxu0 0.0
    %692 = vmatprep.subr.mxu0 0.0
    %693 = vmatpush1.msra.mxu0 0.0
    %694 = vmatprep.subr.mxu0 0.0
    %695 = vmatpush1.msra.mxu0 0.0
    %696 = vmatprep.subr.mxu0 0.0
    %697 = vmatpush1.msra.mxu0 0.0
    %698 = vmatprep.subr.mxu0 0.0
    %699 = vmatpush1.msra.mxu0 %v104
    %700 = vmatprep.subr.mxu0 0.0
    %701 = vmatpush1.msra.mxu0 %v103
    %702 = vmatprep.subr.mxu0 0.0
    %703 = vmatpush1.msra.mxu0 %v102
    %704 = vmatprep.subr.mxu0 0.0
    %705 = vmatpush1.msra.mxu0 %v101
    %706 = vmatprep.subr.mxu0 0.0
    %707 = vmatpush1.msra.mxu0 %v100
    %708 = vmatprep.subr.mxu0 0.0
    %709 = vmatpush1.msra.mxu0 %v99
    %710 = vmatprep.subr.mxu0 0.0
    %711 = vmatpush1.msra.mxu0 %v98
    %712 = vmatprep.subr.mxu0 0.0
    %713 = vmatpush1.msra.mxu0 %v97
    %714 = vmatprep.subr.mxu0 0.0
    %715 = vmatpush2.msra.mxu0 0.0
    %716 = vmatprep.subr.mxu0 0.0
    %717 = vmatpush2.msra.mxu0 0.0
    %718 = vmatprep.subr.mxu0 0.0
    %719 = vmatpush2.msra.mxu0 0.0
    %720 = vmatprep.subr.mxu0 0.0
    %721 = vmatpush2.msra.mxu0 0.0
    %722 = vmatprep.subr.mxu0 0.0
    %723 = vmatpush2.msra.mxu0 0.0
    %724 = vmatprep.subr.mxu0 0.0
    %725 = vmatpush2.msra.mxu0 0.0
    %726 = vmatprep.subr.mxu0 0.0
    %727 = vmatpush2.msra.mxu0 0.0
    %728 = vmatprep.subr.mxu0 0.0
    %729 = vmatpush2.msra.mxu0 0.0
    %730 = vmatprep.subr.mxu0 0.0
    %731 = vmatpush2.msra.mxu0 0.0
    %732 = vmatprep.subr.mxu0 0.0
    %733 = vmatpush2.msra.mxu0 0.0
    %734 = vmatprep.subr.mxu0 0.0
    %735 = vmatpush2.msra.mxu0 0.0
    %736 = vmatprep.subr.mxu0 0.0
    %737 = vmatpush2.msra.mxu0 0.0
    %738 = vmatprep.subr.mxu0 0.0
    %739 = vmatpush2.msra.mxu0 0.0
    %740 = vmatprep.subr.mxu0 0.0
    %741 = vmatpush2.msra.mxu0 0.0
    %742 = vmatprep.subr.mxu0 0.0
    %743 = vmatpush2.msra.mxu0 0.0
    %744 = vmatprep.subr.mxu0 0.0
    %745 = vmatpush2.msra.mxu0 0.0
    %746 = vmatprep.mubr.f32.mxu0 0.0
    %747 = vmatmul.mubr.f32.gmra.mxu0 %v635
    %v748 = vpop.f32.mrf.mxu0
    %v749 = vadd.f32 0.0, %v748
    %v750 = vpop.f32.mrf.mxu0
    %751 = vmatprep.mubr.f32.mxu0 0.0
    %752 = vmatmul.mubr.f32.gmra.mxu0 %v638
    %v753 = vpop.f32.mrf.mxu0
    %v754 = vadd.f32 0.0, %v753
    %v755 = vpop.f32.mrf.mxu0
    %756 = vmatprep.mubr.f32.mxu0 0.0
    %757 = vmatmul.mubr.f32.gmra.mxu0 %v641
    %v758 = vpop.f32.mrf.mxu0
    %v759 = vadd.f32 0.0, %v758
    %v760 = vpop.f32.mrf.mxu0
    %761 = vmatprep.mubr.f32.mxu0 0.0
    %762 = vmatmul.mubr.f32.gmra.mxu0 %v644
    %v763 = vpop.f32.mrf.mxu0
    %v764 = vadd.f32 0.0, %v763
    %v765 = vpop.f32.mrf.mxu0
    %766 = vmatprep.mubr.f32.mxu0 0.0
    %767 = vmatmul.mubr.f32.gmra.mxu0 %v647
    %v768 = vpop.f32.mrf.mxu0
    %v769 = vadd.f32 0.0, %v768
    %v770 = vpop.f32.mrf.mxu0
    %771 = vmatprep.mubr.f32.mxu0 0.0
    %772 = vmatmul.mubr.f32.gmra.mxu0 %v650
    %v773 = vpop.f32.mrf.mxu0
    %v774 = vadd.f32 0.0, %v773
    %v775 = vpop.f32.mrf.mxu0
    %776 = vmatprep.mubr.f32.mxu0 0.0
    %777 = vmatmul.mubr.f32.gmra.mxu0 %v653
    %v778 = vpop.f32.mrf.mxu0
    %v779 = vadd.f32 0.0, %v778
    %v780 = vpop.f32.mrf.mxu0
    %781 = vmatprep.mubr.f32.mxu0 0.0
    %782 = vmatmul.mubr.f32.gmra.mxu0 %v656
    %v783 = vpop.f32.mrf.mxu0
    %v784 = vadd.f32 0.0, %v783
    %v785 = vpop.f32.mrf.mxu0
    %786 = vmatprep.mubr.f32.mxu0 0.0
    %787 = vmatmul.mubr.f32.gmra.mxu0 %v659
    %v788 = vpop.f32.mrf.mxu0
    %v789 = vadd.f32 0.0, %v788
    %v790 = vpop.f32.mrf.mxu0
    %791 = vmatprep.mubr.f32.mxu0 0.0
    %792 = vmatmul.mubr.f32.gmra.mxu0 %v662
    %v793 = vpop.f32.mrf.mxu0
    %v794 = vadd.f32 0.0, %v793
    %v795 = vpop.f32.mrf.mxu0
    %796 = vmatprep.mubr.f32.mxu0 0.0
    %797 = vmatmul.mubr.f32.gmra.mxu0 %v665
    %v798 = vpop.f32.mrf.mxu0
    %v799 = vadd.f32 0.0, %v798
    %v800 = vpop.f32.mrf.mxu0
    %801 = vmatprep.mubr.f32.mxu0 0.0
    %802 = vmatmul.mubr.f32.gmra.mxu0 %v668
    %v803 = vpop.f32.mrf.mxu0
    %v804 = vadd.f32 0.0, %v803
    %v805 = vpop.f32.mrf.mxu0
    %806 = vmatprep.mubr.f32.mxu0 0.0
    %807 = vmatmul.mubr.f32.gmra.mxu0 %v671
    %v808 = vpop.f32.mrf.mxu0
    %v809 = vadd.f32 0.0, %v808
    %v810 = vpop.f32.mrf.mxu0
    %811 = vmatprep.mubr.f32.mxu0 0.0
    %812 = vmatmul.mubr.f32.gmra.mxu0 %v674
    %v813 = vpop.f32.mrf.mxu0
    %v814 = vadd.f32 0.0, %v813
    %v815 = vpop.f32.mrf.mxu0
    %816 = vmatprep.mubr.f32.mxu0 0.0
    %817 = vmatmul.mubr.f32.gmra.mxu0 %v677
    %v818 = vpop.f32.mrf.mxu0
    %v819 = vadd.f32 0.0, %v818
    %v820 = vpop.f32.mrf.mxu0
    %821 = vmatprep.mubr.f32.mxu0 0.0
    %822 = vmatmul.mubr.f32.gmra.mxu0 %v680
    %v823 = vpop.f32.mrf.mxu0
    %v824 = vadd.f32 0.0, %v823
    %v825 = vpop.f32.mrf.mxu0
    %826 = vdwg.mxu0
    %v828 = vsel %vm633, %v601, 0
    %v831 = vsel %vm633, %v602, 0
    %v834 = vsel %vm633, %v603, 0
    %v837 = vsel %vm633, %v604, 0
    %v840 = vsel %vm633, %v605, 0
    %v843 = vsel %vm633, %v606, 0
    %v846 = vsel %vm633, %v607, 0
    %v849 = vsel %vm633, %v608, 0
    %v852 = vsel %vm633, %v609, 0
    %v855 = vsel %vm633, %v610, 0
    %v858 = vsel %vm633, %v611, 0
    %v861 = vsel %vm633, %v612, 0
    %v864 = vsel %vm633, %v613, 0
    %v867 = vsel %vm633, %v614, 0
    %v870 = vsel %vm633, %v615, 0
    %v873 = vsel %vm633, %v616, 0
    %875 = vmatprep.subr.mxu0 0.0
    %876 = vmatpush1.msra.mxu0 0.0
    %877 = vmatprep.subr.mxu0 0.0
    %878 = vmatpush1.msra.mxu0 0.0
    %879 = vmatprep.subr.mxu0 0.0
    %880 = vmatpush1.msra.mxu0 0.0
    %881 = vmatprep.subr.mxu0 0.0
    %882 = vmatpush1.msra.mxu0 0.0
    %883 = vmatprep.subr.mxu0 0.0
    %884 = vmatpush1.msra.mxu0 0.0
    %885 = vmatprep.subr.mxu0 0.0
    %886 = vmatpush1.msra.mxu0 0.0
    %887 = vmatprep.subr.mxu0 0.0
    %888 = vmatpush1.msra.mxu0 0.0
    %889 = vmatprep.subr.mxu0 0.0
    %890 = vmatpush1.msra.mxu0 0.0
    %891 = vmatprep.subr.mxu0 0.0
    %892 = vmatpush1.msra.mxu0 %v96
    %893 = vmatprep.subr.mxu0 0.0
    %894 = vmatpush1.msra.mxu0 %v95
    %895 = vmatprep.subr.mxu0 0.0
    %896 = vmatpush1.msra.mxu0 %v94
    %897 = vmatprep.subr.mxu0 0.0
    %898 = vmatpush1.msra.mxu0 %v93
    %899 = vmatprep.subr.mxu0 0.0
    %900 = vmatpush1.msra.mxu0 %v92
    %901 = vmatprep.subr.mxu0 0.0
    %902 = vmatpush1.msra.mxu0 %v91
    %903 = vmatprep.subr.mxu0 0.0
    %904 = vmatpush1.msra.mxu0 %v90
    %905 = vmatprep.subr.mxu0 0.0
    %906 = vmatpush1.msra.mxu0 %v89
    %907 = vmatprep.subr.mxu0 0.0
    %908 = vmatpush2.msra.mxu0 0.0
    %909 = vmatprep.subr.mxu0 0.0
    %910 = vmatpush2.msra.mxu0 0.0
    %911 = vmatprep.subr.mxu0 0.0
    %912 = vmatpush2.msra.mxu0 0.0
    %913 = vmatprep.subr.mxu0 0.0
    %914 = vmatpush2.msra.mxu0 0.0
    %915 = vmatprep.subr.mxu0 0.0
    %916 = vmatpush2.msra.mxu0 0.0
    %917 = vmatprep.subr.mxu0 0.0
    %918 = vmatpush2.msra.mxu0 0.0
    %919 = vmatprep.subr.mxu0 0.0
    %920 = vmatpush2.msra.mxu0 0.0
    %921 = vmatprep.subr.mxu0 0.0
    %922 = vmatpush2.msra.mxu0 0.0
    %923 = vmatprep.subr.mxu0 0.0
    %924 = vmatpush2.msra.mxu0 0.0
    %925 = vmatprep.subr.mxu0 0.0
    %926 = vmatpush2.msra.mxu0 0.0
    %927 = vmatprep.subr.mxu0 0.0
    %928 = vmatpush2.msra.mxu0 0.0
    %929 = vmatprep.subr.mxu0 0.0
    %930 = vmatpush2.msra.mxu0 0.0
    %931 = vmatprep.subr.mxu0 0.0
    %932 = vmatpush2.msra.mxu0 0.0
    %933 = vmatprep.subr.mxu0 0.0
    %934 = vmatpush2.msra.mxu0 0.0
    %935 = vmatprep.subr.mxu0 0.0
    %936 = vmatpush2.msra.mxu0 0.0
    %937 = vmatprep.subr.mxu0 0.0
    %938 = vmatpush2.msra.mxu0 0.0
    %939 = vmatprep.mubr.f32.mxu0 0.0
    %940 = vmatmul.mubr.f32.gmra.mxu0 %v828
    %v941 = vpop.f32.mrf.mxu0
    %v942 = vadd.f32 %v749, %v941
    %v943 = vpop.f32.mrf.mxu0
    %944 = vmatprep.mubr.f32.mxu0 0.0
    %945 = vmatmul.mubr.f32.gmra.mxu0 %v831
    %v946 = vpop.f32.mrf.mxu0
    %v947 = vadd.f32 %v754, %v946
    %v948 = vpop.f32.mrf.mxu0
    %949 = vmatprep.mubr.f32.mxu0 0.0
    %950 = vmatmul.mubr.f32.gmra.mxu0 %v834
    %v951 = vpop.f32.mrf.mxu0
    %v952 = vadd.f32 %v759, %v951
    %v953 = vpop.f32.mrf.mxu0
    %954 = vmatprep.mubr.f32.mxu0 0.0
    %955 = vmatmul.mubr.f32.gmra.mxu0 %v837
    %v956 = vpop.f32.mrf.mxu0
    %v957 = vadd.f32 %v764, %v956
    %v958 = vpop.f32.mrf.mxu0
    %959 = vmatprep.mubr.f32.mxu0 0.0
    %960 = vmatmul.mubr.f32.gmra.mxu0 %v840
    %v961 = vpop.f32.mrf.mxu0
    %v962 = vadd.f32 %v769, %v961
    %v963 = vpop.f32.mrf.mxu0
    %964 = vmatprep.mubr.f32.mxu0 0.0
    %965 = vmatmul.mubr.f32.gmra.mxu0 %v843
    %v966 = vpop.f32.mrf.mxu0
    %v967 = vadd.f32 %v774, %v966
    %v968 = vpop.f32.mrf.mxu0
    %969 = vmatprep.mubr.f32.mxu0 0.0
    %970 = vmatmul.mubr.f32.gmra.mxu0 %v846
    %v971 = vpop.f32.mrf.mxu0
    %v972 = vadd.f32 %v779, %v971
    %v973 = vpop.f32.mrf.mxu0
    %974 = vmatprep.mubr.f32.mxu0 0.0
    %975 = vmatmul.mubr.f32.gmra.mxu0 %v849
    %v976 = vpop.f32.mrf.mxu0
    %v977 = vadd.f32 %v784, %v976
    %v978 = vpop.f32.mrf.mxu0
    %979 = vmatprep.mubr.f32.mxu0 0.0
    %980 = vmatmul.mubr.f32.gmra.mxu0 %v852
    %v981 = vpop.f32.mrf.mxu0
    %v982 = vadd.f32 %v789, %v981
    %v983 = vpop.f32.mrf.mxu0
    %984 = vmatprep.mubr.f32.mxu0 0.0
    %985 = vmatmul.mubr.f32.gmra.mxu0 %v855
    %v986 = vpop.f32.mrf.mxu0
    %v987 = vadd.f32 %v794, %v986
    %v988 = vpop.f32.mrf.mxu0
    %989 = vmatprep.mubr.f32.mxu0 0.0
    %990 = vmatmul.mubr.f32.gmra.mxu0 %v858
    %v991 = vpop.f32.mrf.mxu0
    %v992 = vadd.f32 %v799, %v991
    %v993 = vpop.f32.mrf.mxu0
    %994 = vmatprep.mubr.f32.mxu0 0.0
    %995 = vmatmul.mubr.f32.gmra.mxu0 %v861
    %v996 = vpop.f32.mrf.mxu0
    %v997 = vadd.f32 %v804, %v996
    %v998 = vpop.f32.mrf.mxu0
    %999 = vmatprep.mubr.f32.mxu0 0.0
    %1000 = vmatmul.mubr.f32.gmra.mxu0 %v864
    %v1001 = vpop.f32.mrf.mxu0
    %v1002 = vadd.f32 %v809, %v1001
    %v1003 = vpop.f32.mrf.mxu0
    %1004 = vmatprep.mubr.f32.mxu0 0.0
    %1005 = vmatmul.mubr.f32.gmra.mxu0 %v867
    %v1006 = vpop.f32.mrf.mxu0
    %v1007 = vadd.f32 %v814, %v1006
    %v1008 = vpop.f32.mrf.mxu0
    %1009 = vmatprep.mubr.f32.mxu0 0.0
    %1010 = vmatmul.mubr.f32.gmra.mxu0 %v870
    %v1011 = vpop.f32.mrf.mxu0
    %v1012 = vadd.f32 %v819, %v1011
    %v1013 = vpop.f32.mrf.mxu0
    %1014 = vmatprep.mubr.f32.mxu0 0.0
    %1015 = vmatmul.mubr.f32.gmra.mxu0 %v873
    %v1016 = vpop.f32.mrf.mxu0
    %v1017 = vadd.f32 %v824, %v1016
    %v1018 = vpop.f32.mrf.mxu0
    %1019 = vdwg.mxu0
    %v1021 = vlaneseq
    %v1022 = vshrl.u32 %v1021, 7
    %v1023 = vsub.s32 0, %v1022
    %v1024 = vrot.slane %v105, %v1023
    %v1026 = vadd.f32 %v942, %v1024
    %v1027 = vadd.f32 %v947, %v1024
    %v1028 = vadd.f32 %v952, %v1024
    %v1029 = vadd.f32 %v957, %v1024
    %v1030 = vadd.f32 %v962, %v1024
    %v1031 = vadd.f32 %v967, %v1024
    %v1032 = vadd.f32 %v972, %v1024
    %v1033 = vadd.f32 %v977, %v1024
    %v1034 = vadd.f32 %v982, %v1024
    %v1035 = vadd.f32 %v987, %v1024
    %v1036 = vadd.f32 %v992, %v1024
    %v1037 = vadd.f32 %v997, %v1024
    %v1038 = vadd.f32 %v1002, %v1024
    %v1039 = vadd.f32 %v1007, %v1024
    %v1040 = vadd.f32 %v1012, %v1024
    %v1041 = vadd.f32 %v1017, %v1024
    %v1042 = vmax.f32 %v1026, 0.0
    %v1043 = vmax.f32 %v1027, 0.0
    %v1044 = vmax.f32 %v1028, 0.0
    %v1045 = vmax.f32 %v1029, 0.0
    %v1046 = vmax.f32 %v1030, 0.0
    %v1047 = vmax.f32 %v1031, 0.0
    %v1048 = vmax.f32 %v1032, 0.0
    %v1049 = vmax.f32 %v1033, 0.0
    %v1050 = vmax.f32 %v1034, 0.0
    %v1051 = vmax.f32 %v1035, 0.0
    %v1052 = vmax.f32 %v1036, 0.0
    %v1053 = vmax.f32 %v1037, 0.0
    %v1054 = vmax.f32 %v1038, 0.0
    %v1055 = vmax.f32 %v1039, 0.0
    %v1056 = vmax.f32 %v1040, 0.0
    %v1057 = vmax.f32 %v1041, 0.0
    %v1058 = vstv %s107
    %v1060 = vsel %vm633, %v106, 0
    %v1063 = vsel %vm633, %v1042, 0
    %v1066 = vsel %vm633, %v1043, 0
    %v1069 = vsel %vm633, %v1044, 0
    %v1072 = vsel %vm633, %v1045, 0
    %v1075 = vsel %vm633, %v1046, 0
    %v1078 = vsel %vm633, %v1047, 0
    %v1081 = vsel %vm633, %v1048, 0
    %v1084 = vsel %vm633, %v1049, 0
    %v1087 = vsel %vm633, %v1050, 0
    %v1090 = vsel %vm633, %v1051, 0
    %v1093 = vsel %vm633, %v1052, 0
    %v1096 = vsel %vm633, %v1053, 0
    %v1099 = vsel %vm633, %v1054, 0
    %v1102 = vsel %vm633, %v1055, 0
    %v1105 = vsel %vm633, %v1056, 0
    %v1108 = vsel %vm633, %v1057, 0
    %1110 = vmatprep.subr.mxu0 0.0
    %1111 = vmatpush1.xpose.msra.mxu0 %v1108
    %1112 = vmatprep.subr.mxu0 0.0
    %1113 = vmatpush1.xpose.msra.mxu0 %v1105
    %1114 = vmatprep.subr.mxu0 0.0
    %1115 = vmatpush1.xpose.msra.mxu0 %v1102
    %1116 = vmatprep.subr.mxu0 0.0
    %1117 = vmatpush1.xpose.msra.mxu0 %v1099
    %1118 = vmatprep.subr.mxu0 0.0
    %1119 = vmatpush1.xpose.msra.mxu0 %v1096
    %1120 = vmatprep.subr.mxu0 0.0
    %1121 = vmatpush1.xpose.msra.mxu0 %v1093
    %1122 = vmatprep.subr.mxu0 0.0
    %1123 = vmatpush1.xpose.msra.mxu0 %v1090
    %1124 = vmatprep.subr.mxu0 0.0
    %1125 = vmatpush1.xpose.msra.mxu0 %v1087
    %1126 = vmatprep.subr.mxu0 0.0
    %1127 = vmatpush1.xpose.msra.mxu0 %v1084
    %1128 = vmatprep.subr.mxu0 0.0
    %1129 = vmatpush1.xpose.msra.mxu0 %v1081
    %1130 = vmatprep.subr.mxu0 0.0
    %1131 = vmatpush1.xpose.msra.mxu0 %v1078
    %1132 = vmatprep.subr.mxu0 0.0
    %1133 = vmatpush1.xpose.msra.mxu0 %v1075
    %1134 = vmatprep.subr.mxu0 0.0
    %1135 = vmatpush1.xpose.msra.mxu0 %v1072
    %1136 = vmatprep.subr.mxu0 0.0
    %1137 = vmatpush1.xpose.msra.mxu0 %v1069
    %1138 = vmatprep.subr.mxu0 0.0
    %1139 = vmatpush1.xpose.msra.mxu0 %v1066
    %1140 = vmatprep.subr.mxu0 0.0
    %1141 = vmatpush1.xpose.msra.mxu0 %v1063
    %1142 = vmatprep.subr.mxu0 0.0
    %1143 = vmatpush2.xpose.msra.mxu0 0.0
    %1144 = vmatprep.subr.mxu0 0.0
    %1145 = vmatpush2.xpose.msra.mxu0 0.0
    %1146 = vmatprep.subr.mxu0 0.0
    %1147 = vmatpush2.xpose.msra.mxu0 0.0
    %1148 = vmatprep.subr.mxu0 0.0
    %1149 = vmatpush2.xpose.msra.mxu0 0.0
    %1150 = vmatprep.subr.mxu0 0.0
    %1151 = vmatpush2.xpose.msra.mxu0 0.0
    %1152 = vmatprep.subr.mxu0 0.0
    %1153 = vmatpush2.xpose.msra.mxu0 0.0
    %1154 = vmatprep.subr.mxu0 0.0
    %1155 = vmatpush2.xpose.msra.mxu0 0.0
    %1156 = vmatprep.subr.mxu0 0.0
    %1157 = vmatpush2.xpose.msra.mxu0 0.0
    %1158 = vmatprep.subr.mxu0 0.0
    %1159 = vmatpush2.xpose.msra.mxu0 0.0
    %1160 = vmatprep.subr.mxu0 0.0
    %1161 = vmatpush2.xpose.msra.mxu0 0.0
    %1162 = vmatprep.subr.mxu0 0.0
    %1163 = vmatpush2.xpose.msra.mxu0 0.0
    %1164 = vmatprep.subr.mxu0 0.0
    %1165 = vmatpush2.xpose.msra.mxu0 0.0
    %1166 = vmatprep.subr.mxu0 0.0
    %1167 = vmatpush2.xpose.msra.mxu0 0.0
    %1168 = vmatprep.subr.mxu0 0.0
    %1169 = vmatpush2.xpose.msra.mxu0 0.0
    %1170 = vmatprep.subr.mxu0 0.0
    %1171 = vmatpush2.xpose.msra.mxu0 0.0
    %1172 = vmatprep.subr.mxu0 0.0
    %1173 = vmatpush2.xpose.msra.mxu0 0.0
    %1174 = vmatprep.mubr.f32.mxu0 0.0
    %1175 = vmatmul.mubr.f32.gmra.mxu0 %v1060
    %v1176 = vpop.f32.mrf.mxu0
    %v1177 = vadd.f32 %v1058, %v1176
    %v1178 = vpop.f32.mrf.mxu0
    %1179 = vdwg.mxu0
    %1180 = vst [vmem:[#allocation11] sm:$0x1] %v1177
    %v1181 = vlaneseq
    %v1182 = vshrl.u32 %v1181, 7
    %v1183 = vsub.s32 1, %v1182
    %v1184 = vrot.slane %v108, %v1183
    %vm1185 = vcmp.eq.s32.totalorder %v112, %v1184
    %vm1186 = vcmp.eq.s32.totalorder %v113, %v1184
    %vm1187 = vcmp.eq.s32.totalorder %v114, %v1184
    %vm1188 = vcmp.eq.s32.totalorder %v115, %v1184
    %vm1189 = vcmp.eq.s32.totalorder %v116, %v1184
    %vm1190 = vcmp.eq.s32.totalorder %v117, %v1184
    %v1191 = vsel %vm1185, 1.0, 0.0
    %v1192 = vsel %vm1186, 1.0, 0.0
    %v1193 = vsel %vm1187, 1.0, 0.0
    %v1194 = vsel %vm1188, 1.0, 0.0
    %v1195 = vsel %vm1189, 1.0, 0.0
    %v1196 = vsel %vm1190, 1.0, 0.0
    %v1197 = vlaneseq
    %v1198 = vshrl.u32 %v1197, 7
    %v1199 = vsub.s32 1, %v1198
    %v1200 = vrot.slane %v110, %v1199
    %vm1201 = vcmp.eq.s32.totalorder %v112, %v1200
    %vm1202 = vcmp.eq.s32.totalorder %v113, %v1200
    %vm1203 = vcmp.eq.s32.totalorder %v114, %v1200
    %vm1204 = vcmp.eq.s32.totalorder %v115, %v1200
    %vm1205 = vcmp.eq.s32.totalorder %v116, %v1200
    %vm1206 = vcmp.eq.s32.totalorder %v117, %v1200
    %v1207 = vsel %vm1201, 1.0, 0.0
    %v1208 = vsel %vm1202, 1.0, 0.0
    %v1209 = vsel %vm1203, 1.0, 0.0
    %v1210 = vsel %vm1204, 1.0, 0.0
    %v1211 = vsel %vm1205, 1.0, 0.0
    %v1212 = vsel %vm1206, 1.0, 0.0
    %1213 = vxpose.xlu0.b32.start [1/16] %v1191, 128
    %1214 = vxpose.xlu0.b32.cont [2/16] %v1192, 128
    %1215 = vxpose.xlu0.b32.cont [3/16] %v1193, 128
    %1216 = vxpose.xlu0.b32.cont [4/16] %v1194, 128
    %1217 = vxpose.xlu0.b32.cont [5/16] %v1195, 128
    %1218 = vxpose.xlu0.b32.cont [6/16] %v1196, 128
    %1219 = vxpose.xlu0.b32.cont [7/16] 0.0, 128
    %1220 = vxpose.xlu0.b32.cont [8/16] 0.0, 128
    %1221 = vxpose.xlu0.b32.cont [9/16] 0.0, 128
    %1222 = vxpose.xlu0.b32.cont [10/16] 0.0, 128
    %1223 = vxpose.xlu0.b32.cont [11/16] 0.0, 128
    %1224 = vxpose.xlu0.b32.cont [12/16] 0.0, 128
    %1225 = vxpose.xlu0.b32.cont [13/16] 0.0, 128
    %1226 = vxpose.xlu0.b32.cont [14/16] 0.0, 128
    %1227 = vxpose.xlu0.b32.cont [15/16] 0.0, 128
    %1228 = vxpose.xlu0.b32.end [16/16] 0.0, 128
    %v1229 = vpop.trf.xlu0
    %v1230 = vpop.trf.xlu0
    %v1231 = vpop.trf.xlu0
    %v1232 = vpop.trf.xlu0
    %v1233 = vpop.trf.xlu0
    %v1234 = vpop.trf.xlu0
    %v1235 = vpop.trf.xlu0
    %v1236 = vpop.trf.xlu0
    %v1237 = vpop.trf.xlu0
    %v1238 = vpop.trf.xlu0
    %v1239 = vpop.trf.xlu0
    %v1240 = vpop.trf.xlu0
    %v1241 = vpop.trf.xlu0
    %v1242 = vpop.trf.xlu0
    %v1243 = vpop.trf.xlu0
    %v1244 = vpop.trf.xlu0
    %v1246 = vsel %vm182, %v1229, 0
    %v1249 = vsel %vm182, %v1230, 0
    %v1252 = vsel %vm182, %v1231, 0
    %v1255 = vsel %vm182, %v1232, 0
    %v1258 = vsel %vm182, %v1233, 0
    %v1261 = vsel %vm182, %v1234, 0
    %v1264 = vsel %vm182, %v1235, 0
    %v1267 = vsel %vm182, %v1236, 0
    %v1270 = vsel %vm182, %v1237, 0
    %v1273 = vsel %vm182, %v1238, 0
    %v1276 = vsel %vm182, %v1239, 0
    %v1279 = vsel %vm182, %v1240, 0
    %v1282 = vsel %vm182, %v1241, 0
    %v1285 = vsel %vm182, %v1242, 0
    %v1288 = vsel %vm182, %v1243, 0
    %v1291 = vsel %vm182, %v1244, 0
    %1293 = vmatprep.subr.mxu0 0.0
    %1294 = vmatpush1.msra.mxu0 0.0
    %1295 = vmatprep.subr.mxu0 0.0
    %1296 = vmatpush1.msra.mxu0 0.0
    %1297 = vmatprep.subr.mxu0 0.0
    %1298 = vmatpush1.msra.mxu0 0.0
    %1299 = vmatprep.subr.mxu0 0.0
    %1300 = vmatpush1.msra.mxu0 0.0
    %1301 = vmatprep.subr.mxu0 0.0
    %1302 = vmatpush1.msra.mxu0 0.0
    %1303 = vmatprep.subr.mxu0 0.0
    %1304 = vmatpush1.msra.mxu0 0.0
    %1305 = vmatprep.subr.mxu0 0.0
    %1306 = vmatpush1.msra.mxu0 0.0
    %1307 = vmatprep.subr.mxu0 0.0
    %1308 = vmatpush1.msra.mxu0 0.0
    %1309 = vmatprep.subr.mxu0 0.0
    %1310 = vmatpush1.msra.mxu0 0.0
    %1311 = vmatprep.subr.mxu0 0.0
    %1312 = vmatpush1.msra.mxu0 0.0
    %1313 = vmatprep.subr.mxu0 0.0
    %1314 = vmatpush1.msra.mxu0 %v88
    %1315 = vmatprep.subr.mxu0 0.0
    %1316 = vmatpush1.msra.mxu0 %v87
    %1317 = vmatprep.subr.mxu0 0.0
    %1318 = vmatpush1.msra.mxu0 %v86
    %1319 = vmatprep.subr.mxu0 0.0
    %1320 = vmatpush1.msra.mxu0 %v85
    %1321 = vmatprep.subr.mxu0 0.0
    %1322 = vmatpush1.msra.mxu0 %v84
    %1323 = vmatprep.subr.mxu0 0.0
    %1324 = vmatpush1.msra.mxu0 %v83
    %1325 = vmatprep.subr.mxu0 0.0
    %1326 = vmatpush2.msra.mxu0 0.0
    %1327 = vmatprep.subr.mxu0 0.0
    %1328 = vmatpush2.msra.mxu0 0.0
    %1329 = vmatprep.subr.mxu0 0.0
    %1330 = vmatpush2.msra.mxu0 0.0
    %1331 = vmatprep.subr.mxu0 0.0
    %1332 = vmatpush2.msra.mxu0 0.0
    %1333 = vmatprep.subr.mxu0 0.0
    %1334 = vmatpush2.msra.mxu0 0.0
    %1335 = vmatprep.subr.mxu0 0.0
    %1336 = vmatpush2.msra.mxu0 0.0
    %1337 = vmatprep.subr.mxu0 0.0
    %1338 = vmatpush2.msra.mxu0 0.0
    %1339 = vmatprep.subr.mxu0 0.0
    %1340 = vmatpush2.msra.mxu0 0.0
    %1341 = vmatprep.subr.mxu0 0.0
    %1342 = vmatpush2.msra.mxu0 0.0
    %1343 = vmatprep.subr.mxu0 0.0
    %1344 = vmatpush2.msra.mxu0 0.0
    %1345 = vmatprep.subr.mxu0 0.0
    %1346 = vmatpush2.msra.mxu0 0.0
    %1347 = vmatprep.subr.mxu0 0.0
    %1348 = vmatpush2.msra.mxu0 0.0
    %1349 = vmatprep.subr.mxu0 0.0
    %1350 = vmatpush2.msra.mxu0 0.0
    %1351 = vmatprep.subr.mxu0 0.0
    %1352 = vmatpush2.msra.mxu0 0.0
    %1353 = vmatprep.subr.mxu0 0.0
    %1354 = vmatpush2.msra.mxu0 0.0
    %1355 = vmatprep.subr.mxu0 0.0
    %1356 = vmatpush2.msra.mxu0 0.0
    %1357 = vmatprep.mubr.f32.mxu0 0.0
    %1358 = vmatmul.mubr.f32.gmra.mxu0 %v1246
    %v1359 = vpop.f32.mrf.mxu0
    %v1360 = vadd.f32 0.0, %v1359
    %v1361 = vpop.f32.mrf.mxu0
    %1362 = vmatprep.mubr.f32.mxu0 0.0
    %1363 = vmatmul.mubr.f32.gmra.mxu0 %v1249
    %v1364 = vpop.f32.mrf.mxu0
    %v1365 = vadd.f32 0.0, %v1364
    %v1366 = vpop.f32.mrf.mxu0
    %1367 = vmatprep.mubr.f32.mxu0 0.0
    %1368 = vmatmul.mubr.f32.gmra.mxu0 %v1252
    %v1369 = vpop.f32.mrf.mxu0
    %v1370 = vadd.f32 0.0, %v1369
    %v1371 = vpop.f32.mrf.mxu0
    %1372 = vmatprep.mubr.f32.mxu0 0.0
    %1373 = vmatmul.mubr.f32.gmra.mxu0 %v1255
    %v1374 = vpop.f32.mrf.mxu0
    %v1375 = vadd.f32 0.0, %v1374
    %v1376 = vpop.f32.mrf.mxu0
    %1377 = vmatprep.mubr.f32.mxu0 0.0
    %1378 = vmatmul.mubr.f32.gmra.mxu0 %v1258
    %v1379 = vpop.f32.mrf.mxu0
    %v1380 = vadd.f32 0.0, %v1379
    %v1381 = vpop.f32.mrf.mxu0
    %1382 = vmatprep.mubr.f32.mxu0 0.0
    %1383 = vmatmul.mubr.f32.gmra.mxu0 %v1261
    %v1384 = vpop.f32.mrf.mxu0
    %v1385 = vadd.f32 0.0, %v1384
    %v1386 = vpop.f32.mrf.mxu0
    %1387 = vmatprep.mubr.f32.mxu0 0.0
    %1388 = vmatmul.mubr.f32.gmra.mxu0 %v1264
    %v1389 = vpop.f32.mrf.mxu0
    %v1390 = vadd.f32 0.0, %v1389
    %v1391 = vpop.f32.mrf.mxu0
    %1392 = vmatprep.mubr.f32.mxu0 0.0
    %1393 = vmatmul.mubr.f32.gmra.mxu0 %v1267
    %v1394 = vpop.f32.mrf.mxu0
    %v1395 = vadd.f32 0.0, %v1394
    %v1396 = vpop.f32.mrf.mxu0
    %1397 = vmatprep.mubr.f32.mxu0 0.0
    %1398 = vmatmul.mubr.f32.gmra.mxu0 %v1270
    %v1399 = vpop.f32.mrf.mxu0
    %v1400 = vadd.f32 0.0, %v1399
    %v1401 = vpop.f32.mrf.mxu0
    %1402 = vmatprep.mubr.f32.mxu0 0.0
    %1403 = vmatmul.mubr.f32.gmra.mxu0 %v1273
    %v1404 = vpop.f32.mrf.mxu0
    %v1405 = vadd.f32 0.0, %v1404
    %v1406 = vpop.f32.mrf.mxu0
    %1407 = vmatprep.mubr.f32.mxu0 0.0
    %1408 = vmatmul.mubr.f32.gmra.mxu0 %v1276
    %v1409 = vpop.f32.mrf.mxu0
    %v1410 = vadd.f32 0.0, %v1409
    %v1411 = vpop.f32.mrf.mxu0
    %1412 = vmatprep.mubr.f32.mxu0 0.0
    %1413 = vmatmul.mubr.f32.gmra.mxu0 %v1279
    %v1414 = vpop.f32.mrf.mxu0
    %v1415 = vadd.f32 0.0, %v1414
    %v1416 = vpop.f32.mrf.mxu0
    %1417 = vmatprep.mubr.f32.mxu0 0.0
    %1418 = vmatmul.mubr.f32.gmra.mxu0 %v1282
    %v1419 = vpop.f32.mrf.mxu0
    %v1420 = vadd.f32 0.0, %v1419
    %v1421 = vpop.f32.mrf.mxu0
    %1422 = vmatprep.mubr.f32.mxu0 0.0
    %1423 = vmatmul.mubr.f32.gmra.mxu0 %v1285
    %v1424 = vpop.f32.mrf.mxu0
    %v1425 = vadd.f32 0.0, %v1424
    %v1426 = vpop.f32.mrf.mxu0
    %1427 = vmatprep.mubr.f32.mxu0 0.0
    %1428 = vmatmul.mubr.f32.gmra.mxu0 %v1288
    %v1429 = vpop.f32.mrf.mxu0
    %v1430 = vadd.f32 0.0, %v1429
    %v1431 = vpop.f32.mrf.mxu0
    %1432 = vmatprep.mubr.f32.mxu0 0.0
    %1433 = vmatmul.mubr.f32.gmra.mxu0 %v1291
    %v1434 = vpop.f32.mrf.mxu0
    %v1435 = vadd.f32 0.0, %v1434
    %v1436 = vpop.f32.mrf.mxu0
    %1437 = vdwg.mxu0
    %1438 = vxpose.xlu0.b32.start [1/16] %v1207, 128
    %1439 = vxpose.xlu0.b32.cont [2/16] %v1208, 128
    %1440 = vxpose.xlu0.b32.cont [3/16] %v1209, 128
    %1441 = vxpose.xlu0.b32.cont [4/16] %v1210, 128
    %1442 = vxpose.xlu0.b32.cont [5/16] %v1211, 128
    %1443 = vxpose.xlu0.b32.cont [6/16] %v1212, 128
    %1444 = vxpose.xlu0.b32.cont [7/16] 0.0, 128
    %1445 = vxpose.xlu0.b32.cont [8/16] 0.0, 128
    %1446 = vxpose.xlu0.b32.cont [9/16] 0.0, 128
    %1447 = vxpose.xlu0.b32.cont [10/16] 0.0, 128
    %1448 = vxpose.xlu0.b32.cont [11/16] 0.0, 128
    %1449 = vxpose.xlu0.b32.cont [12/16] 0.0, 128
    %1450 = vxpose.xlu0.b32.cont [13/16] 0.0, 128
    %1451 = vxpose.xlu0.b32.cont [14/16] 0.0, 128
    %1452 = vxpose.xlu0.b32.cont [15/16] 0.0, 128
    %1453 = vxpose.xlu0.b32.end [16/16] 0.0, 128
    %v1454 = vpop.trf.xlu0
    %v1455 = vpop.trf.xlu0
    %v1456 = vpop.trf.xlu0
    %v1457 = vpop.trf.xlu0
    %v1458 = vpop.trf.xlu0
    %v1459 = vpop.trf.xlu0
    %v1460 = vpop.trf.xlu0
    %v1461 = vpop.trf.xlu0
    %v1462 = vpop.trf.xlu0
    %v1463 = vpop.trf.xlu0
    %v1464 = vpop.trf.xlu0
    %v1465 = vpop.trf.xlu0
    %v1466 = vpop.trf.xlu0
    %v1467 = vpop.trf.xlu0
    %v1468 = vpop.trf.xlu0
    %v1469 = vpop.trf.xlu0
    %v1471 = vsel %vm182, %v1454, 0
    %v1474 = vsel %vm182, %v1455, 0
    %v1477 = vsel %vm182, %v1456, 0
    %v1480 = vsel %vm182, %v1457, 0
    %v1483 = vsel %vm182, %v1458, 0
    %v1486 = vsel %vm182, %v1459, 0
    %v1489 = vsel %vm182, %v1460, 0
    %v1492 = vsel %vm182, %v1461, 0
    %v1495 = vsel %vm182, %v1462, 0
    %v1498 = vsel %vm182, %v1463, 0
    %v1501 = vsel %vm182, %v1464, 0
    %v1504 = vsel %vm182, %v1465, 0
    %v1507 = vsel %vm182, %v1466, 0
    %v1510 = vsel %vm182, %v1467, 0
    %v1513 = vsel %vm182, %v1468, 0
    %v1516 = vsel %vm182, %v1469, 0
    %1518 = vmatprep.subr.mxu0 0.0
    %1519 = vmatpush1.msra.mxu0 0.0
    %1520 = vmatprep.subr.mxu0 0.0
    %1521 = vmatpush1.msra.mxu0 0.0
    %1522 = vmatprep.subr.mxu0 0.0
    %1523 = vmatpush1.msra.mxu0 0.0
    %1524 = vmatprep.subr.mxu0 0.0
    %1525 = vmatpush1.msra.mxu0 0.0
    %1526 = vmatprep.subr.mxu0 0.0
    %1527 = vmatpush1.msra.mxu0 0.0
    %1528 = vmatprep.subr.mxu0 0.0
    %1529 = vmatpush1.msra.mxu0 0.0
    %1530 = vmatprep.subr.mxu0 0.0
    %1531 = vmatpush1.msra.mxu0 0.0
    %1532 = vmatprep.subr.mxu0 0.0
    %1533 = vmatpush1.msra.mxu0 0.0
    %1534 = vmatprep.subr.mxu0 0.0
    %1535 = vmatpush1.msra.mxu0 0.0
    %1536 = vmatprep.subr.mxu0 0.0
    %1537 = vmatpush1.msra.mxu0 0.0
    %1538 = vmatprep.subr.mxu0 0.0
    %1539 = vmatpush1.msra.mxu0 %v88
    %1540 = vmatprep.subr.mxu0 0.0
    %1541 = vmatpush1.msra.mxu0 %v87
    %1542 = vmatprep.subr.mxu0 0.0
    %1543 = vmatpush1.msra.mxu0 %v86
    %1544 = vmatprep.subr.mxu0 0.0
    %1545 = vmatpush1.msra.mxu0 %v85
    %1546 = vmatprep.subr.mxu0 0.0
    %1547 = vmatpush1.msra.mxu0 %v84
    %1548 = vmatprep.subr.mxu0 0.0
    %1549 = vmatpush1.msra.mxu0 %v83
    %1550 = vmatprep.subr.mxu0 0.0
    %1551 = vmatpush2.msra.mxu0 0.0
    %1552 = vmatprep.subr.mxu0 0.0
    %1553 = vmatpush2.msra.mxu0 0.0
    %1554 = vmatprep.subr.mxu0 0.0
    %1555 = vmatpush2.msra.mxu0 0.0
    %1556 = vmatprep.subr.mxu0 0.0
    %1557 = vmatpush2.msra.mxu0 0.0
    %1558 = vmatprep.subr.mxu0 0.0
    %1559 = vmatpush2.msra.mxu0 0.0
    %1560 = vmatprep.subr.mxu0 0.0
    %1561 = vmatpush2.msra.mxu0 0.0
    %1562 = vmatprep.subr.mxu0 0.0
    %1563 = vmatpush2.msra.mxu0 0.0
    %1564 = vmatprep.subr.mxu0 0.0
    %1565 = vmatpush2.msra.mxu0 0.0
    %1566 = vmatprep.subr.mxu0 0.0
    %1567 = vmatpush2.msra.mxu0 0.0
    %1568 = vmatprep.subr.mxu0 0.0
    %1569 = vmatpush2.msra.mxu0 0.0
    %1570 = vmatprep.subr.mxu0 0.0
    %1571 = vmatpush2.msra.mxu0 0.0
    %1572 = vmatprep.subr.mxu0 0.0
    %1573 = vmatpush2.msra.mxu0 0.0
    %1574 = vmatprep.subr.mxu0 0.0
    %1575 = vmatpush2.msra.mxu0 0.0
    %1576 = vmatprep.subr.mxu0 0.0
    %1577 = vmatpush2.msra.mxu0 0.0
    %1578 = vmatprep.subr.mxu0 0.0
    %1579 = vmatpush2.msra.mxu0 0.0
    %1580 = vmatprep.subr.mxu0 0.0
    %1581 = vmatpush2.msra.mxu0 0.0
    %1582 = vmatprep.mubr.f32.mxu0 0.0
    %1583 = vmatmul.mubr.f32.gmra.mxu0 %v1471
    %v1584 = vpop.f32.mrf.mxu0
    %v1585 = vadd.f32 0.0, %v1584
    %v1586 = vpop.f32.mrf.mxu0
    %1587 = vmatprep.mubr.f32.mxu0 0.0
    %1588 = vmatmul.mubr.f32.gmra.mxu0 %v1474
    %v1589 = vpop.f32.mrf.mxu0
    %v1590 = vadd.f32 0.0, %v1589
    %v1591 = vpop.f32.mrf.mxu0
    %1592 = vmatprep.mubr.f32.mxu0 0.0
    %1593 = vmatmul.mubr.f32.gmra.mxu0 %v1477
    %v1594 = vpop.f32.mrf.mxu0
    %v1595 = vadd.f32 0.0, %v1594
    %v1596 = vpop.f32.mrf.mxu0
    %1597 = vmatprep.mubr.f32.mxu0 0.0
    %1598 = vmatmul.mubr.f32.gmra.mxu0 %v1480
    %v1599 = vpop.f32.mrf.mxu0
    %v1600 = vadd.f32 0.0, %v1599
    %v1601 = vpop.f32.mrf.mxu0
    %1602 = vmatprep.mubr.f32.mxu0 0.0
    %1603 = vmatmul.mubr.f32.gmra.mxu0 %v1483
    %v1604 = vpop.f32.mrf.mxu0
    %v1605 = vadd.f32 0.0, %v1604
    %v1606 = vpop.f32.mrf.mxu0
    %1607 = vmatprep.mubr.f32.mxu0 0.0
    %1608 = vmatmul.mubr.f32.gmra.mxu0 %v1486
    %v1609 = vpop.f32.mrf.mxu0
    %v1610 = vadd.f32 0.0, %v1609
    %v1611 = vpop.f32.mrf.mxu0
    %1612 = vmatprep.mubr.f32.mxu0 0.0
    %1613 = vmatmul.mubr.f32.gmra.mxu0 %v1489
    %v1614 = vpop.f32.mrf.mxu0
    %v1615 = vadd.f32 0.0, %v1614
    %v1616 = vpop.f32.mrf.mxu0
    %1617 = vmatprep.mubr.f32.mxu0 0.0
    %1618 = vmatmul.mubr.f32.gmra.mxu0 %v1492
    %v1619 = vpop.f32.mrf.mxu0
    %v1620 = vadd.f32 0.0, %v1619
    %v1621 = vpop.f32.mrf.mxu0
    %1622 = vmatprep.mubr.f32.mxu0 0.0
    %1623 = vmatmul.mubr.f32.gmra.mxu0 %v1495
    %v1624 = vpop.f32.mrf.mxu0
    %v1625 = vadd.f32 0.0, %v1624
    %v1626 = vpop.f32.mrf.mxu0
    %1627 = vmatprep.mubr.f32.mxu0 0.0
    %1628 = vmatmul.mubr.f32.gmra.mxu0 %v1498
    %v1629 = vpop.f32.mrf.mxu0
    %v1630 = vadd.f32 0.0, %v1629
    %v1631 = vpop.f32.mrf.mxu0
    %1632 = vmatprep.mubr.f32.mxu0 0.0
    %1633 = vmatmul.mubr.f32.gmra.mxu0 %v1501
    %v1634 = vpop.f32.mrf.mxu0
    %v1635 = vadd.f32 0.0, %v1634
    %v1636 = vpop.f32.mrf.mxu0
    %1637 = vmatprep.mubr.f32.mxu0 0.0
    %1638 = vmatmul.mubr.f32.gmra.mxu0 %v1504
    %v1639 = vpop.f32.mrf.mxu0
    %v1640 = vadd.f32 0.0, %v1639
    %v1641 = vpop.f32.mrf.mxu0
    %1642 = vmatprep.mubr.f32.mxu0 0.0
    %1643 = vmatmul.mubr.f32.gmra.mxu0 %v1507
    %v1644 = vpop.f32.mrf.mxu0
    %v1645 = vadd.f32 0.0, %v1644
    %v1646 = vpop.f32.mrf.mxu0
    %1647 = vmatprep.mubr.f32.mxu0 0.0
    %1648 = vmatmul.mubr.f32.gmra.mxu0 %v1510
    %v1649 = vpop.f32.mrf.mxu0
    %v1650 = vadd.f32 0.0, %v1649
    %v1651 = vpop.f32.mrf.mxu0
    %1652 = vmatprep.mubr.f32.mxu0 0.0
    %1653 = vmatmul.mubr.f32.gmra.mxu0 %v1513
    %v1654 = vpop.f32.mrf.mxu0
    %v1655 = vadd.f32 0.0, %v1654
    %v1656 = vpop.f32.mrf.mxu0
    %1657 = vmatprep.mubr.f32.mxu0 0.0
    %1658 = vmatmul.mubr.f32.gmra.mxu0 %v1516
    %v1659 = vpop.f32.mrf.mxu0
    %v1660 = vadd.f32 0.0, %v1659
    %v1661 = vpop.f32.mrf.mxu0
    %1662 = vdwg.mxu0
    %v1663 = vmax.f32 %v1360, 0.0
    %v1664 = vmax.f32 %v1365, 0.0
    %v1665 = vmax.f32 %v1370, 0.0
    %v1666 = vmax.f32 %v1375, 0.0
    %v1667 = vmax.f32 %v1380, 0.0
    %v1668 = vmax.f32 %v1385, 0.0
    %v1669 = vmax.f32 %v1390, 0.0
    %v1670 = vmax.f32 %v1395, 0.0
    %v1671 = vmax.f32 %v1400, 0.0
    %v1672 = vmax.f32 %v1405, 0.0
    %v1673 = vmax.f32 %v1410, 0.0
    %v1674 = vmax.f32 %v1415, 0.0
    %v1675 = vmax.f32 %v1420, 0.0
    %v1676 = vmax.f32 %v1425, 0.0
    %v1677 = vmax.f32 %v1430, 0.0
    %v1678 = vmax.f32 %v1435, 0.0
    %v1679 = vmax.f32 %v1585, 0.0
    %v1680 = vmax.f32 %v1590, 0.0
    %v1681 = vmax.f32 %v1595, 0.0
    %v1682 = vmax.f32 %v1600, 0.0
    %v1683 = vmax.f32 %v1605, 0.0
    %v1684 = vmax.f32 %v1610, 0.0
    %v1685 = vmax.f32 %v1615, 0.0
    %v1686 = vmax.f32 %v1620, 0.0
    %v1687 = vmax.f32 %v1625, 0.0
    %v1688 = vmax.f32 %v1630, 0.0
    %v1689 = vmax.f32 %v1635, 0.0
    %v1690 = vmax.f32 %v1640, 0.0
    %v1691 = vmax.f32 %v1645, 0.0
    %v1692 = vmax.f32 %v1650, 0.0
    %v1693 = vmax.f32 %v1655, 0.0
    %v1694 = vmax.f32 %v1660, 0.0
    %v1696 = vsel %vm633, %v1679, 0
    %v1699 = vsel %vm633, %v1680, 0
    %v1702 = vsel %vm633, %v1681, 0
    %v1705 = vsel %vm633, %v1682, 0
    %v1708 = vsel %vm633, %v1683, 0
    %v1711 = vsel %vm633, %v1684, 0
    %v1714 = vsel %vm633, %v1685, 0
    %v1717 = vsel %vm633, %v1686, 0
    %v1720 = vsel %vm633, %v1687, 0
    %v1723 = vsel %vm633, %v1688, 0
    %v1726 = vsel %vm633, %v1689, 0
    %v1729 = vsel %vm633, %v1690, 0
    %v1732 = vsel %vm633, %v1691, 0
    %v1735 = vsel %vm633, %v1692, 0
    %v1738 = vsel %vm633, %v1693, 0
    %v1741 = vsel %vm633, %v1694, 0
    %1743 = vmatprep.subr.mxu0 0.0
    %1744 = vmatpush1.msra.mxu0 0.0
    %1745 = vmatprep.subr.mxu0 0.0
    %1746 = vmatpush1.msra.mxu0 0.0
    %1747 = vmatprep.subr.mxu0 0.0
    %1748 = vmatpush1.msra.mxu0 0.0
    %1749 = vmatprep.subr.mxu0 0.0
    %1750 = vmatpush1.msra.mxu0 0.0
    %1751 = vmatprep.subr.mxu0 0.0
    %1752 = vmatpush1.msra.mxu0 0.0
    %1753 = vmatprep.subr.mxu0 0.0
    %1754 = vmatpush1.msra.mxu0 0.0
    %1755 = vmatprep.subr.mxu0 0.0
    %1756 = vmatpush1.msra.mxu0 0.0
    %1757 = vmatprep.subr.mxu0 0.0
    %1758 = vmatpush1.msra.mxu0 0.0
    %1759 = vmatprep.subr.mxu0 0.0
    %1760 = vmatpush1.msra.mxu0 %v104
    %1761 = vmatprep.subr.mxu0 0.0
    %1762 = vmatpush1.msra.mxu0 %v103
    %1763 = vmatprep.subr.mxu0 0.0
    %1764 = vmatpush1.msra.mxu0 %v102
    %1765 = vmatprep.subr.mxu0 0.0
    %1766 = vmatpush1.msra.mxu0 %v101
    %1767 = vmatprep.subr.mxu0 0.0
    %1768 = vmatpush1.msra.mxu0 %v100
    %1769 = vmatprep.subr.mxu0 0.0
    %1770 = vmatpush1.msra.mxu0 %v99
    %1771 = vmatprep.subr.mxu0 0.0
    %1772 = vmatpush1.msra.mxu0 %v98
    %1773 = vmatprep.subr.mxu0 0.0
    %1774 = vmatpush1.msra.mxu0 %v97
    %1775 = vmatprep.subr.mxu0 0.0
    %1776 = vmatpush2.msra.mxu0 0.0
    %1777 = vmatprep.subr.mxu0 0.0
    %1778 = vmatpush2.msra.mxu0 0.0
    %1779 = vmatprep.subr.mxu0 0.0
    %1780 = vmatpush2.msra.mxu0 0.0
    %1781 = vmatprep.subr.mxu0 0.0
    %1782 = vmatpush2.msra.mxu0 0.0
    %1783 = vmatprep.subr.mxu0 0.0
    %1784 = vmatpush2.msra.mxu0 0.0
    %1785 = vmatprep.subr.mxu0 0.0
    %1786 = vmatpush2.msra.mxu0 0.0
    %1787 = vmatprep.subr.mxu0 0.0
    %1788 = vmatpush2.msra.mxu0 0.0
    %1789 = vmatprep.subr.mxu0 0.0
    %1790 = vmatpush2.msra.mxu0 0.0
    %1791 = vmatprep.subr.mxu0 0.0
    %1792 = vmatpush2.msra.mxu0 0.0
    %1793 = vmatprep.subr.mxu0 0.0
    %1794 = vmatpush2.msra.mxu0 0.0
    %1795 = vmatprep.subr.mxu0 0.0
    %1796 = vmatpush2.msra.mxu0 0.0
    %1797 = vmatprep.subr.mxu0 0.0
    %1798 = vmatpush2.msra.mxu0 0.0
    %1799 = vmatprep.subr.mxu0 0.0
    %1800 = vmatpush2.msra.mxu0 0.0
    %1801 = vmatprep.subr.mxu0 0.0
    %1802 = vmatpush2.msra.mxu0 0.0
    %1803 = vmatprep.subr.mxu0 0.0
    %1804 = vmatpush2.msra.mxu0 0.0
    %1805 = vmatprep.subr.mxu0 0.0
    %1806 = vmatpush2.msra.mxu0 0.0
    %1807 = vmatprep.mubr.f32.mxu0 0.0
    %1808 = vmatmul.mubr.f32.gmra.mxu0 %v1696
    %v1809 = vpop.f32.mrf.mxu0
    %v1810 = vadd.f32 0.0, %v1809
    %v1811 = vpop.f32.mrf.mxu0
    %1812 = vmatprep.mubr.f32.mxu0 0.0
    %1813 = vmatmul.mubr.f32.gmra.mxu0 %v1699
    %v1814 = vpop.f32.mrf.mxu0
    %v1815 = vadd.f32 0.0, %v1814
    %v1816 = vpop.f32.mrf.mxu0
    %1817 = vmatprep.mubr.f32.mxu0 0.0
    %1818 = vmatmul.mubr.f32.gmra.mxu0 %v1702
    %v1819 = vpop.f32.mrf.mxu0
    %v1820 = vadd.f32 0.0, %v1819
    %v1821 = vpop.f32.mrf.mxu0
    %1822 = vmatprep.mubr.f32.mxu0 0.0
    %1823 = vmatmul.mubr.f32.gmra.mxu0 %v1705
    %v1824 = vpop.f32.mrf.mxu0
    %v1825 = vadd.f32 0.0, %v1824
    %v1826 = vpop.f32.mrf.mxu0
    %1827 = vmatprep.mubr.f32.mxu0 0.0
    %1828 = vmatmul.mubr.f32.gmra.mxu0 %v1708
    %v1829 = vpop.f32.mrf.mxu0
    %v1830 = vadd.f32 0.0, %v1829
    %v1831 = vpop.f32.mrf.mxu0
    %1832 = vmatprep.mubr.f32.mxu0 0.0
    %1833 = vmatmul.mubr.f32.gmra.mxu0 %v1711
    %v1834 = vpop.f32.mrf.mxu0
    %v1835 = vadd.f32 0.0, %v1834
    %v1836 = vpop.f32.mrf.mxu0
    %1837 = vmatprep.mubr.f32.mxu0 0.0
    %1838 = vmatmul.mubr.f32.gmra.mxu0 %v1714
    %v1839 = vpop.f32.mrf.mxu0
    %v1840 = vadd.f32 0.0, %v1839
    %v1841 = vpop.f32.mrf.mxu0
    %1842 = vmatprep.mubr.f32.mxu0 0.0
    %1843 = vmatmul.mubr.f32.gmra.mxu0 %v1717
    %v1844 = vpop.f32.mrf.mxu0
    %v1845 = vadd.f32 0.0, %v1844
    %v1846 = vpop.f32.mrf.mxu0
    %1847 = vmatprep.mubr.f32.mxu0 0.0
    %1848 = vmatmul.mubr.f32.gmra.mxu0 %v1720
    %v1849 = vpop.f32.mrf.mxu0
    %v1850 = vadd.f32 0.0, %v1849
    %v1851 = vpop.f32.mrf.mxu0
    %1852 = vmatprep.mubr.f32.mxu0 0.0
    %1853 = vmatmul.mubr.f32.gmra.mxu0 %v1723
    %v1854 = vpop.f32.mrf.mxu0
    %v1855 = vadd.f32 0.0, %v1854
    %v1856 = vpop.f32.mrf.mxu0
    %1857 = vmatprep.mubr.f32.mxu0 0.0
    %1858 = vmatmul.mubr.f32.gmra.mxu0 %v1726
    %v1859 = vpop.f32.mrf.mxu0
    %v1860 = vadd.f32 0.0, %v1859
    %v1861 = vpop.f32.mrf.mxu0
    %1862 = vmatprep.mubr.f32.mxu0 0.0
    %1863 = vmatmul.mubr.f32.gmra.mxu0 %v1729
    %v1864 = vpop.f32.mrf.mxu0
    %v1865 = vadd.f32 0.0, %v1864
    %v1866 = vpop.f32.mrf.mxu0
    %1867 = vmatprep.mubr.f32.mxu0 0.0
    %1868 = vmatmul.mubr.f32.gmra.mxu0 %v1732
    %v1869 = vpop.f32.mrf.mxu0
    %v1870 = vadd.f32 0.0, %v1869
    %v1871 = vpop.f32.mrf.mxu0
    %1872 = vmatprep.mubr.f32.mxu0 0.0
    %1873 = vmatmul.mubr.f32.gmra.mxu0 %v1735
    %v1874 = vpop.f32.mrf.mxu0
    %v1875 = vadd.f32 0.0, %v1874
    %v1876 = vpop.f32.mrf.mxu0
    %1877 = vmatprep.mubr.f32.mxu0 0.0
    %1878 = vmatmul.mubr.f32.gmra.mxu0 %v1738
    %v1879 = vpop.f32.mrf.mxu0
    %v1880 = vadd.f32 0.0, %v1879
    %v1881 = vpop.f32.mrf.mxu0
    %1882 = vmatprep.mubr.f32.mxu0 0.0
    %1883 = vmatmul.mubr.f32.gmra.mxu0 %v1741
    %v1884 = vpop.f32.mrf.mxu0
    %v1885 = vadd.f32 0.0, %v1884
    %v1886 = vpop.f32.mrf.mxu0
    %1887 = vdwg.mxu0
    %v1889 = vsel %vm633, %v1663, 0
    %v1892 = vsel %vm633, %v1664, 0
    %v1895 = vsel %vm633, %v1665, 0
    %v1898 = vsel %vm633, %v1666, 0
    %v1901 = vsel %vm633, %v1667, 0
    %v1904 = vsel %vm633, %v1668, 0
    %v1907 = vsel %vm633, %v1669, 0
    %v1910 = vsel %vm633, %v1670, 0
    %v1913 = vsel %vm633, %v1671, 0
    %v1916 = vsel %vm633, %v1672, 0
    %v1919 = vsel %vm633, %v1673, 0
    %v1922 = vsel %vm633, %v1674, 0
    %v1925 = vsel %vm633, %v1675, 0
    %v1928 = vsel %vm633, %v1676, 0
    %v1931 = vsel %vm633, %v1677, 0
    %v1934 = vsel %vm633, %v1678, 0
    %1936 = vmatprep.subr.mxu0 0.0
    %1937 = vmatpush1.msra.mxu0 0.0
    %1938 = vmatprep.subr.mxu0 0.0
    %1939 = vmatpush1.msra.mxu0 0.0
    %1940 = vmatprep.subr.mxu0 0.0
    %1941 = vmatpush1.msra.mxu0 0.0
    %1942 = vmatprep.subr.mxu0 0.0
    %1943 = vmatpush1.msra.mxu0 0.0
    %1944 = vmatprep.subr.mxu0 0.0
    %1945 = vmatpush1.msra.mxu0 0.0
    %1946 = vmatprep.subr.mxu0 0.0
    %1947 = vmatpush1.msra.mxu0 0.0
    %1948 = vmatprep.subr.mxu0 0.0
    %1949 = vmatpush1.msra.mxu0 0.0
    %1950 = vmatprep.subr.mxu0 0.0
    %1951 = vmatpush1.msra.mxu0 0.0
    %1952 = vmatprep.subr.mxu0 0.0
    %1953 = vmatpush1.msra.mxu0 %v96
    %1954 = vmatprep.subr.mxu0 0.0
    %1955 = vmatpush1.msra.mxu0 %v95
    %1956 = vmatprep.subr.mxu0 0.0
    %1957 = vmatpush1.msra.mxu0 %v94
    %1958 = vmatprep.subr.mxu0 0.0
    %1959 = vmatpush1.msra.mxu0 %v93
    %1960 = vmatprep.subr.mxu0 0.0
    %1961 = vmatpush1.msra.mxu0 %v92
    %1962 = vmatprep.subr.mxu0 0.0
    %1963 = vmatpush1.msra.mxu0 %v91
    %1964 = vmatprep.subr.mxu0 0.0
    %1965 = vmatpush1.msra.mxu0 %v90
    %1966 = vmatprep.subr.mxu0 0.0
    %1967 = vmatpush1.msra.mxu0 %v89
    %1968 = vmatprep.subr.mxu0 0.0
    %1969 = vmatpush2.msra.mxu0 0.0
    %1970 = vmatprep.subr.mxu0 0.0
    %1971 = vmatpush2.msra.mxu0 0.0
    %1972 = vmatprep.subr.mxu0 0.0
    %1973 = vmatpush2.msra.mxu0 0.0
    %1974 = vmatprep.subr.mxu0 0.0
    %1975 = vmatpush2.msra.mxu0 0.0
    %1976 = vmatprep.subr.mxu0 0.0
    %1977 = vmatpush2.msra.mxu0 0.0
    %1978 = vmatprep.subr.mxu0 0.0
    %1979 = vmatpush2.msra.mxu0 0.0
    %1980 = vmatprep.subr.mxu0 0.0
    %1981 = vmatpush2.msra.mxu0 0.0
    %1982 = vmatprep.subr.mxu0 0.0
    %1983 = vmatpush2.msra.mxu0 0.0
    %1984 = vmatprep.subr.mxu0 0.0
    %1985 = vmatpush2.msra.mxu0 0.0
    %1986 = vmatprep.subr.mxu0 0.0
    %1987 = vmatpush2.msra.mxu0 0.0
    %1988 = vmatprep.subr.mxu0 0.0
    %1989 = vmatpush2.msra.mxu0 0.0
    %1990 = vmatprep.subr.mxu0 0.0
    %1991 = vmatpush2.msra.mxu0 0.0
    %1992 = vmatprep.subr.mxu0 0.0
    %1993 = vmatpush2.msra.mxu0 0.0
    %1994 = vmatprep.subr.mxu0 0.0
    %1995 = vmatpush2.msra.mxu0 0.0
    %1996 = vmatprep.subr.mxu0 0.0
    %1997 = vmatpush2.msra.mxu0 0.0
    %1998 = vmatprep.subr.mxu0 0.0
    %1999 = vmatpush2.msra.mxu0 0.0
    %2000 = vmatprep.mubr.f32.mxu0 0.0
    %2001 = vmatmul.mubr.f32.gmra.mxu0 %v1889
    %v2002 = vpop.f32.mrf.mxu0
    %v2003 = vadd.f32 %v1810, %v2002
    %v2004 = vpop.f32.mrf.mxu0
    %2005 = vmatprep.mubr.f32.mxu0 0.0
    %2006 = vmatmul.mubr.f32.gmra.mxu0 %v1892
    %v2007 = vpop.f32.mrf.mxu0
    %v2008 = vadd.f32 %v1815, %v2007
    %v2009 = vpop.f32.mrf.mxu0
    %2010 = vmatprep.mubr.f32.mxu0 0.0
    %2011 = vmatmul.mubr.f32.gmra.mxu0 %v1895
    %v2012 = vpop.f32.mrf.mxu0
    %v2013 = vadd.f32 %v1820, %v2012
    %v2014 = vpop.f32.mrf.mxu0
    %2015 = vmatprep.mubr.f32.mxu0 0.0
    %2016 = vmatmul.mubr.f32.gmra.mxu0 %v1898
    %v2017 = vpop.f32.mrf.mxu0
    %v2018 = vadd.f32 %v1825, %v2017
    %v2019 = vpop.f32.mrf.mxu0
    %2020 = vmatprep.mubr.f32.mxu0 0.0
    %2021 = vmatmul.mubr.f32.gmra.mxu0 %v1901
    %v2022 = vpop.f32.mrf.mxu0
    %v2023 = vadd.f32 %v1830, %v2022
    %v2024 = vpop.f32.mrf.mxu0
    %2025 = vmatprep.mubr.f32.mxu0 0.0
    %2026 = vmatmul.mubr.f32.gmra.mxu0 %v1904
    %v2027 = vpop.f32.mrf.mxu0
    %v2028 = vadd.f32 %v1835, %v2027
    %v2029 = vpop.f32.mrf.mxu0
    %2030 = vmatprep.mubr.f32.mxu0 0.0
    %2031 = vmatmul.mubr.f32.gmra.mxu0 %v1907
    %v2032 = vpop.f32.mrf.mxu0
    %v2033 = vadd.f32 %v1840, %v2032
    %v2034 = vpop.f32.mrf.mxu0
    %2035 = vmatprep.mubr.f32.mxu0 0.0
    %2036 = vmatmul.mubr.f32.gmra.mxu0 %v1910
    %v2037 = vpop.f32.mrf.mxu0
    %v2038 = vadd.f32 %v1845, %v2037
    %v2039 = vpop.f32.mrf.mxu0
    %2040 = vmatprep.mubr.f32.mxu0 0.0
    %2041 = vmatmul.mubr.f32.gmra.mxu0 %v1913
    %v2042 = vpop.f32.mrf.mxu0
    %v2043 = vadd.f32 %v1850, %v2042
    %v2044 = vpop.f32.mrf.mxu0
    %2045 = vmatprep.mubr.f32.mxu0 0.0
    %2046 = vmatmul.mubr.f32.gmra.mxu0 %v1916
    %v2047 = vpop.f32.mrf.mxu0
    %v2048 = vadd.f32 %v1855, %v2047
    %v2049 = vpop.f32.mrf.mxu0
    %2050 = vmatprep.mubr.f32.mxu0 0.0
    %2051 = vmatmul.mubr.f32.gmra.mxu0 %v1919
    %v2052 = vpop.f32.mrf.mxu0
    %v2053 = vadd.f32 %v1860, %v2052
    %v2054 = vpop.f32.mrf.mxu0
    %2055 = vmatprep.mubr.f32.mxu0 0.0
    %2056 = vmatmul.mubr.f32.gmra.mxu0 %v1922
    %v2057 = vpop.f32.mrf.mxu0
    %v2058 = vadd.f32 %v1865, %v2057
    %v2059 = vpop.f32.mrf.mxu0
    %2060 = vmatprep.mubr.f32.mxu0 0.0
    %2061 = vmatmul.mubr.f32.gmra.mxu0 %v1925
    %v2062 = vpop.f32.mrf.mxu0
    %v2063 = vadd.f32 %v1870, %v2062
    %v2064 = vpop.f32.mrf.mxu0
    %2065 = vmatprep.mubr.f32.mxu0 0.0
    %2066 = vmatmul.mubr.f32.gmra.mxu0 %v1928
    %v2067 = vpop.f32.mrf.mxu0
    %v2068 = vadd.f32 %v1875, %v2067
    %v2069 = vpop.f32.mrf.mxu0
    %2070 = vmatprep.mubr.f32.mxu0 0.0
    %2071 = vmatmul.mubr.f32.gmra.mxu0 %v1931
    %v2072 = vpop.f32.mrf.mxu0
    %v2073 = vadd.f32 %v1880, %v2072
    %v2074 = vpop.f32.mrf.mxu0
    %2075 = vmatprep.mubr.f32.mxu0 0.0
    %2076 = vmatmul.mubr.f32.gmra.mxu0 %v1934
    %v2077 = vpop.f32.mrf.mxu0
    %v2078 = vadd.f32 %v1885, %v2077
    %v2079 = vpop.f32.mrf.mxu0
    %2080 = vdwg.mxu0
    %v2081 = vadd.f32 %v2003, %v1024
    %v2082 = vadd.f32 %v2008, %v1024
    %v2083 = vadd.f32 %v2013, %v1024
    %v2084 = vadd.f32 %v2018, %v1024
    %v2085 = vadd.f32 %v2023, %v1024
    %v2086 = vadd.f32 %v2028, %v1024
    %v2087 = vadd.f32 %v2033, %v1024
    %v2088 = vadd.f32 %v2038, %v1024
    %v2089 = vadd.f32 %v2043, %v1024
    %v2090 = vadd.f32 %v2048, %v1024
    %v2091 = vadd.f32 %v2053, %v1024
    %v2092 = vadd.f32 %v2058, %v1024
    %v2093 = vadd.f32 %v2063, %v1024
    %v2094 = vadd.f32 %v2068, %v1024
    %v2095 = vadd.f32 %v2073, %v1024
    %v2096 = vadd.f32 %v2078, %v1024
    %v2097 = vmax.f32 %v2081, 0.0
    %v2098 = vmax.f32 %v2082, 0.0
    %v2099 = vmax.f32 %v2083, 0.0
    %v2100 = vmax.f32 %v2084, 0.0
    %v2101 = vmax.f32 %v2085, 0.0
    %v2102 = vmax.f32 %v2086, 0.0
    %v2103 = vmax.f32 %v2087, 0.0
    %v2104 = vmax.f32 %v2088, 0.0
    %v2105 = vmax.f32 %v2089, 0.0
    %v2106 = vmax.f32 %v2090, 0.0
    %v2107 = vmax.f32 %v2091, 0.0
    %v2108 = vmax.f32 %v2092, 0.0
    %v2109 = vmax.f32 %v2093, 0.0
    %v2110 = vmax.f32 %v2094, 0.0
    %v2111 = vmax.f32 %v2095, 0.0
    %v2112 = vmax.f32 %v2096, 0.0
    %v2114 = vsel %vm633, %v2097, 0
    %v2117 = vsel %vm633, %v2098, 0
    %v2120 = vsel %vm633, %v2099, 0
    %v2123 = vsel %vm633, %v2100, 0
    %v2126 = vsel %vm633, %v2101, 0
    %v2129 = vsel %vm633, %v2102, 0
    %v2132 = vsel %vm633, %v2103, 0
    %v2135 = vsel %vm633, %v2104, 0
    %v2138 = vsel %vm633, %v2105, 0
    %v2141 = vsel %vm633, %v2106, 0
    %v2144 = vsel %vm633, %v2107, 0
    %v2147 = vsel %vm633, %v2108, 0
    %v2150 = vsel %vm633, %v2109, 0
    %v2153 = vsel %vm633, %v2110, 0
    %v2156 = vsel %vm633, %v2111, 0
    %v2159 = vsel %vm633, %v2112, 0
    %2161 = vmatprep.subr.mxu0 0.0
    %2162 = vmatpush1.xpose.msra.mxu0 %v2159
    %2163 = vmatprep.subr.mxu0 0.0
    %2164 = vmatpush1.xpose.msra.mxu0 %v2156
    %2165 = vmatprep.subr.mxu0 0.0
    %2166 = vmatpush1.xpose.msra.mxu0 %v2153
    %2167 = vmatprep.subr.mxu0 0.0
    %2168 = vmatpush1.xpose.msra.mxu0 %v2150
    %2169 = vmatprep.subr.mxu0 0.0
    %2170 = vmatpush1.xpose.msra.mxu0 %v2147
    %2171 = vmatprep.subr.mxu0 0.0
    %2172 = vmatpush1.xpose.msra.mxu0 %v2144
    %2173 = vmatprep.subr.mxu0 0.0
    %2174 = vmatpush1.xpose.msra.mxu0 %v2141
    %2175 = vmatprep.subr.mxu0 0.0
    %2176 = vmatpush1.xpose.msra.mxu0 %v2138
    %2177 = vmatprep.subr.mxu0 0.0
    %2178 = vmatpush1.xpose.msra.mxu0 %v2135
    %2179 = vmatprep.subr.mxu0 0.0
    %2180 = vmatpush1.xpose.msra.mxu0 %v2132
    %2181 = vmatprep.subr.mxu0 0.0
    %2182 = vmatpush1.xpose.msra.mxu0 %v2129
    %2183 = vmatprep.subr.mxu0 0.0
    %2184 = vmatpush1.xpose.msra.mxu0 %v2126
    %2185 = vmatprep.subr.mxu0 0.0
    %2186 = vmatpush1.xpose.msra.mxu0 %v2123
    %2187 = vmatprep.subr.mxu0 0.0
    %2188 = vmatpush1.xpose.msra.mxu0 %v2120
    %2189 = vmatprep.subr.mxu0 0.0
    %2190 = vmatpush1.xpose.msra.mxu0 %v2117
    %2191 = vmatprep.subr.mxu0 0.0
    %2192 = vmatpush1.xpose.msra.mxu0 %v2114
    %2193 = vmatprep.subr.mxu0 0.0
    %2194 = vmatpush2.xpose.msra.mxu0 0.0
    %2195 = vmatprep.subr.mxu0 0.0
    %2196 = vmatpush2.xpose.msra.mxu0 0.0
    %2197 = vmatprep.subr.mxu0 0.0
    %2198 = vmatpush2.xpose.msra.mxu0 0.0
    %2199 = vmatprep.subr.mxu0 0.0
    %2200 = vmatpush2.xpose.msra.mxu0 0.0
    %2201 = vmatprep.subr.mxu0 0.0
    %2202 = vmatpush2.xpose.msra.mxu0 0.0
    %2203 = vmatprep.subr.mxu0 0.0
    %2204 = vmatpush2.xpose.msra.mxu0 0.0
    %2205 = vmatprep.subr.mxu0 0.0
    %2206 = vmatpush2.xpose.msra.mxu0 0.0
    %2207 = vmatprep.subr.mxu0 0.0
    %2208 = vmatpush2.xpose.msra.mxu0 0.0
    %2209 = vmatprep.subr.mxu0 0.0
    %2210 = vmatpush2.xpose.msra.mxu0 0.0
    %2211 = vmatprep.subr.mxu0 0.0
    %2212 = vmatpush2.xpose.msra.mxu0 0.0
    %2213 = vmatprep.subr.mxu0 0.0
    %2214 = vmatpush2.xpose.msra.mxu0 0.0
    %2215 = vmatprep.subr.mxu0 0.0
    %2216 = vmatpush2.xpose.msra.mxu0 0.0
    %2217 = vmatprep.subr.mxu0 0.0
    %2218 = vmatpush2.xpose.msra.mxu0 0.0
    %2219 = vmatprep.subr.mxu0 0.0
    %2220 = vmatpush2.xpose.msra.mxu0 0.0
    %2221 = vmatprep.subr.mxu0 0.0
    %2222 = vmatpush2.xpose.msra.mxu0 0.0
    %2223 = vmatprep.subr.mxu0 0.0
    %2224 = vmatpush2.xpose.msra.mxu0 0.0
    %2225 = vmatprep.mubr.f32.mxu0 0.0
    %2226 = vmatmul.mubr.f32.gmra.mxu0 %v1060
    %v2227 = vpop.f32.mrf.mxu0
    %v2228 = vadd.f32 %v1058, %v2227
    %v2229 = vpop.f32.mrf.mxu0
    %2230 = vdwg.mxu0
    %2231 = vst [vmem:[#allocation11 + $0x1] sm:$0x1] %v2228
    // Predicated region
    $region46: #{tpu_custom_call.1} parent=1 // pred_check
      _
    $region47: #{tpu_custom_call.1} parent=1 // pred_check_branch
      %2233 = sbr.rel (0) target = $region49
    $region48: #{tpu_custom_call.1} parent=1 // pred_region
      %s2235 = ssub.s32 32, 32
      %2236 = vsyncadd [#allocation5], %s2235
      %s2238 = sshll.u32 [#allocation11], 4
      %s2239 = int_to_ptr.vmem [resolvable:$true] %s2238
      %2241 = dma.vmem_to_hbm [thread:$0]  %s2239, 32, %s7, [#allocation5]
    $region49: #{tpu_custom_call.1} parent=1 // pred_fallthru
      _
    // Predicated region
    $region50: #{tpu_custom_call.1} parent=1 // pred_check
      _
    $region51: #{tpu_custom_call.1} parent=1 // pred_check_branch
      %2243 = sbr.rel (0) target = $region53
    $region52: #{tpu_custom_call.1} parent=1 // pred_region
      %2244 = dma.done [#allocation5], 32
    $region53: #{tpu_custom_call.1} parent=1 // pred_fallthru
      _
    %2245 = vsyncpa [#allocation4], 1
    %2246 = vsyncpa [#allocation7], 1
    %2247 = vsyncpa [#allocation10], 1
    %2248 = vsyncpa [#allocation5], 1

</llo_original>
